<compile_context>
chip_gen: v7x
topology: tpu7x:2x2x1
jax: 0.10.0
libtpu: 0.0.40
codegen_flags: <defaults>
</compile_context>

<pallas_src>
import jax
import jax.numpy as jnp
from jax.experimental import pallas as pl
from jax.experimental.pallas import tpu as pltpu

IN_FEATURES = 784
HIDDEN = 10
OUT_FEATURES = 10
MAX_TILE_B = 4096       # f32 x tile 4096x784 ~12.9 MiB/buffer; double-buffered ~26 MiB
MIN_TILE_B = 512        # >=512-row tiles reach >=85% of HBM roofline (vs ~63% at 256)


def _round_up(n: int, m: int) -> int:
    return ((n + m - 1) // m) * m


def _choose_tiling(B: int):
    """tile_b capped by VMEM budget, >= MIN_TILE_B, rebalanced to minimize padding."""
    tile_b = min(MAX_TILE_B, _round_up(B, MIN_TILE_B))
    num_tiles = -(-B // tile_b)
    # Give v7x's second TensorCore something to do for medium batches (harmless on v5e/v6e:
    # one extra grid step costs ~0.35 us vs multi-us per-tile DMA).
    if num_tiles == 1 and B >= 2 * MIN_TILE_B:
        num_tiles = 2
    tile_b = _round_up(-(-B // num_tiles), MIN_TILE_B)
    return tile_b, num_tiles, tile_b * num_tiles


def mlp_kernel(x_ref, w1_ref, b1_ref, w2_ref, b2_ref,
               w3_ref, b3_ref, w4_ref, b4_ref, o_ref):
    # One batch tile per grid step: 4 bf16 MXU matmuls (f32 accumulation) + bias/ReLU on
    # the VPU.  The f32->bf16 cast of x lives here so no extra HBM pass is ever created.
    x = x_ref[...].astype(jnp.bfloat16)                       # (TILE_B, 784)
    h = jnp.dot(x, w1_ref[...], preferred_element_type=jnp.float32) + b1_ref[...]
    h = jnp.maximum(h, 0.0)

    h = jnp.dot(h.astype(jnp.bfloat16), w2_ref[...],
                preferred_element_type=jnp.float32) + b2_ref[...]
    h = jnp.maximum(h, 0.0)

    h = jnp.dot(h.astype(jnp.bfloat16), w3_ref[...],
                preferred_element_type=jnp.float32) + b3_ref[...]
    h = jnp.maximum(h, 0.0)

    h = jnp.dot(h.astype(jnp.bfloat16), w4_ref[...],
                preferred_element_type=jnp.float32) + b4_ref[...]

    o_ref[...] = h.astype(o_ref.dtype)


def prepare_params(params):
    """One-time layout conversion: PyTorch Linear (out,in) -> kernel (in,out), bf16 weights.

    Done once at load time so the per-forward path emits no transpose/reshape/cast ops.
    All weights go to bf16 (MXU operands, f32 accumulation); biases stay f32 since they
    are added to the f32 accumulator.
    """
    (w1, b1), (w2, b2), (w3, b3), (w4, b4) = params
    return (
        jnp.asarray(w1.T, jnp.bfloat16), b1.reshape(1, -1).astype(jnp.float32),
        jnp.asarray(w2.T, jnp.bfloat16), b2.reshape(1, -1).astype(jnp.float32),
        jnp.asarray(w3.T, jnp.bfloat16), b3.reshape(1, -1).astype(jnp.float32),
        jnp.asarray(w4.T, jnp.bfloat16), b4.reshape(1, -1).astype(jnp.float32),
    )


@jax.jit
def mnist_net_forward(x_nchw, prepared):
    """x_nchw: (B, 1, 28, 28) float32. Returns (B, 10) float32 logits."""
    B = x_nchw.shape[0]
    x_flat = x_nchw.reshape(B, IN_FEATURES)                   # torch.flatten(x, 1)

    tile_b, num_tiles, B_pad = _choose_tiling(B)

    if B_pad == B:
        # Common large-batch case: no extra HBM pass; kernel reads the f32 input directly
        # and casts to bf16 in VMEM.
        x_in = x_flat
    else:
        # Pad needed: do the single unavoidable copy in bf16 (cast fuses into the pad),
        # minimizing HBM bytes.  Padded rows are independent and sliced off below.
        x_in = jnp.pad(x_flat.astype(jnp.bfloat16), ((0, B_pad - B), (0, 0)))

    w1t, b1r, w2t, b2r, w3t, b3r, w4t, b4r = prepared
    operands = (x_in, w1t, b1r, w2t, b2r, w3t, b3r, w4t, b4r)

    # x / out are tiled over the batch grid; weights & biases are grid-invariant
    # (constant index_map -> fetched once, resident in VMEM for all iterations).
    resident = lambda a: pl.BlockSpec(a.shape, lambda i: (0,) * a.ndim)
    in_specs = [pl.BlockSpec((tile_b, IN_FEATURES), lambda i: (i, 0))]
    in_specs += [resident(a) for a in operands[1:]]
    # NOTE: 10-lane output -> masked stores; ~1% of input bytes, left alone (measure-first).
    out_specs = pl.BlockSpec((tile_b, OUT_FEATURES), lambda i: (i, 0))

    weight_bytes = sum(int(a.size) * a.dtype.itemsize for a in operands[1:])
    x_tile_bytes = tile_b * IN_FEATURES * x_in.dtype.itemsize
    o_tile_bytes = tile_b * OUT_FEATURES * 4
    # Double-buffered x/out tiles + resident weights + headroom; stays under v7x's 64 MiB.
    vmem_limit = min(2 * (x_tile_bytes + o_tile_bytes) + weight_bytes + (8 << 20), 56 << 20)

    flops = 2 * B_pad * (IN_FEATURES * HIDDEN + 3 * HIDDEN * HIDDEN)
    bytes_accessed = (int(x_in.size) * x_in.dtype.itemsize
                      + weight_bytes
                      + B_pad * OUT_FEATURES * 4)

    out_pad = pl.pallas_call(
        mlp_kernel,
        out_shape=jax.ShapeDtypeStruct((B_pad, OUT_FEATURES), jnp.float32),
        grid_spec=pl.GridSpec(
            grid=(num_tiles,),
            in_specs=in_specs,
            out_specs=out_specs,
        ),
        compiler_params=pltpu.CompilerParams(
            dimension_semantics=("parallel",),   # shard batch tiles across v7x's 2 TCs
            vmem_limit_bytes=vmem_limit,
        ),
        cost_estimate=pl.CostEstimate(
            flops=flops, transcendentals=0, bytes_accessed=bytes_accessed),
    )(*operands)

    return out_pad[:B]


def init_params(key):
    """Deterministic synthetic parameters matching MNISTNet's __init__ shapes."""
    dims = [(HIDDEN, IN_FEATURES), (HIDDEN, HIDDEN), (HIDDEN, HIDDEN), (OUT_FEATURES, HIDDEN)]
    params = []
    for out_f, in_f in dims:
        key, kw, kb = jax.random.split(key, 3)
        bound = 1.0 / jnp.sqrt(in_f)  # PyTorch default init range
        w = jax.random.uniform(kw, (out_f, in_f), jnp.float32, -bound, bound)
        b = jax.random.uniform(kb, (out_f,), jnp.float32, -bound, bound)
        params.append((w, b))
    return params


def reference_forward_f32(x_nchw, params):
    """Plain-JAX f32 reference mirroring the PyTorch forward exactly."""
    h = x_nchw.reshape(x_nchw.shape[0], -1)
    (w1, b1), (w2, b2), (w3, b3), (w4, b4) = params
    h = jnp.maximum(h @ w1.T + b1, 0.0)
    h = jnp.maximum(h @ w2.T + b2, 0.0)
    h = jnp.maximum(h @ w3.T + b3, 0.0)
    return h @ w4.T + b4


def reference_forward_matched(x_nchw, params):
    """Reference with the same bf16-operand / f32-accumulate path as the kernel."""
    h = x_nchw.reshape(x_nchw.shape[0], -1)
    (w1, b1), (w2, b2), (w3, b3), (w4, b4) = params

    def lin(h, w, b):
        return jnp.dot(h.astype(jnp.bfloat16), w.T.astype(jnp.bfloat16),
                       preferred_element_type=jnp.float32) + b

    h = jnp.maximum(lin(h, w1, b1), 0.0)
    h = jnp.maximum(lin(h, w2, b2), 0.0)
    h = jnp.maximum(lin(h, w3, b3), 0.0)
    return lin(h, w4, b4)


if __name__ == "__main__":
    key = jax.random.PRNGKey(0)
    key, kx = jax.random.split(key)

    # Small batch; spatial shape fixed by fc1's 784 = 1*28*28 input features.
    x = jax.random.normal(kx, (8, 1, 28, 28), jnp.float32)
    params = init_params(key)
    prepared = prepare_params(params)

    out = mnist_net_forward(x, prepared)
    out = jax.block_until_ready(out)
    assert out.shape == (8, 10)

    # Tight check against a numerically-matched (all-bf16-operand) reference.
    ref_matched = reference_forward_matched(x, params)
    assert jnp.allclose(out, ref_matched, atol=5e-3, rtol=5e-3), "mismatch vs matched ref"

    # Loose sanity check against the pure-f32 PyTorch-equivalent forward.
    ref_f32 = reference_forward_f32(x, params)
    assert jnp.allclose(out, ref_f32, atol=5e-2, rtol=5e-2), "mismatch vs f32 ref"

    print("KERNEL_OK")
</pallas_src>

<mosaic_0001>
module attributes {stable_mosaic.version = 11 : i64} {
  func.func @mlp_kernel(%arg0: i32, %arg1: memref<512x784xbf16, #tpu.memory_space<vmem>>, %arg2: memref<784x10xbf16, #tpu.memory_space<vmem>>, %arg3: memref<1x10xf32, #tpu.memory_space<vmem>>, %arg4: memref<10x10xbf16, #tpu.memory_space<vmem>>, %arg5: memref<1x10xf32, #tpu.memory_space<vmem>>, %arg6: memref<10x10xbf16, #tpu.memory_space<vmem>>, %arg7: memref<1x10xf32, #tpu.memory_space<vmem>>, %arg8: memref<10x10xbf16, #tpu.memory_space<vmem>>, %arg9: memref<1x10xf32, #tpu.memory_space<vmem>>, %arg10: memref<512x10xf32, #tpu.memory_space<vmem>>) attributes {dimension_semantics = [#tpu.dimension_semantics<parallel>], iteration_bounds = array<i64: 1>, scalar_prefetch = 0 : i64, scratch_operands = 0 : i64, tpu.core_type = #tpu.core_type<tc>, window_params = [{transform_indices = @transform_0, window_bounds = array<i64: 512, 784>}, {pipeline_mode = #tpu.pipeline_mode<synchronous>, transform_indices = @transform_1, window_bounds = array<i64: 784, 10>}, {pipeline_mode = #tpu.pipeline_mode<synchronous>, transform_indices = @transform_2, window_bounds = array<i64: 1, 10>}, {pipeline_mode = #tpu.pipeline_mode<synchronous>, transform_indices = @transform_3, window_bounds = array<i64: 10, 10>}, {pipeline_mode = #tpu.pipeline_mode<synchronous>, transform_indices = @transform_4, window_bounds = array<i64: 1, 10>}, {pipeline_mode = #tpu.pipeline_mode<synchronous>, transform_indices = @transform_5, window_bounds = array<i64: 10, 10>}, {pipeline_mode = #tpu.pipeline_mode<synchronous>, transform_indices = @transform_6, window_bounds = array<i64: 1, 10>}, {pipeline_mode = #tpu.pipeline_mode<synchronous>, transform_indices = @transform_7, window_bounds = array<i64: 10, 10>}, {pipeline_mode = #tpu.pipeline_mode<synchronous>, transform_indices = @transform_8, window_bounds = array<i64: 1, 10>}, {transform_indices = @transform_9, window_bounds = array<i64: 512, 10>}]} {
    %c0 = arith.constant 0 : index
    %c0_0 = arith.constant 0 : index
    %0 = vector.load %arg1[%c0, %c0_0] : memref<512x784xbf16, #tpu.memory_space<vmem>>, vector<512x784xbf16>
    %c0_1 = arith.constant 0 : index
    %c0_2 = arith.constant 0 : index
    %1 = vector.load %arg2[%c0_1, %c0_2] : memref<784x10xbf16, #tpu.memory_space<vmem>>, vector<784x10xbf16>
    %cst = arith.constant dense<0.000000e+00> : vector<512x10xf32>
    %2 = tpu.matmul %0, %1, %cst {dimension_numbers = #tpu.dot_dimension_numbers<[1], [0], [0], [1], [0, 0, 1, 1], [], []>} : vector<512x784xbf16>, vector<784x10xbf16>, vector<512x10xf32> -> vector<512x10xf32>
    %c0_3 = arith.constant 0 : index
    %c0_4 = arith.constant 0 : index
    %3 = vector.load %arg3[%c0_3, %c0_4] : memref<1x10xf32, #tpu.memory_space<vmem>>, vector<1x10xf32>
    %4 = vector.broadcast %3 : vector<1x10xf32> to vector<512x10xf32>
    %5 = arith.addf %2, %4 : vector<512x10xf32>
    %cst_5 = arith.constant 0.000000e+00 : f32
    %6 = vector.broadcast %cst_5 : f32 to vector<512x10xf32>
    %7 = arith.maximumf %5, %6 : vector<512x10xf32>
    %8 = arith.truncf %7 : vector<512x10xf32> to vector<512x10xbf16>
    %c0_6 = arith.constant 0 : index
    %c0_7 = arith.constant 0 : index
    %9 = vector.load %arg4[%c0_6, %c0_7] : memref<10x10xbf16, #tpu.memory_space<vmem>>, vector<10x10xbf16>
    %cst_8 = arith.constant dense<0.000000e+00> : vector<512x10xf32>
    %10 = tpu.matmul %8, %9, %cst_8 {dimension_numbers = #tpu.dot_dimension_numbers<[1], [0], [0], [1], [0, 0, 1, 1], [], []>} : vector<512x10xbf16>, vector<10x10xbf16>, vector<512x10xf32> -> vector<512x10xf32>
    %c0_9 = arith.constant 0 : index
    %c0_10 = arith.constant 0 : index
    %11 = vector.load %arg5[%c0_9, %c0_10] : memref<1x10xf32, #tpu.memory_space<vmem>>, vector<1x10xf32>
    %12 = vector.broadcast %11 : vector<1x10xf32> to vector<512x10xf32>
    %13 = arith.addf %10, %12 : vector<512x10xf32>
    %cst_11 = arith.constant 0.000000e+00 : f32
    %14 = vector.broadcast %cst_11 : f32 to vector<512x10xf32>
    %15 = arith.maximumf %13, %14 : vector<512x10xf32>
    %16 = arith.truncf %15 : vector<512x10xf32> to vector<512x10xbf16>
    %c0_12 = arith.constant 0 : index
    %c0_13 = arith.constant 0 : index
    %17 = vector.load %arg6[%c0_12, %c0_13] : memref<10x10xbf16, #tpu.memory_space<vmem>>, vector<10x10xbf16>
    %cst_14 = arith.constant dense<0.000000e+00> : vector<512x10xf32>
    %18 = tpu.matmul %16, %17, %cst_14 {dimension_numbers = #tpu.dot_dimension_numbers<[1], [0], [0], [1], [0, 0, 1, 1], [], []>} : vector<512x10xbf16>, vector<10x10xbf16>, vector<512x10xf32> -> vector<512x10xf32>
    %c0_15 = arith.constant 0 : index
    %c0_16 = arith.constant 0 : index
    %19 = vector.load %arg7[%c0_15, %c0_16] : memref<1x10xf32, #tpu.memory_space<vmem>>, vector<1x10xf32>
    %20 = vector.broadcast %19 : vector<1x10xf32> to vector<512x10xf32>
    %21 = arith.addf %18, %20 : vector<512x10xf32>
    %cst_17 = arith.constant 0.000000e+00 : f32
    %22 = vector.broadcast %cst_17 : f32 to vector<512x10xf32>
    %23 = arith.maximumf %21, %22 : vector<512x10xf32>
    %24 = arith.truncf %23 : vector<512x10xf32> to vector<512x10xbf16>
    %c0_18 = arith.constant 0 : index
    %c0_19 = arith.constant 0 : index
    %25 = vector.load %arg8[%c0_18, %c0_19] : memref<10x10xbf16, #tpu.memory_space<vmem>>, vector<10x10xbf16>
    %cst_20 = arith.constant dense<0.000000e+00> : vector<512x10xf32>
    %26 = tpu.matmul %24, %25, %cst_20 {dimension_numbers = #tpu.dot_dimension_numbers<[1], [0], [0], [1], [0, 0, 1, 1], [], []>} : vector<512x10xbf16>, vector<10x10xbf16>, vector<512x10xf32> -> vector<512x10xf32>
    %c0_21 = arith.constant 0 : index
    %c0_22 = arith.constant 0 : index
    %27 = vector.load %arg9[%c0_21, %c0_22] : memref<1x10xf32, #tpu.memory_space<vmem>>, vector<1x10xf32>
    %28 = vector.broadcast %27 : vector<1x10xf32> to vector<512x10xf32>
    %29 = arith.addf %26, %28 : vector<512x10xf32>
    %c0_23 = arith.constant 0 : index
    %c0_24 = arith.constant 0 : index
    %30 = vector.load %arg10[%c0_23, %c0_24] : memref<512x10xf32, #tpu.memory_space<vmem>>, vector<512x10xf32>
    tpu.vector_store %arg10[%c0_23, %c0_24], %29 {strides = array<i32>} : memref<512x10xf32, #tpu.memory_space<vmem>>, vector<512x10xf32>,
    return
  }
  func.func @transform_0(%arg0: i32) -> (i32, i32) {
    %c0_i32 = arith.constant 0 : i32
    %c0_i32_0 = arith.constant 0 : i32
    return %arg0, %c0_i32 : i32, i32
  }
  func.func @transform_1(%arg0: i32) -> (i32, i32) {
    %c0_i32 = arith.constant 0 : i32
    %c0_i32_0 = arith.constant 0 : i32
    %c0_i32_1 = arith.constant 0 : i32
    return %c0_i32, %c0_i32_0 : i32, i32
  }
  func.func @transform_2(%arg0: i32) -> (i32, i32) {
    %c0_i32 = arith.constant 0 : i32
    %c0_i32_0 = arith.constant 0 : i32
    %c0_i32_1 = arith.constant 0 : i32
    return %c0_i32, %c0_i32_0 : i32, i32
  }
  func.func @transform_3(%arg0: i32) -> (i32, i32) {
    %c0_i32 = arith.constant 0 : i32
    %c0_i32_0 = arith.constant 0 : i32
    %c0_i32_1 = arith.constant 0 : i32
    return %c0_i32, %c0_i32_0 : i32, i32
  }
  func.func @transform_4(%arg0: i32) -> (i32, i32) {
    %c0_i32 = arith.constant 0 : i32
    %c0_i32_0 = arith.constant 0 : i32
    %c0_i32_1 = arith.constant 0 : i32
    return %c0_i32, %c0_i32_0 : i32, i32
  }
  func.func @transform_5(%arg0: i32) -> (i32, i32) {
    %c0_i32 = arith.constant 0 : i32
    %c0_i32_0 = arith.constant 0 : i32
    %c0_i32_1 = arith.constant 0 : i32
    return %c0_i32, %c0_i32_0 : i32, i32
  }
  func.func @transform_6(%arg0: i32) -> (i32, i32) {
    %c0_i32 = arith.constant 0 : i32
    %c0_i32_0 = arith.constant 0 : i32
    %c0_i32_1 = arith.constant 0 : i32
    return %c0_i32, %c0_i32_0 : i32, i32
  }
  func.func @transform_7(%arg0: i32) -> (i32, i32) {
    %c0_i32 = arith.constant 0 : i32
    %c0_i32_0 = arith.constant 0 : i32
    %c0_i32_1 = arith.constant 0 : i32
    return %c0_i32, %c0_i32_0 : i32, i32
  }
  func.func @transform_8(%arg0: i32) -> (i32, i32) {
    %c0_i32 = arith.constant 0 : i32
    %c0_i32_0 = arith.constant 0 : i32
    %c0_i32_1 = arith.constant 0 : i32
    return %c0_i32, %c0_i32_0 : i32, i32
  }
  func.func @transform_9(%arg0: i32) -> (i32, i32) {
    %c0_i32 = arith.constant 0 : i32
    %c0_i32_0 = arith.constant 0 : i32
    return %arg0, %c0_i32 : i32, i32
  }
}

</mosaic_0001>

<llo_original>
// kernel: mnist_net_forward.1
$region0: #{mnist_net_forward.1}
  #allocation0 [shape = 'u32[]', space=smem, size = 0x4, offset = 0x4, fixed_abs, tag = 'smem constant byte address 0x4 - core index']
  #allocation1 [shape = 'u32[144,128]{1,0:T(1,128)}', space=vmem, size = 0x12000, scoped, tag = 'internal scratch']
  %s0 = inlined_call_operand.vmem [shape: bf16[512,784], index: 0, kind: input, shape index: {}]
  %s1 = inlined_call_operand.vmem [shape: bf16[784,10], index: 1, kind: input, shape index: {}]
  %s2 = inlined_call_operand.vmem [shape: f32[1,10], index: 2, kind: input, shape index: {}]
  %s3 = inlined_call_operand.vmem [shape: bf16[10,10], index: 3, kind: input, shape index: {}]
  %s4 = inlined_call_operand.vmem [shape: f32[1,10], index: 4, kind: input, shape index: {}]
  %s5 = inlined_call_operand.vmem [shape: bf16[10,10], index: 5, kind: input, shape index: {}]
  %s6 = inlined_call_operand.vmem [shape: f32[1,10], index: 6, kind: input, shape index: {}]
  %s7 = inlined_call_operand.vmem [shape: bf16[10,10], index: 7, kind: input, shape index: {}]
  %s8 = inlined_call_operand.vmem [shape: f32[1,10], index: 8, kind: input, shape index: {}]
  %s9 = inlined_call_operand.vmem [shape: f32[512,10], index: 9, kind: output, shape index: {}]
  %s10 = sld [smem:[#allocation0]]
  $region46: #{mnist_net_forward.1} parent=0
    _
  %s12 = ssub.s32 1, %s10
  %s13 = scalar_select 0, %s12, %s10
  // Predicated region
  $region2: #{mnist_net_forward.1} parent=0 // pred_check
    _
  $region3: #{mnist_net_forward.1} parent=0 // pred_check_branch
    %15 = sbr.rel (0) target = $region5
  $region4: #{mnist_net_forward.1} parent=0 // pred_region
    _
  $region5: #{mnist_net_forward.1} parent=0 // pred_fallthru
    _
  // Predicated region
  $region6: #{mnist_net_forward.1} parent=0 // pred_check
    _
  $region7: #{mnist_net_forward.1} parent=0 // pred_check_branch
    %17 = sbr.rel (0) target = $region9
  $region8: #{mnist_net_forward.1} parent=0 // pred_region
    _
  $region9: #{mnist_net_forward.1} parent=0 // pred_fallthru
    _
  // Predicated region
  $region10: #{mnist_net_forward.1} parent=0 // pred_check
    _
  $region11: #{mnist_net_forward.1} parent=0 // pred_check_branch
    %19 = sbr.rel (0) target = $region13
  $region12: #{mnist_net_forward.1} parent=0 // pred_region
    _
  $region13: #{mnist_net_forward.1} parent=0 // pred_fallthru
    _
  // Predicated region
  $region14: #{mnist_net_forward.1} parent=0 // pred_check
    _
  $region15: #{mnist_net_forward.1} parent=0 // pred_check_branch
    %21 = sbr.rel (0) target = $region17
  $region16: #{mnist_net_forward.1} parent=0 // pred_region
    _
  $region17: #{mnist_net_forward.1} parent=0 // pred_fallthru
    _
  // Predicated region
  $region18: #{mnist_net_forward.1} parent=0 // pred_check
    _
  $region19: #{mnist_net_forward.1} parent=0 // pred_check_branch
    %23 = sbr.rel (0) target = $region21
  $region20: #{mnist_net_forward.1} parent=0 // pred_region
    _
  $region21: #{mnist_net_forward.1} parent=0 // pred_fallthru
    _
  // Predicated region
  $region22: #{mnist_net_forward.1} parent=0 // pred_check
    _
  $region23: #{mnist_net_forward.1} parent=0 // pred_check_branch
    %25 = sbr.rel (0) target = $region25
  $region24: #{mnist_net_forward.1} parent=0 // pred_region
    _
  $region25: #{mnist_net_forward.1} parent=0 // pred_fallthru
    _
  // Predicated region
  $region26: #{mnist_net_forward.1} parent=0 // pred_check
    _
  $region27: #{mnist_net_forward.1} parent=0 // pred_check_branch
    %27 = sbr.rel (0) target = $region29
  $region28: #{mnist_net_forward.1} parent=0 // pred_region
    _
  $region29: #{mnist_net_forward.1} parent=0 // pred_fallthru
    _
  // Predicated region
  $region30: #{mnist_net_forward.1} parent=0 // pred_check
    _
  $region31: #{mnist_net_forward.1} parent=0 // pred_check_branch
    %29 = sbr.rel (0) target = $region33
  $region32: #{mnist_net_forward.1} parent=0 // pred_region
    _
  $region33: #{mnist_net_forward.1} parent=0 // pred_fallthru
    _
  // Predicated region
  $region34: #{mnist_net_forward.1} parent=0 // pred_check
    _
  $region35: #{mnist_net_forward.1} parent=0 // pred_check_branch
    %31 = sbr.rel (0) target = $region37
  $region36: #{mnist_net_forward.1} parent=0 // pred_region
    _
  $region37: #{mnist_net_forward.1} parent=0 // pred_fallthru
    _
  %v33 = vld [vmem:[%s0] sm:$0xff]
  %v34 = vld [vmem:[%s0 + $0x8] sm:$0xff]
  %v35 = vld [vmem:[%s0 + $0x10] sm:$0xff]
  %v36 = vld [vmem:[%s0 + $0x18] sm:$0xf]
  %v37 = vld [vmem:[%s0 + $0x1c] sm:$0xff]
  %v38 = vld [vmem:[%s0 + $0x24] sm:$0xff]
  %v39 = vld [vmem:[%s0 + $0x2c] sm:$0xff]
  %v40 = vld [vmem:[%s0 + $0x34] sm:$0xf]
  %v41 = vld [vmem:[%s0 + $0x38] sm:$0xff]
  %v42 = vld [vmem:[%s0 + $0x40] sm:$0xff]
  %v43 = vld [vmem:[%s0 + $0x48] sm:$0xff]
  %v44 = vld [vmem:[%s0 + $0x50] sm:$0xf]
  %v45 = vld [vmem:[%s0 + $0x54] sm:$0xff]
  %v46 = vld [vmem:[%s0 + $0x5c] sm:$0xff]
  %v47 = vld [vmem:[%s0 + $0x64] sm:$0xff]
  %v48 = vld [vmem:[%s0 + $0x6c] sm:$0xf]
  %v49 = vld [vmem:[%s0 + $0x70] sm:$0xff]
  %v50 = vld [vmem:[%s0 + $0x78] sm:$0xff]
  %v51 = vld [vmem:[%s0 + $0x80] sm:$0xff]
  %v52 = vld [vmem:[%s0 + $0x88] sm:$0xf]
  %v53 = vld [vmem:[%s0 + $0x8c] sm:$0xff]
  %v54 = vld [vmem:[%s0 + $0x94] sm:$0xff]
  %v55 = vld [vmem:[%s0 + $0x9c] sm:$0xff]
  %v56 = vld [vmem:[%s0 + $0xa4] sm:$0xf]
  %v57 = vld [vmem:[%s0 + $0xa8] sm:$0xff]
  %v58 = vld [vmem:[%s0 + $0xb0] sm:$0xff]
  %v59 = vld [vmem:[%s0 + $0xb8] sm:$0xff]
  %v60 = vld [vmem:[%s0 + $0xc0] sm:$0xf]
  %v61 = vld [vmem:[%s0 + $0xc4] sm:$0xff]
  %v62 = vld [vmem:[%s0 + $0xcc] sm:$0xff]
  %v63 = vld [vmem:[%s0 + $0xd4] sm:$0xff]
  %v64 = vld [vmem:[%s0 + $0xdc] sm:$0xf]
  %v65 = vld [vmem:[%s0 + $0xe0] sm:$0xff]
  %v66 = vld [vmem:[%s0 + $0xe8] sm:$0xff]
  %v67 = vld [vmem:[%s0 + $0xf0] sm:$0xff]
  %v68 = vld [vmem:[%s0 + $0xf8] sm:$0xf]
  %v69 = vld [vmem:[%s0 + $0xfc] sm:$0xff]
  %v70 = vld [vmem:[%s0 + $0x104] sm:$0xff]
  %v71 = vld [vmem:[%s0 + $0x10c] sm:$0xff]
  %v72 = vld [vmem:[%s0 + $0x114] sm:$0xf]
  %v73 = vld [vmem:[%s0 + $0x118] sm:$0xff]
  %v74 = vld [vmem:[%s0 + $0x120] sm:$0xff]
  %v75 = vld [vmem:[%s0 + $0x128] sm:$0xff]
  %v76 = vld [vmem:[%s0 + $0x130] sm:$0xf]
  %v77 = vld [vmem:[%s0 + $0x134] sm:$0xff]
  %v78 = vld [vmem:[%s0 + $0x13c] sm:$0xff]
  %v79 = vld [vmem:[%s0 + $0x144] sm:$0xff]
  %v80 = vld [vmem:[%s0 + $0x14c] sm:$0xf]
  %v81 = vld [vmem:[%s0 + $0x150] sm:$0xff]
  %v82 = vld [vmem:[%s0 + $0x158] sm:$0xff]
  %v83 = vld [vmem:[%s0 + $0x160] sm:$0xff]
  %v84 = vld [vmem:[%s0 + $0x168] sm:$0xf]
  %v85 = vld [vmem:[%s0 + $0x16c] sm:$0xff]
  %v86 = vld [vmem:[%s0 + $0x174] sm:$0xff]
  %v87 = vld [vmem:[%s0 + $0x17c] sm:$0xff]
  %v88 = vld [vmem:[%s0 + $0x184] sm:$0xf]
  %v89 = vld [vmem:[%s0 + $0x188] sm:$0xff]
  %v90 = vld [vmem:[%s0 + $0x190] sm:$0xff]
  %v91 = vld [vmem:[%s0 + $0x198] sm:$0xff]
  %v92 = vld [vmem:[%s0 + $0x1a0] sm:$0xf]
  %v93 = vld [vmem:[%s0 + $0x1a4] sm:$0xff]
  %v94 = vld [vmem:[%s0 + $0x1ac] sm:$0xff]
  %v95 = vld [vmem:[%s0 + $0x1b4] sm:$0xff]
  %v96 = vld [vmem:[%s0 + $0x1bc] sm:$0xf]
  %v97 = vld [vmem:[%s0 + $0x1c0] sm:$0xff]
  %v98 = vld [vmem:[%s0 + $0x1c8] sm:$0xff]
  %v99 = vld [vmem:[%s0 + $0x1d0] sm:$0xff]
  %v100 = vld [vmem:[%s0 + $0x1d8] sm:$0xf]
  %v101 = vld [vmem:[%s0 + $0x1dc] sm:$0xff]
  %v102 = vld [vmem:[%s0 + $0x1e4] sm:$0xff]
  %v103 = vld [vmem:[%s0 + $0x1ec] sm:$0xff]
  %v104 = vld [vmem:[%s0 + $0x1f4] sm:$0xf]
  %v105 = vld [vmem:[%s0 + $0x1f8] sm:$0xff]
  %v106 = vld [vmem:[%s0 + $0x200] sm:$0xff]
  %v107 = vld [vmem:[%s0 + $0x208] sm:$0xff]
  %v108 = vld [vmem:[%s0 + $0x210] sm:$0xf]
  %v109 = vld [vmem:[%s0 + $0x214] sm:$0xff]
  %v110 = vld [vmem:[%s0 + $0x21c] sm:$0xff]
  %v111 = vld [vmem:[%s0 + $0x224] sm:$0xff]
  %v112 = vld [vmem:[%s0 + $0x22c] sm:$0xf]
  %v113 = vld [vmem:[%s0 + $0x230] sm:$0xff]
  %v114 = vld [vmem:[%s0 + $0x238] sm:$0xff]
  %v115 = vld [vmem:[%s0 + $0x240] sm:$0xff]
  %v116 = vld [vmem:[%s0 + $0x248] sm:$0xf]
  %v117 = vld [vmem:[%s0 + $0x24c] sm:$0xff]
  %v118 = vld [vmem:[%s0 + $0x254] sm:$0xff]
  %v119 = vld [vmem:[%s0 + $0x25c] sm:$0xff]
  %v120 = vld [vmem:[%s0 + $0x264] sm:$0xf]
  %v121 = vld [vmem:[%s0 + $0x268] sm:$0xff]
  %v122 = vld [vmem:[%s0 + $0x270] sm:$0xff]
  %v123 = vld [vmem:[%s0 + $0x278] sm:$0xff]
  %v124 = vld [vmem:[%s0 + $0x280] sm:$0xf]
  %v125 = vld [vmem:[%s0 + $0x284] sm:$0xff]
  %v126 = vld [vmem:[%s0 + $0x28c] sm:$0xff]
  %v127 = vld [vmem:[%s0 + $0x294] sm:$0xff]
  %v128 = vld [vmem:[%s0 + $0x29c] sm:$0xf]
  %v129 = vld [vmem:[%s0 + $0x2a0] sm:$0xff]
  %v130 = vld [vmem:[%s0 + $0x2a8] sm:$0xff]
  %v131 = vld [vmem:[%s0 + $0x2b0] sm:$0xff]
  %v132 = vld [vmem:[%s0 + $0x2b8] sm:$0xf]
  %v133 = vld [vmem:[%s0 + $0x2bc] sm:$0xff]
  %v134 = vld [vmem:[%s0 + $0x2c4] sm:$0xff]
  %v135 = vld [vmem:[%s0 + $0x2cc] sm:$0xff]
  %v136 = vld [vmem:[%s0 + $0x2d4] sm:$0xf]
  %v137 = vld [vmem:[%s0 + $0x2d8] sm:$0xff]
  %v138 = vld [vmem:[%s0 + $0x2e0] sm:$0xff]
  %v139 = vld [vmem:[%s0 + $0x2e8] sm:$0xff]
  %v140 = vld [vmem:[%s0 + $0x2f0] sm:$0xf]
  %v141 = vld [vmem:[%s0 + $0x2f4] sm:$0xff]
  %v142 = vld [vmem:[%s0 + $0x2fc] sm:$0xff]
  %v143 = vld [vmem:[%s0 + $0x304] sm:$0xff]
  %v144 = vld [vmem:[%s0 + $0x30c] sm:$0xf]
  %v145 = vld [vmem:[%s0 + $0x310] sm:$0xff]
  %v146 = vld [vmem:[%s0 + $0x318] sm:$0xff]
  %v147 = vld [vmem:[%s0 + $0x320] sm:$0xff]
  %v148 = vld [vmem:[%s0 + $0x328] sm:$0xf]
  %v149 = vld [vmem:[%s0 + $0x32c] sm:$0xff]
  %v150 = vld [vmem:[%s0 + $0x334] sm:$0xff]
  %v151 = vld [vmem:[%s0 + $0x33c] sm:$0xff]
  %v152 = vld [vmem:[%s0 + $0x344] sm:$0xf]
  %v153 = vld [vmem:[%s0 + $0x348] sm:$0xff]
  %v154 = vld [vmem:[%s0 + $0x350] sm:$0xff]
  %v155 = vld [vmem:[%s0 + $0x358] sm:$0xff]
  %v156 = vld [vmem:[%s0 + $0x360] sm:$0xf]
  %v157 = vld [vmem:[%s0 + $0x364] sm:$0xff]
  %v158 = vld [vmem:[%s0 + $0x36c] sm:$0xff]
  %v159 = vld [vmem:[%s0 + $0x374] sm:$0xff]
  %v160 = vld [vmem:[%s0 + $0x37c] sm:$0xf]
  %v161 = vld [vmem:[%s0 + $0x380] sm:$0xff]
  %v162 = vld [vmem:[%s0 + $0x388] sm:$0xff]
  %v163 = vld [vmem:[%s0 + $0x390] sm:$0xff]
  %v164 = vld [vmem:[%s0 + $0x398] sm:$0xf]
  %v165 = vld [vmem:[%s0 + $0x39c] sm:$0xff]
  %v166 = vld [vmem:[%s0 + $0x3a4] sm:$0xff]
  %v167 = vld [vmem:[%s0 + $0x3ac] sm:$0xff]
  %v168 = vld [vmem:[%s0 + $0x3b4] sm:$0xf]
  %v169 = vld [vmem:[%s0 + $0x3b8] sm:$0xff]
  %v170 = vld [vmem:[%s0 + $0x3c0] sm:$0xff]
  %v171 = vld [vmem:[%s0 + $0x3c8] sm:$0xff]
  %v172 = vld [vmem:[%s0 + $0x3d0] sm:$0xf]
  %v173 = vld [vmem:[%s0 + $0x3d4] sm:$0xff]
  %v174 = vld [vmem:[%s0 + $0x3dc] sm:$0xff]
  %v175 = vld [vmem:[%s0 + $0x3e4] sm:$0xff]
  %v176 = vld [vmem:[%s0 + $0x3ec] sm:$0xf]
  %v177 = vld [vmem:[%s0 + $0x3f0] sm:$0xff]
  %v178 = vld [vmem:[%s0 + $0x3f8] sm:$0xff]
  %v179 = vld [vmem:[%s0 + $0x400] sm:$0xff]
  %v180 = vld [vmem:[%s0 + $0x408] sm:$0xf]
  %v181 = vld [vmem:[%s0 + $0x40c] sm:$0xff]
  %v182 = vld [vmem:[%s0 + $0x414] sm:$0xff]
  %v183 = vld [vmem:[%s0 + $0x41c] sm:$0xff]
  %v184 = vld [vmem:[%s0 + $0x424] sm:$0xf]
  %v185 = vld [vmem:[%s0 + $0x428] sm:$0xff]
  %v186 = vld [vmem:[%s0 + $0x430] sm:$0xff]
  %v187 = vld [vmem:[%s0 + $0x438] sm:$0xff]
  %v188 = vld [vmem:[%s0 + $0x440] sm:$0xf]
  %v189 = vld [vmem:[%s0 + $0x444] sm:$0xff]
  %v190 = vld [vmem:[%s0 + $0x44c] sm:$0xff]
  %v191 = vld [vmem:[%s0 + $0x454] sm:$0xff]
  %v192 = vld [vmem:[%s0 + $0x45c] sm:$0xf]
  %v193 = vld [vmem:[%s0 + $0x460] sm:$0xff]
  %v194 = vld [vmem:[%s0 + $0x468] sm:$0xff]
  %v195 = vld [vmem:[%s0 + $0x470] sm:$0xff]
  %v196 = vld [vmem:[%s0 + $0x478] sm:$0xf]
  %v197 = vld [vmem:[%s0 + $0x47c] sm:$0xff]
  %v198 = vld [vmem:[%s0 + $0x484] sm:$0xff]
  %v199 = vld [vmem:[%s0 + $0x48c] sm:$0xff]
  %v200 = vld [vmem:[%s0 + $0x494] sm:$0xf]
  %v201 = vld [vmem:[%s0 + $0x498] sm:$0xff]
  %v202 = vld [vmem:[%s0 + $0x4a0] sm:$0xff]
  %v203 = vld [vmem:[%s0 + $0x4a8] sm:$0xff]
  %v204 = vld [vmem:[%s0 + $0x4b0] sm:$0xf]
  %v205 = vld [vmem:[%s0 + $0x4b4] sm:$0xff]
  %v206 = vld [vmem:[%s0 + $0x4bc] sm:$0xff]
  %v207 = vld [vmem:[%s0 + $0x4c4] sm:$0xff]
  %v208 = vld [vmem:[%s0 + $0x4cc] sm:$0xf]
  %v209 = vld [vmem:[%s0 + $0x4d0] sm:$0xff]
  %v210 = vld [vmem:[%s0 + $0x4d8] sm:$0xff]
  %v211 = vld [vmem:[%s0 + $0x4e0] sm:$0xff]
  %v212 = vld [vmem:[%s0 + $0x4e8] sm:$0xf]
  %v213 = vld [vmem:[%s0 + $0x4ec] sm:$0xff]
  %v214 = vld [vmem:[%s0 + $0x4f4] sm:$0xff]
  %v215 = vld [vmem:[%s0 + $0x4fc] sm:$0xff]
  %v216 = vld [vmem:[%s0 + $0x504] sm:$0xf]
  %v217 = vld [vmem:[%s0 + $0x508] sm:$0xff]
  %v218 = vld [vmem:[%s0 + $0x510] sm:$0xff]
  %v219 = vld [vmem:[%s0 + $0x518] sm:$0xff]
  %v220 = vld [vmem:[%s0 + $0x520] sm:$0xf]
  %v221 = vld [vmem:[%s0 + $0x524] sm:$0xff]
  %v222 = vld [vmem:[%s0 + $0x52c] sm:$0xff]
  %v223 = vld [vmem:[%s0 + $0x534] sm:$0xff]
  %v224 = vld [vmem:[%s0 + $0x53c] sm:$0xf]
  %v225 = vld [vmem:[%s0 + $0x540] sm:$0xff]
  %v226 = vld [vmem:[%s0 + $0x548] sm:$0xff]
  %v227 = vld [vmem:[%s0 + $0x550] sm:$0xff]
  %v228 = vld [vmem:[%s0 + $0x558] sm:$0xf]
  %v229 = vld [vmem:[%s0 + $0x55c] sm:$0xff]
  %v230 = vld [vmem:[%s0 + $0x564] sm:$0xff]
  %v231 = vld [vmem:[%s0 + $0x56c] sm:$0xff]
  %v232 = vld [vmem:[%s0 + $0x574] sm:$0xf]
  %v233 = vld [vmem:[%s0 + $0x578] sm:$0xff]
  %v234 = vld [vmem:[%s0 + $0x580] sm:$0xff]
  %v235 = vld [vmem:[%s0 + $0x588] sm:$0xff]
  %v236 = vld [vmem:[%s0 + $0x590] sm:$0xf]
  %v237 = vld [vmem:[%s0 + $0x594] sm:$0xff]
  %v238 = vld [vmem:[%s0 + $0x59c] sm:$0xff]
  %v239 = vld [vmem:[%s0 + $0x5a4] sm:$0xff]
  %v240 = vld [vmem:[%s0 + $0x5ac] sm:$0xf]
  %v241 = vld [vmem:[%s0 + $0x5b0] sm:$0xff]
  %v242 = vld [vmem:[%s0 + $0x5b8] sm:$0xff]
  %v243 = vld [vmem:[%s0 + $0x5c0] sm:$0xff]
  %v244 = vld [vmem:[%s0 + $0x5c8] sm:$0xf]
  %v245 = vld [vmem:[%s0 + $0x5cc] sm:$0xff]
  %v246 = vld [vmem:[%s0 + $0x5d4] sm:$0xff]
  %v247 = vld [vmem:[%s0 + $0x5dc] sm:$0xff]
  %v248 = vld [vmem:[%s0 + $0x5e4] sm:$0xf]
  %v249 = vld [vmem:[%s0 + $0x5e8] sm:$0xff]
  %v250 = vld [vmem:[%s0 + $0x5f0] sm:$0xff]
  %v251 = vld [vmem:[%s0 + $0x5f8] sm:$0xff]
  %v252 = vld [vmem:[%s0 + $0x600] sm:$0xf]
  %v253 = vld [vmem:[%s0 + $0x604] sm:$0xff]
  %v254 = vld [vmem:[%s0 + $0x60c] sm:$0xff]
  %v255 = vld [vmem:[%s0 + $0x614] sm:$0xff]
  %v256 = vld [vmem:[%s0 + $0x61c] sm:$0xf]
  %v257 = vld [vmem:[%s0 + $0x620] sm:$0xff]
  %v258 = vld [vmem:[%s0 + $0x628] sm:$0xff]
  %v259 = vld [vmem:[%s0 + $0x630] sm:$0xff]
  %v260 = vld [vmem:[%s0 + $0x638] sm:$0xf]
  %v261 = vld [vmem:[%s0 + $0x63c] sm:$0xff]
  %v262 = vld [vmem:[%s0 + $0x644] sm:$0xff]
  %v263 = vld [vmem:[%s0 + $0x64c] sm:$0xff]
  %v264 = vld [vmem:[%s0 + $0x654] sm:$0xf]
  %v265 = vld [vmem:[%s0 + $0x658] sm:$0xff]
  %v266 = vld [vmem:[%s0 + $0x660] sm:$0xff]
  %v267 = vld [vmem:[%s0 + $0x668] sm:$0xff]
  %v268 = vld [vmem:[%s0 + $0x670] sm:$0xf]
  %v269 = vld [vmem:[%s0 + $0x674] sm:$0xff]
  %v270 = vld [vmem:[%s0 + $0x67c] sm:$0xff]
  %v271 = vld [vmem:[%s0 + $0x684] sm:$0xff]
  %v272 = vld [vmem:[%s0 + $0x68c] sm:$0xf]
  %v273 = vld [vmem:[%s0 + $0x690] sm:$0xff]
  %v274 = vld [vmem:[%s0 + $0x698] sm:$0xff]
  %v275 = vld [vmem:[%s0 + $0x6a0] sm:$0xff]
  %v276 = vld [vmem:[%s0 + $0x6a8] sm:$0xf]
  %v277 = vld [vmem:[%s0 + $0x6ac] sm:$0xff]
  %v278 = vld [vmem:[%s0 + $0x6b4] sm:$0xff]
  %v279 = vld [vmem:[%s0 + $0x6bc] sm:$0xff]
  %v280 = vld [vmem:[%s0 + $0x6c4] sm:$0xf]
  %v281 = vld [vmem:[%s0 + $0x6c8] sm:$0xff]
  %v282 = vld [vmem:[%s0 + $0x6d0] sm:$0xff]
  %v283 = vld [vmem:[%s0 + $0x6d8] sm:$0xff]
  %v284 = vld [vmem:[%s0 + $0x6e0] sm:$0xf]
  %v285 = vld [vmem:[%s0 + $0x6e4] sm:$0xff]
  %v286 = vld [vmem:[%s0 + $0x6ec] sm:$0xff]
  %v287 = vld [vmem:[%s0 + $0x6f4] sm:$0xff]
  %v288 = vld [vmem:[%s0 + $0x6fc] sm:$0xf]
  %v289 = vld [vmem:[%s1] sm:$0xf]
  %v290 = vld [vmem:[%s1 + $0x4] sm:$0xf]
  %v291 = vld [vmem:[%s1 + $0x8] sm:$0xf]
  %v292 = vld [vmem:[%s1 + $0xc] sm:$0xf]
  %v293 = vld [vmem:[%s1 + $0x10] sm:$0xf]
  %v294 = vld [vmem:[%s1 + $0x14] sm:$0xf]
  %v295 = vld [vmem:[%s1 + $0x18] sm:$0xf]
  %v296 = vld [vmem:[%s1 + $0x1c] sm:$0xf]
  %v297 = vld [vmem:[%s1 + $0x20] sm:$0xf]
  %v298 = vld [vmem:[%s1 + $0x24] sm:$0xf]
  %v299 = vld [vmem:[%s1 + $0x28] sm:$0xf]
  %v300 = vld [vmem:[%s1 + $0x2c] sm:$0xf]
  %v301 = vld [vmem:[%s1 + $0x30] sm:$0xf]
  %v302 = vld [vmem:[%s1 + $0x34] sm:$0xf]
  %v303 = vld [vmem:[%s1 + $0x38] sm:$0xf]
  %v304 = vld [vmem:[%s1 + $0x3c] sm:$0xf]
  %v305 = vld [vmem:[%s1 + $0x40] sm:$0xf]
  %v306 = vld [vmem:[%s1 + $0x44] sm:$0xf]
  %v307 = vld [vmem:[%s1 + $0x48] sm:$0xf]
  %v308 = vld [vmem:[%s1 + $0x4c] sm:$0xf]
  %v309 = vld [vmem:[%s1 + $0x50] sm:$0xf]
  %v310 = vld [vmem:[%s1 + $0x54] sm:$0xf]
  %v311 = vld [vmem:[%s1 + $0x58] sm:$0xf]
  %v312 = vld [vmem:[%s1 + $0x5c] sm:$0xf]
  %v313 = vld [vmem:[%s1 + $0x60] sm:$0xf]
  %v314 = vld [vmem:[%s1 + $0x64] sm:$0xf]
  %v315 = vld [vmem:[%s1 + $0x68] sm:$0xf]
  %v316 = vld [vmem:[%s1 + $0x6c] sm:$0xf]
  %v317 = vld [vmem:[%s1 + $0x70] sm:$0xf]
  %v318 = vld [vmem:[%s1 + $0x74] sm:$0xf]
  %v319 = vld [vmem:[%s1 + $0x78] sm:$0xf]
  %v320 = vld [vmem:[%s1 + $0x7c] sm:$0xf]
  %v321 = vld [vmem:[%s1 + $0x80] sm:$0xf]
  %v322 = vld [vmem:[%s1 + $0x84] sm:$0xf]
  %v323 = vld [vmem:[%s1 + $0x88] sm:$0xf]
  %v324 = vld [vmem:[%s1 + $0x8c] sm:$0xf]
  %v325 = vld [vmem:[%s1 + $0x90] sm:$0xf]
  %v326 = vld [vmem:[%s1 + $0x94] sm:$0xf]
  %v327 = vld [vmem:[%s1 + $0x98] sm:$0xf]
  %v328 = vld [vmem:[%s1 + $0x9c] sm:$0xf]
  %v329 = vld [vmem:[%s1 + $0xa0] sm:$0xf]
  %v330 = vld [vmem:[%s1 + $0xa4] sm:$0xf]
  %v331 = vld [vmem:[%s1 + $0xa8] sm:$0xf]
  %v332 = vld [vmem:[%s1 + $0xac] sm:$0xf]
  %v333 = vld [vmem:[%s1 + $0xb0] sm:$0xf]
  %v334 = vld [vmem:[%s1 + $0xb4] sm:$0xf]
  %v335 = vld [vmem:[%s1 + $0xb8] sm:$0xf]
  %v336 = vld [vmem:[%s1 + $0xbc] sm:$0xf]
  %v337 = vld [vmem:[%s1 + $0xc0] sm:$0xf]
  %v338 = vld [vmem:[%s1 + $0xc4] sm:$0xf]
  %v339 = vld [vmem:[%s1 + $0xc8] sm:$0xf]
  %v340 = vld [vmem:[%s1 + $0xcc] sm:$0xf]
  %v341 = vld [vmem:[%s1 + $0xd0] sm:$0xf]
  %v342 = vld [vmem:[%s1 + $0xd4] sm:$0xf]
  %v343 = vld [vmem:[%s1 + $0xd8] sm:$0xf]
  %v344 = vld [vmem:[%s1 + $0xdc] sm:$0xf]
  %v345 = vld [vmem:[%s1 + $0xe0] sm:$0xf]
  %v346 = vld [vmem:[%s1 + $0xe4] sm:$0xf]
  %v347 = vld [vmem:[%s1 + $0xe8] sm:$0xf]
  %v348 = vld [vmem:[%s1 + $0xec] sm:$0xf]
  %v349 = vld [vmem:[%s1 + $0xf0] sm:$0xf]
  %v350 = vld [vmem:[%s1 + $0xf4] sm:$0xf]
  %v351 = vld [vmem:[%s1 + $0xf8] sm:$0xf]
  %v352 = vld [vmem:[%s1 + $0xfc] sm:$0xf]
  %v353 = vld [vmem:[%s1 + $0x100] sm:$0xf]
  %v354 = vld [vmem:[%s1 + $0x104] sm:$0xf]
  %v355 = vld [vmem:[%s1 + $0x108] sm:$0xf]
  %v356 = vld [vmem:[%s1 + $0x10c] sm:$0xf]
  %v357 = vld [vmem:[%s1 + $0x110] sm:$0xf]
  %v358 = vld [vmem:[%s1 + $0x114] sm:$0xf]
  %v359 = vld [vmem:[%s1 + $0x118] sm:$0xf]
  %v360 = vld [vmem:[%s1 + $0x11c] sm:$0xf]
  %v361 = vld [vmem:[%s1 + $0x120] sm:$0xf]
  %v362 = vld [vmem:[%s1 + $0x124] sm:$0xf]
  %v363 = vld [vmem:[%s1 + $0x128] sm:$0xf]
  %v364 = vld [vmem:[%s1 + $0x12c] sm:$0xf]
  %v365 = vld [vmem:[%s1 + $0x130] sm:$0xf]
  %v366 = vld [vmem:[%s1 + $0x134] sm:$0xf]
  %v367 = vld [vmem:[%s1 + $0x138] sm:$0xf]
  %v368 = vld [vmem:[%s1 + $0x13c] sm:$0xf]
  %v369 = vld [vmem:[%s1 + $0x140] sm:$0xf]
  %v370 = vld [vmem:[%s1 + $0x144] sm:$0xf]
  %v371 = vld [vmem:[%s1 + $0x148] sm:$0xf]
  %v372 = vld [vmem:[%s1 + $0x14c] sm:$0xf]
  %v373 = vld [vmem:[%s1 + $0x150] sm:$0xf]
  %v374 = vld [vmem:[%s1 + $0x154] sm:$0xf]
  %v375 = vld [vmem:[%s1 + $0x158] sm:$0xf]
  %v376 = vld [vmem:[%s1 + $0x15c] sm:$0xf]
  %v377 = vld [vmem:[%s1 + $0x160] sm:$0xf]
  %v378 = vld [vmem:[%s1 + $0x164] sm:$0xf]
  %v379 = vld [vmem:[%s1 + $0x168] sm:$0xf]
  %v380 = vld [vmem:[%s1 + $0x16c] sm:$0xf]
  %v381 = vld [vmem:[%s1 + $0x170] sm:$0xf]
  %v382 = vld [vmem:[%s1 + $0x174] sm:$0xf]
  %v383 = vld [vmem:[%s1 + $0x178] sm:$0xf]
  %v384 = vld [vmem:[%s1 + $0x17c] sm:$0xf]
  %v385 = vld [vmem:[%s1 + $0x180] sm:$0xf]
  %v386 = vld [vmem:[%s1 + $0x184] sm:$0xf]
  %v387 = vld [vmem:[%s2] sm:$0x1]
  %v389 = vlaneseq
  %v390 = vshrl.u32 %v389, 7
  %v391 = vsub.s32 0, %v390
  %v392 = vrot.slane %v387, %v391
  %v650 = vunpack.c.l.b16 %v33
  %v651 = vunpack.c.h.b16 %v33
  %v652 = vunpack.c.l.b16 %v34
  %v653 = vunpack.c.h.b16 %v34
  %v654 = vunpack.c.l.b16 %v35
  %v655 = vunpack.c.h.b16 %v35
  %v656 = vunpack.c.l.b16 %v36
  %v657 = vunpack.c.l.b16 %v37
  %v658 = vunpack.c.h.b16 %v37
  %v659 = vunpack.c.l.b16 %v38
  %v660 = vunpack.c.h.b16 %v38
  %v661 = vunpack.c.l.b16 %v39
  %v662 = vunpack.c.h.b16 %v39
  %v663 = vunpack.c.l.b16 %v40
  %v664 = vunpack.c.l.b16 %v41
  %v665 = vunpack.c.h.b16 %v41
  %v666 = vunpack.c.l.b16 %v42
  %v667 = vunpack.c.h.b16 %v42
  %v668 = vunpack.c.l.b16 %v43
  %v669 = vunpack.c.h.b16 %v43
  %v670 = vunpack.c.l.b16 %v44
  %v671 = vunpack.c.l.b16 %v45
  %v672 = vunpack.c.h.b16 %v45
  %v673 = vunpack.c.l.b16 %v46
  %v674 = vunpack.c.h.b16 %v46
  %v675 = vunpack.c.l.b16 %v47
  %v676 = vunpack.c.h.b16 %v47
  %v677 = vunpack.c.l.b16 %v48
  %v678 = vunpack.c.l.b16 %v49
  %v679 = vunpack.c.h.b16 %v49
  %v680 = vunpack.c.l.b16 %v50
  %v681 = vunpack.c.h.b16 %v50
  %v682 = vunpack.c.l.b16 %v51
  %v683 = vunpack.c.h.b16 %v51
  %v684 = vunpack.c.l.b16 %v52
  %v685 = vunpack.c.l.b16 %v53
  %v686 = vunpack.c.h.b16 %v53
  %v687 = vunpack.c.l.b16 %v54
  %v688 = vunpack.c.h.b16 %v54
  %v689 = vunpack.c.l.b16 %v55
  %v690 = vunpack.c.h.b16 %v55
  %v691 = vunpack.c.l.b16 %v56
  %v692 = vunpack.c.l.b16 %v57
  %v693 = vunpack.c.h.b16 %v57
  %v694 = vunpack.c.l.b16 %v58
  %v695 = vunpack.c.h.b16 %v58
  %v696 = vunpack.c.l.b16 %v59
  %v697 = vunpack.c.h.b16 %v59
  %v698 = vunpack.c.l.b16 %v60
  %v699 = vunpack.c.l.b16 %v61
  %v700 = vunpack.c.h.b16 %v61
  %v701 = vunpack.c.l.b16 %v62
  %v702 = vunpack.c.h.b16 %v62
  %v703 = vunpack.c.l.b16 %v63
  %v704 = vunpack.c.h.b16 %v63
  %v705 = vunpack.c.l.b16 %v64
  %v706 = vunpack.c.l.b16 %v65
  %v707 = vunpack.c.h.b16 %v65
  %v708 = vunpack.c.l.b16 %v66
  %v709 = vunpack.c.h.b16 %v66
  %v710 = vunpack.c.l.b16 %v67
  %v711 = vunpack.c.h.b16 %v67
  %v712 = vunpack.c.l.b16 %v68
  %v713 = vunpack.c.l.b16 %v69
  %v714 = vunpack.c.h.b16 %v69
  %v715 = vunpack.c.l.b16 %v70
  %v716 = vunpack.c.h.b16 %v70
  %v717 = vunpack.c.l.b16 %v71
  %v718 = vunpack.c.h.b16 %v71
  %v719 = vunpack.c.l.b16 %v72
  %v720 = vunpack.c.l.b16 %v73
  %v721 = vunpack.c.h.b16 %v73
  %v722 = vunpack.c.l.b16 %v74
  %v723 = vunpack.c.h.b16 %v74
  %v724 = vunpack.c.l.b16 %v75
  %v725 = vunpack.c.h.b16 %v75
  %v726 = vunpack.c.l.b16 %v76
  %v727 = vunpack.c.l.b16 %v77
  %v728 = vunpack.c.h.b16 %v77
  %v729 = vunpack.c.l.b16 %v78
  %v730 = vunpack.c.h.b16 %v78
  %v731 = vunpack.c.l.b16 %v79
  %v732 = vunpack.c.h.b16 %v79
  %v733 = vunpack.c.l.b16 %v80
  %v734 = vunpack.c.l.b16 %v81
  %v735 = vunpack.c.h.b16 %v81
  %v736 = vunpack.c.l.b16 %v82
  %v737 = vunpack.c.h.b16 %v82
  %v738 = vunpack.c.l.b16 %v83
  %v739 = vunpack.c.h.b16 %v83
  %v740 = vunpack.c.l.b16 %v84
  %v741 = vunpack.c.l.b16 %v85
  %v742 = vunpack.c.h.b16 %v85
  %v743 = vunpack.c.l.b16 %v86
  %v744 = vunpack.c.h.b16 %v86
  %v745 = vunpack.c.l.b16 %v87
  %v746 = vunpack.c.h.b16 %v87
  %v747 = vunpack.c.l.b16 %v88
  %v748 = vunpack.c.l.b16 %v89
  %v749 = vunpack.c.h.b16 %v89
  %v750 = vunpack.c.l.b16 %v90
  %v751 = vunpack.c.h.b16 %v90
  %v752 = vunpack.c.l.b16 %v91
  %v753 = vunpack.c.h.b16 %v91
  %v754 = vunpack.c.l.b16 %v92
  %v755 = vunpack.c.l.b16 %v93
  %v756 = vunpack.c.h.b16 %v93
  %v757 = vunpack.c.l.b16 %v94
  %v758 = vunpack.c.h.b16 %v94
  %v759 = vunpack.c.l.b16 %v95
  %v760 = vunpack.c.h.b16 %v95
  %v761 = vunpack.c.l.b16 %v96
  %v762 = vunpack.c.l.b16 %v97
  %v763 = vunpack.c.h.b16 %v97
  %v764 = vunpack.c.l.b16 %v98
  %v765 = vunpack.c.h.b16 %v98
  %v766 = vunpack.c.l.b16 %v99
  %v767 = vunpack.c.h.b16 %v99
  %v768 = vunpack.c.l.b16 %v100
  %v769 = vunpack.c.l.b16 %v101
  %v770 = vunpack.c.h.b16 %v101
  %v771 = vunpack.c.l.b16 %v102
  %v772 = vunpack.c.h.b16 %v102
  %v773 = vunpack.c.l.b16 %v103
  %v774 = vunpack.c.h.b16 %v103
  %v775 = vunpack.c.l.b16 %v104
  %v776 = vunpack.c.l.b16 %v105
  %v777 = vunpack.c.h.b16 %v105
  %v778 = vunpack.c.l.b16 %v106
  %v779 = vunpack.c.h.b16 %v106
  %v780 = vunpack.c.l.b16 %v107
  %v781 = vunpack.c.h.b16 %v107
  %v782 = vunpack.c.l.b16 %v108
  %v783 = vunpack.c.l.b16 %v109
  %v784 = vunpack.c.h.b16 %v109
  %v785 = vunpack.c.l.b16 %v110
  %v786 = vunpack.c.h.b16 %v110
  %v787 = vunpack.c.l.b16 %v111
  %v788 = vunpack.c.h.b16 %v111
  %v789 = vunpack.c.l.b16 %v112
  %v790 = vunpack.c.l.b16 %v113
  %v791 = vunpack.c.h.b16 %v113
  %v792 = vunpack.c.l.b16 %v114
  %v793 = vunpack.c.h.b16 %v114
  %v794 = vunpack.c.l.b16 %v115
  %v795 = vunpack.c.h.b16 %v115
  %v796 = vunpack.c.l.b16 %v116
  %v797 = vunpack.c.l.b16 %v117
  %v798 = vunpack.c.h.b16 %v117
  %v799 = vunpack.c.l.b16 %v118
  %v800 = vunpack.c.h.b16 %v118
  %v801 = vunpack.c.l.b16 %v119
  %v802 = vunpack.c.h.b16 %v119
  %v803 = vunpack.c.l.b16 %v120
  %v804 = vunpack.c.l.b16 %v121
  %v805 = vunpack.c.h.b16 %v121
  %v806 = vunpack.c.l.b16 %v122
  %v807 = vunpack.c.h.b16 %v122
  %v808 = vunpack.c.l.b16 %v123
  %v809 = vunpack.c.h.b16 %v123
  %v810 = vunpack.c.l.b16 %v124
  %v811 = vunpack.c.l.b16 %v125
  %v812 = vunpack.c.h.b16 %v125
  %v813 = vunpack.c.l.b16 %v126
  %v814 = vunpack.c.h.b16 %v126
  %v815 = vunpack.c.l.b16 %v127
  %v816 = vunpack.c.h.b16 %v127
  %v817 = vunpack.c.l.b16 %v128
  %v818 = vunpack.c.l.b16 %v129
  %v819 = vunpack.c.h.b16 %v129
  %v820 = vunpack.c.l.b16 %v130
  %v821 = vunpack.c.h.b16 %v130
  %v822 = vunpack.c.l.b16 %v131
  %v823 = vunpack.c.h.b16 %v131
  %v824 = vunpack.c.l.b16 %v132
  %v825 = vunpack.c.l.b16 %v133
  %v826 = vunpack.c.h.b16 %v133
  %v827 = vunpack.c.l.b16 %v134
  %v828 = vunpack.c.h.b16 %v134
  %v829 = vunpack.c.l.b16 %v135
  %v830 = vunpack.c.h.b16 %v135
  %v831 = vunpack.c.l.b16 %v136
  %v832 = vunpack.c.l.b16 %v137
  %v833 = vunpack.c.h.b16 %v137
  %v834 = vunpack.c.l.b16 %v138
  %v835 = vunpack.c.h.b16 %v138
  %v836 = vunpack.c.l.b16 %v139
  %v837 = vunpack.c.h.b16 %v139
  %v838 = vunpack.c.l.b16 %v140
  %v839 = vunpack.c.l.b16 %v141
  %v840 = vunpack.c.h.b16 %v141
  %v841 = vunpack.c.l.b16 %v142
  %v842 = vunpack.c.h.b16 %v142
  %v843 = vunpack.c.l.b16 %v143
  %v844 = vunpack.c.h.b16 %v143
  %v845 = vunpack.c.l.b16 %v144
  %v846 = vunpack.c.l.b16 %v145
  %v847 = vunpack.c.h.b16 %v145
  %v848 = vunpack.c.l.b16 %v146
  %v849 = vunpack.c.h.b16 %v146
  %v850 = vunpack.c.l.b16 %v147
  %v851 = vunpack.c.h.b16 %v147
  %v852 = vunpack.c.l.b16 %v148
  %v853 = vunpack.c.l.b16 %v149
  %v854 = vunpack.c.h.b16 %v149
  %v855 = vunpack.c.l.b16 %v150
  %v856 = vunpack.c.h.b16 %v150
  %v857 = vunpack.c.l.b16 %v151
  %v858 = vunpack.c.h.b16 %v151
  %v859 = vunpack.c.l.b16 %v152
  %v860 = vunpack.c.l.b16 %v153
  %v861 = vunpack.c.h.b16 %v153
  %v862 = vunpack.c.l.b16 %v154
  %v863 = vunpack.c.h.b16 %v154
  %v864 = vunpack.c.l.b16 %v155
  %v865 = vunpack.c.h.b16 %v155
  %v866 = vunpack.c.l.b16 %v156
  %v867 = vunpack.c.l.b16 %v157
  %v868 = vunpack.c.h.b16 %v157
  %v869 = vunpack.c.l.b16 %v158
  %v870 = vunpack.c.h.b16 %v158
  %v871 = vunpack.c.l.b16 %v159
  %v872 = vunpack.c.h.b16 %v159
  %v873 = vunpack.c.l.b16 %v160
  %v874 = vunpack.c.l.b16 %v161
  %v875 = vunpack.c.h.b16 %v161
  %v876 = vunpack.c.l.b16 %v162
  %v877 = vunpack.c.h.b16 %v162
  %v878 = vunpack.c.l.b16 %v163
  %v879 = vunpack.c.h.b16 %v163
  %v880 = vunpack.c.l.b16 %v164
  %v881 = vunpack.c.l.b16 %v165
  %v882 = vunpack.c.h.b16 %v165
  %v883 = vunpack.c.l.b16 %v166
  %v884 = vunpack.c.h.b16 %v166
  %v885 = vunpack.c.l.b16 %v167
  %v886 = vunpack.c.h.b16 %v167
  %v887 = vunpack.c.l.b16 %v168
  %v888 = vunpack.c.l.b16 %v169
  %v889 = vunpack.c.h.b16 %v169
  %v890 = vunpack.c.l.b16 %v170
  %v891 = vunpack.c.h.b16 %v170
  %v892 = vunpack.c.l.b16 %v171
  %v893 = vunpack.c.h.b16 %v171
  %v894 = vunpack.c.l.b16 %v172
  %v895 = vunpack.c.l.b16 %v173
  %v896 = vunpack.c.h.b16 %v173
  %v897 = vunpack.c.l.b16 %v174
  %v898 = vunpack.c.h.b16 %v174
  %v899 = vunpack.c.l.b16 %v175
  %v900 = vunpack.c.h.b16 %v175
  %v901 = vunpack.c.l.b16 %v176
  %v902 = vunpack.c.l.b16 %v177
  %v903 = vunpack.c.h.b16 %v177
  %v904 = vunpack.c.l.b16 %v178
  %v905 = vunpack.c.h.b16 %v178
  %v906 = vunpack.c.l.b16 %v179
  %v907 = vunpack.c.h.b16 %v179
  %v908 = vunpack.c.l.b16 %v180
  %v909 = vunpack.c.l.b16 %v181
  %v910 = vunpack.c.h.b16 %v181
  %v911 = vunpack.c.l.b16 %v182
  %v912 = vunpack.c.h.b16 %v182
  %v913 = vunpack.c.l.b16 %v183
  %v914 = vunpack.c.h.b16 %v183
  %v915 = vunpack.c.l.b16 %v184
  %v916 = vunpack.c.l.b16 %v185
  %v917 = vunpack.c.h.b16 %v185
  %v918 = vunpack.c.l.b16 %v186
  %v919 = vunpack.c.h.b16 %v186
  %v920 = vunpack.c.l.b16 %v187
  %v921 = vunpack.c.h.b16 %v187
  %v922 = vunpack.c.l.b16 %v188
  %v923 = vunpack.c.l.b16 %v189
  %v924 = vunpack.c.h.b16 %v189
  %v925 = vunpack.c.l.b16 %v190
  %v926 = vunpack.c.h.b16 %v190
  %v927 = vunpack.c.l.b16 %v191
  %v928 = vunpack.c.h.b16 %v191
  %v929 = vunpack.c.l.b16 %v192
  %v930 = vunpack.c.l.b16 %v193
  %v931 = vunpack.c.h.b16 %v193
  %v932 = vunpack.c.l.b16 %v194
  %v933 = vunpack.c.h.b16 %v194
  %v934 = vunpack.c.l.b16 %v195
  %v935 = vunpack.c.h.b16 %v195
  %v936 = vunpack.c.l.b16 %v196
  %v937 = vunpack.c.l.b16 %v197
  %v938 = vunpack.c.h.b16 %v197
  %v939 = vunpack.c.l.b16 %v198
  %v940 = vunpack.c.h.b16 %v198
  %v941 = vunpack.c.l.b16 %v199
  %v942 = vunpack.c.h.b16 %v199
  %v943 = vunpack.c.l.b16 %v200
  %v944 = vunpack.c.l.b16 %v201
  %v945 = vunpack.c.h.b16 %v201
  %v946 = vunpack.c.l.b16 %v202
  %v947 = vunpack.c.h.b16 %v202
  %v948 = vunpack.c.l.b16 %v203
  %v949 = vunpack.c.h.b16 %v203
  %v950 = vunpack.c.l.b16 %v204
  %v951 = vunpack.c.l.b16 %v205
  %v952 = vunpack.c.h.b16 %v205
  %v953 = vunpack.c.l.b16 %v206
  %v954 = vunpack.c.h.b16 %v206
  %v955 = vunpack.c.l.b16 %v207
  %v956 = vunpack.c.h.b16 %v207
  %v957 = vunpack.c.l.b16 %v208
  %v958 = vunpack.c.l.b16 %v209
  %v959 = vunpack.c.h.b16 %v209
  %v960 = vunpack.c.l.b16 %v210
  %v961 = vunpack.c.h.b16 %v210
  %v962 = vunpack.c.l.b16 %v211
  %v963 = vunpack.c.h.b16 %v211
  %v964 = vunpack.c.l.b16 %v212
  %v965 = vunpack.c.l.b16 %v213
  %v966 = vunpack.c.h.b16 %v213
  %v967 = vunpack.c.l.b16 %v214
  %v968 = vunpack.c.h.b16 %v214
  %v969 = vunpack.c.l.b16 %v215
  %v970 = vunpack.c.h.b16 %v215
  %v971 = vunpack.c.l.b16 %v216
  %v972 = vunpack.c.l.b16 %v217
  %v973 = vunpack.c.h.b16 %v217
  %v974 = vunpack.c.l.b16 %v218
  %v975 = vunpack.c.h.b16 %v218
  %v976 = vunpack.c.l.b16 %v219
  %v977 = vunpack.c.h.b16 %v219
  %v978 = vunpack.c.l.b16 %v220
  %v979 = vunpack.c.l.b16 %v221
  %v980 = vunpack.c.h.b16 %v221
  %v981 = vunpack.c.l.b16 %v222
  %v982 = vunpack.c.h.b16 %v222
  %v983 = vunpack.c.l.b16 %v223
  %v984 = vunpack.c.h.b16 %v223
  %v985 = vunpack.c.l.b16 %v224
  %v986 = vunpack.c.l.b16 %v225
  %v987 = vunpack.c.h.b16 %v225
  %v988 = vunpack.c.l.b16 %v226
  %v989 = vunpack.c.h.b16 %v226
  %v990 = vunpack.c.l.b16 %v227
  %v991 = vunpack.c.h.b16 %v227
  %v992 = vunpack.c.l.b16 %v228
  %v993 = vunpack.c.l.b16 %v229
  %v994 = vunpack.c.h.b16 %v229
  %v995 = vunpack.c.l.b16 %v230
  %v996 = vunpack.c.h.b16 %v230
  %v997 = vunpack.c.l.b16 %v231
  %v998 = vunpack.c.h.b16 %v231
  %v999 = vunpack.c.l.b16 %v232
  %v1000 = vunpack.c.l.b16 %v233
  %v1001 = vunpack.c.h.b16 %v233
  %v1002 = vunpack.c.l.b16 %v234
  %v1003 = vunpack.c.h.b16 %v234
  %v1004 = vunpack.c.l.b16 %v235
  %v1005 = vunpack.c.h.b16 %v235
  %v1006 = vunpack.c.l.b16 %v236
  %v1007 = vunpack.c.l.b16 %v237
  %v1008 = vunpack.c.h.b16 %v237
  %v1009 = vunpack.c.l.b16 %v238
  %v1010 = vunpack.c.h.b16 %v238
  %v1011 = vunpack.c.l.b16 %v239
  %v1012 = vunpack.c.h.b16 %v239
  %v1013 = vunpack.c.l.b16 %v240
  %v1014 = vunpack.c.l.b16 %v241
  %v1015 = vunpack.c.h.b16 %v241
  %v1016 = vunpack.c.l.b16 %v242
  %v1017 = vunpack.c.h.b16 %v242
  %v1018 = vunpack.c.l.b16 %v243
  %v1019 = vunpack.c.h.b16 %v243
  %v1020 = vunpack.c.l.b16 %v244
  %v1021 = vunpack.c.l.b16 %v245
  %v1022 = vunpack.c.h.b16 %v245
  %v1023 = vunpack.c.l.b16 %v246
  %v1024 = vunpack.c.h.b16 %v246
  %v1025 = vunpack.c.l.b16 %v247
  %v1026 = vunpack.c.h.b16 %v247
  %v1027 = vunpack.c.l.b16 %v248
  %v1028 = vunpack.c.l.b16 %v249
  %v1029 = vunpack.c.h.b16 %v249
  %v1030 = vunpack.c.l.b16 %v250
  %v1031 = vunpack.c.h.b16 %v250
  %v1032 = vunpack.c.l.b16 %v251
  %v1033 = vunpack.c.h.b16 %v251
  %v1034 = vunpack.c.l.b16 %v252
  %v1035 = vunpack.c.l.b16 %v253
  %v1036 = vunpack.c.h.b16 %v253
  %v1037 = vunpack.c.l.b16 %v254
  %v1038 = vunpack.c.h.b16 %v254
  %v1039 = vunpack.c.l.b16 %v255
  %v1040 = vunpack.c.h.b16 %v255
  %v1041 = vunpack.c.l.b16 %v256
  %v1042 = vunpack.c.l.b16 %v257
  %v1043 = vunpack.c.h.b16 %v257
  %v1044 = vunpack.c.l.b16 %v258
  %v1045 = vunpack.c.h.b16 %v258
  %v1046 = vunpack.c.l.b16 %v259
  %v1047 = vunpack.c.h.b16 %v259
  %v1048 = vunpack.c.l.b16 %v260
  %v1049 = vunpack.c.l.b16 %v261
  %v1050 = vunpack.c.h.b16 %v261
  %v1051 = vunpack.c.l.b16 %v262
  %v1052 = vunpack.c.h.b16 %v262
  %v1053 = vunpack.c.l.b16 %v263
  %v1054 = vunpack.c.h.b16 %v263
  %v1055 = vunpack.c.l.b16 %v264
  %v1056 = vunpack.c.l.b16 %v265
  %v1057 = vunpack.c.h.b16 %v265
  %v1058 = vunpack.c.l.b16 %v266
  %v1059 = vunpack.c.h.b16 %v266
  %v1060 = vunpack.c.l.b16 %v267
  %v1061 = vunpack.c.h.b16 %v267
  %v1062 = vunpack.c.l.b16 %v268
  %v1063 = vunpack.c.l.b16 %v269
  %v1064 = vunpack.c.h.b16 %v269
  %v1065 = vunpack.c.l.b16 %v270
  %v1066 = vunpack.c.h.b16 %v270
  %v1067 = vunpack.c.l.b16 %v271
  %v1068 = vunpack.c.h.b16 %v271
  %v1069 = vunpack.c.l.b16 %v272
  %v1070 = vunpack.c.l.b16 %v273
  %v1071 = vunpack.c.h.b16 %v273
  %v1072 = vunpack.c.l.b16 %v274
  %v1073 = vunpack.c.h.b16 %v274
  %v1074 = vunpack.c.l.b16 %v275
  %v1075 = vunpack.c.h.b16 %v275
  %v1076 = vunpack.c.l.b16 %v276
  %v1077 = vunpack.c.l.b16 %v277
  %v1078 = vunpack.c.h.b16 %v277
  %v1079 = vunpack.c.l.b16 %v278
  %v1080 = vunpack.c.h.b16 %v278
  %v1081 = vunpack.c.l.b16 %v279
  %v1082 = vunpack.c.h.b16 %v279
  %v1083 = vunpack.c.l.b16 %v280
  %v1084 = vunpack.c.l.b16 %v281
  %v1085 = vunpack.c.h.b16 %v281
  %v1086 = vunpack.c.l.b16 %v282
  %v1087 = vunpack.c.h.b16 %v282
  %v1088 = vunpack.c.l.b16 %v283
  %v1089 = vunpack.c.h.b16 %v283
  %v1090 = vunpack.c.l.b16 %v284
  %v1091 = vunpack.c.l.b16 %v285
  %v1092 = vunpack.c.h.b16 %v285
  %v1093 = vunpack.c.l.b16 %v286
  %v1094 = vunpack.c.h.b16 %v286
  %v1095 = vunpack.c.l.b16 %v287
  %v1096 = vunpack.c.h.b16 %v287
  %v1097 = vunpack.c.l.b16 %v288
  %v1098 = vpack.c.b16 %v657, %v650
  %v1099 = vpack.c.b16 %v658, %v651
  %v1100 = vpack.c.b16 %v659, %v652
  %v1101 = vpack.c.b16 %v660, %v653
  %v1102 = vpack.c.b16 %v661, %v654
  %v1103 = vpack.c.b16 %v662, %v655
  %v1104 = vpack.c.b16 %v663, %v656
  %v1105 = vpack.c.b16 %v671, %v664
  %v1106 = vpack.c.b16 %v672, %v665
  %v1107 = vpack.c.b16 %v673, %v666
  %v1108 = vpack.c.b16 %v674, %v667
  %v1109 = vpack.c.b16 %v675, %v668
  %v1110 = vpack.c.b16 %v676, %v669
  %v1111 = vpack.c.b16 %v677, %v670
  %v1112 = vpack.c.b16 %v685, %v678
  %v1113 = vpack.c.b16 %v686, %v679
  %v1114 = vpack.c.b16 %v687, %v680
  %v1115 = vpack.c.b16 %v688, %v681
  %v1116 = vpack.c.b16 %v689, %v682
  %v1117 = vpack.c.b16 %v690, %v683
  %v1118 = vpack.c.b16 %v691, %v684
  %v1119 = vpack.c.b16 %v699, %v692
  %v1120 = vpack.c.b16 %v700, %v693
  %v1121 = vpack.c.b16 %v701, %v694
  %v1122 = vpack.c.b16 %v702, %v695
  %v1123 = vpack.c.b16 %v703, %v696
  %v1124 = vpack.c.b16 %v704, %v697
  %v1125 = vpack.c.b16 %v705, %v698
  %v1126 = vpack.c.b16 %v713, %v706
  %v1127 = vpack.c.b16 %v714, %v707
  %v1128 = vpack.c.b16 %v715, %v708
  %v1129 = vpack.c.b16 %v716, %v709
  %v1130 = vpack.c.b16 %v717, %v710
  %v1131 = vpack.c.b16 %v718, %v711
  %v1132 = vpack.c.b16 %v719, %v712
  %v1133 = vpack.c.b16 %v727, %v720
  %v1134 = vpack.c.b16 %v728, %v721
  %v1135 = vpack.c.b16 %v729, %v722
  %v1136 = vpack.c.b16 %v730, %v723
  %v1137 = vpack.c.b16 %v731, %v724
  %v1138 = vpack.c.b16 %v732, %v725
  %v1139 = vpack.c.b16 %v733, %v726
  %v1140 = vpack.c.b16 %v741, %v734
  %v1141 = vpack.c.b16 %v742, %v735
  %v1142 = vpack.c.b16 %v743, %v736
  %v1143 = vpack.c.b16 %v744, %v737
  %v1144 = vpack.c.b16 %v745, %v738
  %v1145 = vpack.c.b16 %v746, %v739
  %v1146 = vpack.c.b16 %v747, %v740
  %v1147 = vpack.c.b16 %v755, %v748
  %v1148 = vpack.c.b16 %v756, %v749
  %v1149 = vpack.c.b16 %v757, %v750
  %v1150 = vpack.c.b16 %v758, %v751
  %v1151 = vpack.c.b16 %v759, %v752
  %v1152 = vpack.c.b16 %v760, %v753
  %v1153 = vpack.c.b16 %v761, %v754
  %v1154 = vpack.c.b16 %v769, %v762
  %v1155 = vpack.c.b16 %v770, %v763
  %v1156 = vpack.c.b16 %v771, %v764
  %v1157 = vpack.c.b16 %v772, %v765
  %v1158 = vpack.c.b16 %v773, %v766
  %v1159 = vpack.c.b16 %v774, %v767
  %v1160 = vpack.c.b16 %v775, %v768
  %v1161 = vpack.c.b16 %v783, %v776
  %v1162 = vpack.c.b16 %v784, %v777
  %v1163 = vpack.c.b16 %v785, %v778
  %v1164 = vpack.c.b16 %v786, %v779
  %v1165 = vpack.c.b16 %v787, %v780
  %v1166 = vpack.c.b16 %v788, %v781
  %v1167 = vpack.c.b16 %v789, %v782
  %v1168 = vpack.c.b16 %v797, %v790
  %v1169 = vpack.c.b16 %v798, %v791
  %v1170 = vpack.c.b16 %v799, %v792
  %v1171 = vpack.c.b16 %v800, %v793
  %v1172 = vpack.c.b16 %v801, %v794
  %v1173 = vpack.c.b16 %v802, %v795
  %v1174 = vpack.c.b16 %v803, %v796
  %v1175 = vpack.c.b16 %v811, %v804
  %v1176 = vpack.c.b16 %v812, %v805
  %v1177 = vpack.c.b16 %v813, %v806
  %v1178 = vpack.c.b16 %v814, %v807
  %v1179 = vpack.c.b16 %v815, %v808
  %v1180 = vpack.c.b16 %v816, %v809
  %v1181 = vpack.c.b16 %v817, %v810
  %v1182 = vpack.c.b16 %v825, %v818
  %v1183 = vpack.c.b16 %v826, %v819
  %v1184 = vpack.c.b16 %v827, %v820
  %v1185 = vpack.c.b16 %v828, %v821
  %v1186 = vpack.c.b16 %v829, %v822
  %v1187 = vpack.c.b16 %v830, %v823
  %v1188 = vpack.c.b16 %v831, %v824
  %v1189 = vpack.c.b16 %v839, %v832
  %v1190 = vpack.c.b16 %v840, %v833
  %v1191 = vpack.c.b16 %v841, %v834
  %v1192 = vpack.c.b16 %v842, %v835
  %v1193 = vpack.c.b16 %v843, %v836
  %v1194 = vpack.c.b16 %v844, %v837
  %v1195 = vpack.c.b16 %v845, %v838
  %v1196 = vpack.c.b16 %v853, %v846
  %v1197 = vpack.c.b16 %v854, %v847
  %v1198 = vpack.c.b16 %v855, %v848
  %v1199 = vpack.c.b16 %v856, %v849
  %v1200 = vpack.c.b16 %v857, %v850
  %v1201 = vpack.c.b16 %v858, %v851
  %v1202 = vpack.c.b16 %v859, %v852
  %v1203 = vpack.c.b16 %v867, %v860
  %v1204 = vpack.c.b16 %v868, %v861
  %v1205 = vpack.c.b16 %v869, %v862
  %v1206 = vpack.c.b16 %v870, %v863
  %v1207 = vpack.c.b16 %v871, %v864
  %v1208 = vpack.c.b16 %v872, %v865
  %v1209 = vpack.c.b16 %v873, %v866
  %v1210 = vpack.c.b16 %v881, %v874
  %v1211 = vpack.c.b16 %v882, %v875
  %v1212 = vpack.c.b16 %v883, %v876
  %v1213 = vpack.c.b16 %v884, %v877
  %v1214 = vpack.c.b16 %v885, %v878
  %v1215 = vpack.c.b16 %v886, %v879
  %v1216 = vpack.c.b16 %v887, %v880
  %v1217 = vpack.c.b16 %v895, %v888
  %v1218 = vpack.c.b16 %v896, %v889
  %v1219 = vpack.c.b16 %v897, %v890
  %v1220 = vpack.c.b16 %v898, %v891
  %v1221 = vpack.c.b16 %v899, %v892
  %v1222 = vpack.c.b16 %v900, %v893
  %v1223 = vpack.c.b16 %v901, %v894
  %v1224 = vpack.c.b16 %v909, %v902
  %v1225 = vpack.c.b16 %v910, %v903
  %v1226 = vpack.c.b16 %v911, %v904
  %v1227 = vpack.c.b16 %v912, %v905
  %v1228 = vpack.c.b16 %v913, %v906
  %v1229 = vpack.c.b16 %v914, %v907
  %v1230 = vpack.c.b16 %v915, %v908
  %v1231 = vpack.c.b16 %v923, %v916
  %v1232 = vpack.c.b16 %v924, %v917
  %v1233 = vpack.c.b16 %v925, %v918
  %v1234 = vpack.c.b16 %v926, %v919
  %v1235 = vpack.c.b16 %v927, %v920
  %v1236 = vpack.c.b16 %v928, %v921
  %v1237 = vpack.c.b16 %v929, %v922
  %v1238 = vpack.c.b16 %v937, %v930
  %v1239 = vpack.c.b16 %v938, %v931
  %v1240 = vpack.c.b16 %v939, %v932
  %v1241 = vpack.c.b16 %v940, %v933
  %v1242 = vpack.c.b16 %v941, %v934
  %v1243 = vpack.c.b16 %v942, %v935
  %v1244 = vpack.c.b16 %v943, %v936
  %v1245 = vpack.c.b16 %v951, %v944
  %v1246 = vpack.c.b16 %v952, %v945
  %v1247 = vpack.c.b16 %v953, %v946
  %v1248 = vpack.c.b16 %v954, %v947
  %v1249 = vpack.c.b16 %v955, %v948
  %v1250 = vpack.c.b16 %v956, %v949
  %v1251 = vpack.c.b16 %v957, %v950
  %v1252 = vpack.c.b16 %v965, %v958
  %v1253 = vpack.c.b16 %v966, %v959
  %v1254 = vpack.c.b16 %v967, %v960
  %v1255 = vpack.c.b16 %v968, %v961
  %v1256 = vpack.c.b16 %v969, %v962
  %v1257 = vpack.c.b16 %v970, %v963
  %v1258 = vpack.c.b16 %v971, %v964
  %v1259 = vpack.c.b16 %v979, %v972
  %v1260 = vpack.c.b16 %v980, %v973
  %v1261 = vpack.c.b16 %v981, %v974
  %v1262 = vpack.c.b16 %v982, %v975
  %v1263 = vpack.c.b16 %v983, %v976
  %v1264 = vpack.c.b16 %v984, %v977
  %v1265 = vpack.c.b16 %v985, %v978
  %v1266 = vpack.c.b16 %v993, %v986
  %v1267 = vpack.c.b16 %v994, %v987
  %v1268 = vpack.c.b16 %v995, %v988
  %v1269 = vpack.c.b16 %v996, %v989
  %v1270 = vpack.c.b16 %v997, %v990
  %v1271 = vpack.c.b16 %v998, %v991
  %v1272 = vpack.c.b16 %v999, %v992
  %v1273 = vpack.c.b16 %v1007, %v1000
  %v1274 = vpack.c.b16 %v1008, %v1001
  %v1275 = vpack.c.b16 %v1009, %v1002
  %v1276 = vpack.c.b16 %v1010, %v1003
  %v1277 = vpack.c.b16 %v1011, %v1004
  %v1278 = vpack.c.b16 %v1012, %v1005
  %v1279 = vpack.c.b16 %v1013, %v1006
  %v1280 = vpack.c.b16 %v1021, %v1014
  %v1281 = vpack.c.b16 %v1022, %v1015
  %v1282 = vpack.c.b16 %v1023, %v1016
  %v1283 = vpack.c.b16 %v1024, %v1017
  %v1284 = vpack.c.b16 %v1025, %v1018
  %v1285 = vpack.c.b16 %v1026, %v1019
  %v1286 = vpack.c.b16 %v1027, %v1020
  %v1287 = vpack.c.b16 %v1035, %v1028
  %v1288 = vpack.c.b16 %v1036, %v1029
  %v1289 = vpack.c.b16 %v1037, %v1030
  %v1290 = vpack.c.b16 %v1038, %v1031
  %v1291 = vpack.c.b16 %v1039, %v1032
  %v1292 = vpack.c.b16 %v1040, %v1033
  %v1293 = vpack.c.b16 %v1041, %v1034
  %v1294 = vpack.c.b16 %v1049, %v1042
  %v1295 = vpack.c.b16 %v1050, %v1043
  %v1296 = vpack.c.b16 %v1051, %v1044
  %v1297 = vpack.c.b16 %v1052, %v1045
  %v1298 = vpack.c.b16 %v1053, %v1046
  %v1299 = vpack.c.b16 %v1054, %v1047
  %v1300 = vpack.c.b16 %v1055, %v1048
  %v1301 = vpack.c.b16 %v1063, %v1056
  %v1302 = vpack.c.b16 %v1064, %v1057
  %v1303 = vpack.c.b16 %v1065, %v1058
  %v1304 = vpack.c.b16 %v1066, %v1059
  %v1305 = vpack.c.b16 %v1067, %v1060
  %v1306 = vpack.c.b16 %v1068, %v1061
  %v1307 = vpack.c.b16 %v1069, %v1062
  %v1308 = vpack.c.b16 %v1077, %v1070
  %v1309 = vpack.c.b16 %v1078, %v1071
  %v1310 = vpack.c.b16 %v1079, %v1072
  %v1311 = vpack.c.b16 %v1080, %v1073
  %v1312 = vpack.c.b16 %v1081, %v1074
  %v1313 = vpack.c.b16 %v1082, %v1075
  %v1314 = vpack.c.b16 %v1083, %v1076
  %v1315 = vpack.c.b16 %v1091, %v1084
  %v1316 = vpack.c.b16 %v1092, %v1085
  %v1317 = vpack.c.b16 %v1093, %v1086
  %v1318 = vpack.c.b16 %v1094, %v1087
  %v1319 = vpack.c.b16 %v1095, %v1088
  %v1320 = vpack.c.b16 %v1096, %v1089
  %v1321 = vpack.c.b16 %v1097, %v1090
  %v1612 = vunpack.c.l.b16 %v289
  %v1613 = vunpack.c.l.b16 %v290
  %v1614 = vunpack.c.l.b16 %v291
  %v1615 = vunpack.c.l.b16 %v292
  %v1616 = vunpack.c.l.b16 %v293
  %v1617 = vunpack.c.l.b16 %v294
  %v1618 = vunpack.c.l.b16 %v295
  %v1619 = vunpack.c.l.b16 %v296
  %v1620 = vunpack.c.l.b16 %v297
  %v1621 = vunpack.c.l.b16 %v298
  %v1622 = vunpack.c.l.b16 %v299
  %v1623 = vunpack.c.l.b16 %v300
  %v1624 = vunpack.c.l.b16 %v301
  %v1625 = vunpack.c.l.b16 %v302
  %v1626 = vunpack.c.l.b16 %v303
  %v1627 = vunpack.c.l.b16 %v304
  %v1628 = vunpack.c.l.b16 %v305
  %v1629 = vunpack.c.l.b16 %v306
  %v1630 = vunpack.c.l.b16 %v307
  %v1631 = vunpack.c.l.b16 %v308
  %v1632 = vunpack.c.l.b16 %v309
  %v1633 = vunpack.c.l.b16 %v310
  %v1634 = vunpack.c.l.b16 %v311
  %v1635 = vunpack.c.l.b16 %v312
  %v1636 = vunpack.c.l.b16 %v313
  %v1637 = vunpack.c.l.b16 %v314
  %v1638 = vunpack.c.l.b16 %v315
  %v1639 = vunpack.c.l.b16 %v316
  %v1640 = vunpack.c.l.b16 %v317
  %v1641 = vunpack.c.l.b16 %v318
  %v1642 = vunpack.c.l.b16 %v319
  %v1643 = vunpack.c.l.b16 %v320
  %v1644 = vunpack.c.l.b16 %v321
  %v1645 = vunpack.c.l.b16 %v322
  %v1646 = vunpack.c.l.b16 %v323
  %v1647 = vunpack.c.l.b16 %v324
  %v1648 = vunpack.c.l.b16 %v325
  %v1649 = vunpack.c.l.b16 %v326
  %v1650 = vunpack.c.l.b16 %v327
  %v1651 = vunpack.c.l.b16 %v328
  %v1652 = vunpack.c.l.b16 %v329
  %v1653 = vunpack.c.l.b16 %v330
  %v1654 = vunpack.c.l.b16 %v331
  %v1655 = vunpack.c.l.b16 %v332
  %v1656 = vunpack.c.l.b16 %v333
  %v1657 = vunpack.c.l.b16 %v334
  %v1658 = vunpack.c.l.b16 %v335
  %v1659 = vunpack.c.l.b16 %v336
  %v1660 = vunpack.c.l.b16 %v337
  %v1661 = vunpack.c.l.b16 %v338
  %v1662 = vunpack.c.l.b16 %v339
  %v1663 = vunpack.c.l.b16 %v340
  %v1664 = vunpack.c.l.b16 %v341
  %v1665 = vunpack.c.l.b16 %v342
  %v1666 = vunpack.c.l.b16 %v343
  %v1667 = vunpack.c.l.b16 %v344
  %v1668 = vunpack.c.l.b16 %v345
  %v1669 = vunpack.c.l.b16 %v346
  %v1670 = vunpack.c.l.b16 %v347
  %v1671 = vunpack.c.l.b16 %v348
  %v1672 = vunpack.c.l.b16 %v349
  %v1673 = vunpack.c.l.b16 %v350
  %v1674 = vunpack.c.l.b16 %v351
  %v1675 = vunpack.c.l.b16 %v352
  %v1676 = vunpack.c.l.b16 %v353
  %v1677 = vunpack.c.l.b16 %v354
  %v1678 = vunpack.c.l.b16 %v355
  %v1679 = vunpack.c.l.b16 %v356
  %v1680 = vunpack.c.l.b16 %v357
  %v1681 = vunpack.c.l.b16 %v358
  %v1682 = vunpack.c.l.b16 %v359
  %v1683 = vunpack.c.l.b16 %v360
  %v1684 = vunpack.c.l.b16 %v361
  %v1685 = vunpack.c.l.b16 %v362
  %v1686 = vunpack.c.l.b16 %v363
  %v1687 = vunpack.c.l.b16 %v364
  %v1688 = vunpack.c.l.b16 %v365
  %v1689 = vunpack.c.l.b16 %v366
  %v1690 = vunpack.c.l.b16 %v367
  %v1691 = vunpack.c.l.b16 %v368
  %v1692 = vunpack.c.l.b16 %v369
  %v1693 = vunpack.c.l.b16 %v370
  %v1694 = vunpack.c.l.b16 %v371
  %v1695 = vunpack.c.l.b16 %v372
  %v1696 = vunpack.c.l.b16 %v373
  %v1697 = vunpack.c.l.b16 %v374
  %v1698 = vunpack.c.l.b16 %v375
  %v1699 = vunpack.c.l.b16 %v376
  %v1700 = vunpack.c.l.b16 %v377
  %v1701 = vunpack.c.l.b16 %v378
  %v1702 = vunpack.c.l.b16 %v379
  %v1703 = vunpack.c.l.b16 %v380
  %v1704 = vunpack.c.l.b16 %v381
  %v1705 = vunpack.c.l.b16 %v382
  %v1706 = vunpack.c.l.b16 %v383
  %v1707 = vunpack.c.l.b16 %v384
  %v1708 = vunpack.c.l.b16 %v385
  %v1709 = vunpack.c.l.b16 %v386
  %v1710 = vpack.c.b16 %v1613, %v1612
  %v1711 = vpack.c.b16 %v1615, %v1614
  %v1712 = vpack.c.b16 %v1617, %v1616
  %v1713 = vpack.c.b16 %v1619, %v1618
  %v1714 = vpack.c.b16 %v1621, %v1620
  %v1715 = vpack.c.b16 %v1623, %v1622
  %v1716 = vpack.c.b16 %v1625, %v1624
  %v1717 = vpack.c.b16 %v1627, %v1626
  %v1718 = vpack.c.b16 %v1629, %v1628
  %v1719 = vpack.c.b16 %v1631, %v1630
  %v1720 = vpack.c.b16 %v1633, %v1632
  %v1721 = vpack.c.b16 %v1635, %v1634
  %v1722 = vpack.c.b16 %v1637, %v1636
  %v1723 = vpack.c.b16 %v1639, %v1638
  %v1724 = vpack.c.b16 %v1641, %v1640
  %v1725 = vpack.c.b16 %v1643, %v1642
  %v1726 = vpack.c.b16 %v1645, %v1644
  %v1727 = vpack.c.b16 %v1647, %v1646
  %v1728 = vpack.c.b16 %v1649, %v1648
  %v1729 = vpack.c.b16 %v1651, %v1650
  %v1730 = vpack.c.b16 %v1653, %v1652
  %v1731 = vpack.c.b16 %v1655, %v1654
  %v1732 = vpack.c.b16 %v1657, %v1656
  %v1733 = vpack.c.b16 %v1659, %v1658
  %v1734 = vpack.c.b16 %v1661, %v1660
  %v1735 = vpack.c.b16 %v1663, %v1662
  %v1736 = vpack.c.b16 %v1665, %v1664
  %v1737 = vpack.c.b16 %v1667, %v1666
  %v1738 = vpack.c.b16 %v1669, %v1668
  %v1739 = vpack.c.b16 %v1671, %v1670
  %v1740 = vpack.c.b16 %v1673, %v1672
  %v1741 = vpack.c.b16 %v1675, %v1674
  %v1742 = vpack.c.b16 %v1677, %v1676
  %v1743 = vpack.c.b16 %v1679, %v1678
  %v1744 = vpack.c.b16 %v1681, %v1680
  %v1745 = vpack.c.b16 %v1683, %v1682
  %v1746 = vpack.c.b16 %v1685, %v1684
  %v1747 = vpack.c.b16 %v1687, %v1686
  %v1748 = vpack.c.b16 %v1689, %v1688
  %v1749 = vpack.c.b16 %v1691, %v1690
  %v1750 = vpack.c.b16 %v1693, %v1692
  %v1751 = vpack.c.b16 %v1695, %v1694
  %v1752 = vpack.c.b16 %v1697, %v1696
  %v1753 = vpack.c.b16 %v1699, %v1698
  %v1754 = vpack.c.b16 %v1701, %v1700
  %v1755 = vpack.c.b16 %v1703, %v1702
  %v1756 = vpack.c.b16 %v1705, %v1704
  %v1757 = vpack.c.b16 %v1707, %v1706
  %v1758 = vpack.c.b16 %v1709, %v1708
  %vm1808 = vcmask 130048
  %v1810 = vsel %vm1808, %v1104, 0
  %v1813 = vsel %vm1808, %v1111, 0
  %v1816 = vsel %vm1808, %v1118, 0
  %v1819 = vsel %vm1808, %v1125, 0
  %v1822 = vsel %vm1808, %v1132, 0
  %v1825 = vsel %vm1808, %v1139, 0
  %v1828 = vsel %vm1808, %v1146, 0
  %v1831 = vsel %vm1808, %v1153, 0
  %v1834 = vsel %vm1808, %v1160, 0
  %v1837 = vsel %vm1808, %v1167, 0
  %v1840 = vsel %vm1808, %v1174, 0
  %v1843 = vsel %vm1808, %v1181, 0
  %v1846 = vsel %vm1808, %v1188, 0
  %v1849 = vsel %vm1808, %v1195, 0
  %v1852 = vsel %vm1808, %v1202, 0
  %v1855 = vsel %vm1808, %v1209, 0
  %v1858 = vsel %vm1808, %v1216, 0
  %v1861 = vsel %vm1808, %v1223, 0
  %v1864 = vsel %vm1808, %v1230, 0
  %v1867 = vsel %vm1808, %v1237, 0
  %v1870 = vsel %vm1808, %v1244, 0
  %v1873 = vsel %vm1808, %v1251, 0
  %v1876 = vsel %vm1808, %v1258, 0
  %v1879 = vsel %vm1808, %v1265, 0
  %v1882 = vsel %vm1808, %v1272, 0
  %v1885 = vsel %vm1808, %v1279, 0
  %v1888 = vsel %vm1808, %v1286, 0
  %v1891 = vsel %vm1808, %v1293, 0
  %v1894 = vsel %vm1808, %v1300, 0
  %v1897 = vsel %vm1808, %v1307, 0
  %v1900 = vsel %vm1808, %v1314, 0
  %v1903 = vsel %vm1808, %v1321, 0
  %1905 = vmatprep.subr.bf16.mxu0 0
  %1906 = vmatpush1.bf16.msra.mxu0 %v1710
  %1907 = vmatprep.subr.bf16.mxu0 0
  %1908 = vmatpush1.bf16.msra.mxu0 %v1711
  %1909 = vmatprep.subr.bf16.mxu0 0
  %1910 = vmatpush1.bf16.msra.mxu0 %v1712
  %1911 = vmatprep.subr.bf16.mxu0 0
  %1912 = vmatpush1.bf16.msra.mxu0 %v1713
  %1913 = vmatprep.subr.bf16.mxu0 0
  %1914 = vmatpush1.bf16.msra.mxu0 %v1714
  %1915 = vmatprep.subr.bf16.mxu0 0
  %1916 = vmatpush1.bf16.msra.mxu0 %v1715
  %1917 = vmatprep.subr.bf16.mxu0 0
  %1918 = vmatpush1.bf16.msra.mxu0 %v1716
  %1919 = vmatprep.subr.bf16.mxu0 0
  %1920 = vmatpush1.bf16.msra.mxu0 %v1717
  %1921 = vmatprep.subr.bf16.mxu0 0
  %1922 = vmatpush1.bf16.msra.mxu0 %v1718
  %1923 = vmatprep.subr.bf16.mxu0 0
  %1924 = vmatpush1.bf16.msra.mxu0 %v1719
  %1925 = vmatprep.subr.bf16.mxu0 0
  %1926 = vmatpush1.bf16.msra.mxu0 %v1720
  %1927 = vmatprep.subr.bf16.mxu0 0
  %1928 = vmatpush1.bf16.msra.mxu0 %v1721
  %1929 = vmatprep.subr.bf16.mxu0 0
  %1930 = vmatpush1.bf16.msra.mxu0 %v1722
  %1931 = vmatprep.subr.bf16.mxu0 0
  %1932 = vmatpush1.bf16.msra.mxu0 %v1723
  %1933 = vmatprep.subr.bf16.mxu0 0
  %1934 = vmatpush1.bf16.msra.mxu0 %v1724
  %1935 = vmatprep.subr.bf16.mxu0 0
  %1936 = vmatpush1.bf16.msra.mxu0 %v1725
  %1937 = vmatprep.mubr.bf16.mxu0 %v1099
  %1938 = vmatmul.mubr.bf16.gmra.mrb[0].mxu0 %v1098
  %v1939 = vpop.f32.mrb[0].mxu0
  %v1940 = vadd.f32 %v392, %v1939
  %v1941 = vpop.f32.mrb[0].mxu0
  %v1942 = vpop.f32.mrb[0].mxu0
  %v1943 = vadd.f32 %v392, %v1942
  %v1944 = vpop.f32.mrb[0].mxu0
  %1945 = vmatprep.mubr.bf16.mxu0 %v1106
  %1946 = vmatmul.mubr.bf16.gmra.mrb[0].mxu0 %v1105
  %v1947 = vpop.f32.mrb[0].mxu0
  %v1948 = vadd.f32 %v392, %v1947
  %v1949 = vpop.f32.mrb[0].mxu0
  %v1950 = vpop.f32.mrb[0].mxu0
  %v1951 = vadd.f32 %v392, %v1950
  %v1952 = vpop.f32.mrb[0].mxu0
  %1953 = vmatprep.mubr.bf16.mxu0 %v1113
  %1954 = vmatmul.mubr.bf16.gmra.mrb[0].mxu0 %v1112
  %v1955 = vpop.f32.mrb[0].mxu0
  %v1956 = vadd.f32 %v392, %v1955
  %v1957 = vpop.f32.mrb[0].mxu0
  %v1958 = vpop.f32.mrb[0].mxu0
  %v1959 = vadd.f32 %v392, %v1958
  %v1960 = vpop.f32.mrb[0].mxu0
  %1961 = vmatprep.mubr.bf16.mxu0 %v1120
  %1962 = vmatmul.mubr.bf16.gmra.mrb[0].mxu0 %v1119
  %v1963 = vpop.f32.mrb[0].mxu0
  %v1964 = vadd.f32 %v392, %v1963
  %v1965 = vpop.f32.mrb[0].mxu0
  %v1966 = vpop.f32.mrb[0].mxu0
  %v1967 = vadd.f32 %v392, %v1966
  %v1968 = vpop.f32.mrb[0].mxu0
  %1969 = vmatprep.mubr.bf16.mxu0 %v1127
  %1970 = vmatmul.mubr.bf16.gmra.mrb[0].mxu0 %v1126
  %v1971 = vpop.f32.mrb[0].mxu0
  %v1972 = vadd.f32 %v392, %v1971
  %v1973 = vpop.f32.mrb[0].mxu0
  %v1974 = vpop.f32.mrb[0].mxu0
  %v1975 = vadd.f32 %v392, %v1974
  %v1976 = vpop.f32.mrb[0].mxu0
  %1977 = vmatprep.mubr.bf16.mxu0 %v1134
  %1978 = vmatmul.mubr.bf16.gmra.mrb[0].mxu0 %v1133
  %v1979 = vpop.f32.mrb[0].mxu0
  %v1980 = vadd.f32 %v392, %v1979
  %v1981 = vpop.f32.mrb[0].mxu0
  %v1982 = vpop.f32.mrb[0].mxu0
  %v1983 = vadd.f32 %v392, %v1982
  %v1984 = vpop.f32.mrb[0].mxu0
  %1985 = vmatprep.mubr.bf16.mxu0 %v1141
  %1986 = vmatmul.mubr.bf16.gmra.mrb[0].mxu0 %v1140
  %v1987 = vpop.f32.mrb[0].mxu0
  %v1988 = vadd.f32 %v392, %v1987
  %v1989 = vpop.f32.mrb[0].mxu0
  %v1990 = vpop.f32.mrb[0].mxu0
  %v1991 = vadd.f32 %v392, %v1990
  %v1992 = vpop.f32.mrb[0].mxu0
  %1993 = vmatprep.mubr.bf16.mxu0 %v1148
  %1994 = vmatmul.mubr.bf16.gmra.mrb[0].mxu0 %v1147
  %v1995 = vpop.f32.mrb[0].mxu0
  %v1996 = vadd.f32 %v392, %v1995
  %v1997 = vpop.f32.mrb[0].mxu0
  %v1998 = vpop.f32.mrb[0].mxu0
  %v1999 = vadd.f32 %v392, %v1998
  %v2000 = vpop.f32.mrb[0].mxu0
  %2001 = vmatprep.mubr.bf16.mxu0 %v1155
  %2002 = vmatmul.mubr.bf16.gmra.mrb[0].mxu0 %v1154
  %v2003 = vpop.f32.mrb[0].mxu0
  %v2004 = vadd.f32 %v392, %v2003
  %v2005 = vpop.f32.mrb[0].mxu0
  %v2006 = vpop.f32.mrb[0].mxu0
  %v2007 = vadd.f32 %v392, %v2006
  %v2008 = vpop.f32.mrb[0].mxu0
  %2009 = vmatprep.mubr.bf16.mxu0 %v1162
  %2010 = vmatmul.mubr.bf16.gmra.mrb[0].mxu0 %v1161
  %v2011 = vpop.f32.mrb[0].mxu0
  %v2012 = vadd.f32 %v392, %v2011
  %v2013 = vpop.f32.mrb[0].mxu0
  %v2014 = vpop.f32.mrb[0].mxu0
  %v2015 = vadd.f32 %v392, %v2014
  %v2016 = vpop.f32.mrb[0].mxu0
  %2017 = vmatprep.mubr.bf16.mxu0 %v1169
  %2018 = vmatmul.mubr.bf16.gmra.mrb[0].mxu0 %v1168
  %v2019 = vpop.f32.mrb[0].mxu0
  %v2020 = vadd.f32 %v392, %v2019
  %v2021 = vpop.f32.mrb[0].mxu0
  %v2022 = vpop.f32.mrb[0].mxu0
  %v2023 = vadd.f32 %v392, %v2022
  %v2024 = vpop.f32.mrb[0].mxu0
  %2025 = vmatprep.mubr.bf16.mxu0 %v1176
  %2026 = vmatmul.mubr.bf16.gmra.mrb[0].mxu0 %v1175
  %v2027 = vpop.f32.mrb[0].mxu0
  %v2028 = vadd.f32 %v392, %v2027
  %v2029 = vpop.f32.mrb[0].mxu0
  %v2030 = vpop.f32.mrb[0].mxu0
  %v2031 = vadd.f32 %v392, %v2030
  %v2032 = vpop.f32.mrb[0].mxu0
  %2033 = vmatprep.mubr.bf16.mxu0 %v1183
  %2034 = vmatmul.mubr.bf16.gmra.mrb[0].mxu0 %v1182
  %v2035 = vpop.f32.mrb[0].mxu0
  %v2036 = vadd.f32 %v392, %v2035
  %v2037 = vpop.f32.mrb[0].mxu0
  %v2038 = vpop.f32.mrb[0].mxu0
  %v2039 = vadd.f32 %v392, %v2038
  %v2040 = vpop.f32.mrb[0].mxu0
  %2041 = vmatprep.mubr.bf16.mxu0 %v1190
  %2042 = vmatmul.mubr.bf16.gmra.mrb[0].mxu0 %v1189
  %v2043 = vpop.f32.mrb[0].mxu0
  %v2044 = vadd.f32 %v392, %v2043
  %v2045 = vpop.f32.mrb[0].mxu0
  %v2046 = vpop.f32.mrb[0].mxu0
  %v2047 = vadd.f32 %v392, %v2046
  %v2048 = vpop.f32.mrb[0].mxu0
  %2049 = vmatprep.mubr.bf16.mxu0 %v1197
  %2050 = vmatmul.mubr.bf16.gmra.mrb[0].mxu0 %v1196
  %v2051 = vpop.f32.mrb[0].mxu0
  %v2052 = vadd.f32 %v392, %v2051
  %v2053 = vpop.f32.mrb[0].mxu0
  %v2054 = vpop.f32.mrb[0].mxu0
  %v2055 = vadd.f32 %v392, %v2054
  %v2056 = vpop.f32.mrb[0].mxu0
  %2057 = vmatprep.mubr.bf16.mxu0 %v1204
  %2058 = vmatmul.mubr.bf16.gmra.mrb[0].mxu0 %v1203
  %v2059 = vpop.f32.mrb[0].mxu0
  %v2060 = vadd.f32 %v392, %v2059
  %v2061 = vpop.f32.mrb[0].mxu0
  %v2062 = vpop.f32.mrb[0].mxu0
  %v2063 = vadd.f32 %v392, %v2062
  %v2064 = vpop.f32.mrb[0].mxu0
  %2065 = vmatprep.mubr.bf16.mxu0 %v1211
  %2066 = vmatmul.mubr.bf16.gmra.mrb[0].mxu0 %v1210
  %v2067 = vpop.f32.mrb[0].mxu0
  %v2068 = vadd.f32 %v392, %v2067
  %v2069 = vpop.f32.mrb[0].mxu0
  %v2070 = vpop.f32.mrb[0].mxu0
  %v2071 = vadd.f32 %v392, %v2070
  %v2072 = vpop.f32.mrb[0].mxu0
  %2073 = vmatprep.mubr.bf16.mxu0 %v1218
  %2074 = vmatmul.mubr.bf16.gmra.mrb[0].mxu0 %v1217
  %v2075 = vpop.f32.mrb[0].mxu0
  %v2076 = vadd.f32 %v392, %v2075
  %v2077 = vpop.f32.mrb[0].mxu0
  %v2078 = vpop.f32.mrb[0].mxu0
  %v2079 = vadd.f32 %v392, %v2078
  %v2080 = vpop.f32.mrb[0].mxu0
  %2081 = vmatprep.mubr.bf16.mxu0 %v1225
  %2082 = vmatmul.mubr.bf16.gmra.mrb[0].mxu0 %v1224
  %v2083 = vpop.f32.mrb[0].mxu0
  %v2084 = vadd.f32 %v392, %v2083
  %v2085 = vpop.f32.mrb[0].mxu0
  %v2086 = vpop.f32.mrb[0].mxu0
  %v2087 = vadd.f32 %v392, %v2086
  %v2088 = vpop.f32.mrb[0].mxu0
  %2089 = vmatprep.mubr.bf16.mxu0 %v1232
  %2090 = vmatmul.mubr.bf16.gmra.mrb[0].mxu0 %v1231
  %v2091 = vpop.f32.mrb[0].mxu0
  %v2092 = vadd.f32 %v392, %v2091
  %v2093 = vpop.f32.mrb[0].mxu0
  %v2094 = vpop.f32.mrb[0].mxu0
  %v2095 = vadd.f32 %v392, %v2094
  %v2096 = vpop.f32.mrb[0].mxu0
  %2097 = vmatprep.mubr.bf16.mxu0 %v1239
  %2098 = vmatmul.mubr.bf16.gmra.mrb[0].mxu0 %v1238
  %v2099 = vpop.f32.mrb[0].mxu0
  %v2100 = vadd.f32 %v392, %v2099
  %v2101 = vpop.f32.mrb[0].mxu0
  %v2102 = vpop.f32.mrb[0].mxu0
  %v2103 = vadd.f32 %v392, %v2102
  %v2104 = vpop.f32.mrb[0].mxu0
  %2105 = vmatprep.mubr.bf16.mxu0 %v1246
  %2106 = vmatmul.mubr.bf16.gmra.mrb[0].mxu0 %v1245
  %v2107 = vpop.f32.mrb[0].mxu0
  %v2108 = vadd.f32 %v392, %v2107
  %v2109 = vpop.f32.mrb[0].mxu0
  %v2110 = vpop.f32.mrb[0].mxu0
  %v2111 = vadd.f32 %v392, %v2110
  %v2112 = vpop.f32.mrb[0].mxu0
  %2113 = vmatprep.mubr.bf16.mxu0 %v1253
  %2114 = vmatmul.mubr.bf16.gmra.mrb[0].mxu0 %v1252
  %v2115 = vpop.f32.mrb[0].mxu0
  %v2116 = vadd.f32 %v392, %v2115
  %v2117 = vpop.f32.mrb[0].mxu0
  %v2118 = vpop.f32.mrb[0].mxu0
  %v2119 = vadd.f32 %v392, %v2118
  %v2120 = vpop.f32.mrb[0].mxu0
  %2121 = vmatprep.mubr.bf16.mxu0 %v1260
  %2122 = vmatmul.mubr.bf16.gmra.mrb[0].mxu0 %v1259
  %v2123 = vpop.f32.mrb[0].mxu0
  %v2124 = vadd.f32 %v392, %v2123
  %v2125 = vpop.f32.mrb[0].mxu0
  %v2126 = vpop.f32.mrb[0].mxu0
  %v2127 = vadd.f32 %v392, %v2126
  %v2128 = vpop.f32.mrb[0].mxu0
  %2129 = vmatprep.mubr.bf16.mxu0 %v1267
  %2130 = vmatmul.mubr.bf16.gmra.mrb[0].mxu0 %v1266
  %v2131 = vpop.f32.mrb[0].mxu0
  %v2132 = vadd.f32 %v392, %v2131
  %v2133 = vpop.f32.mrb[0].mxu0
  %v2134 = vpop.f32.mrb[0].mxu0
  %v2135 = vadd.f32 %v392, %v2134
  %v2136 = vpop.f32.mrb[0].mxu0
  %2137 = vmatprep.mubr.bf16.mxu0 %v1274
  %2138 = vmatmul.mubr.bf16.gmra.mrb[0].mxu0 %v1273
  %v2139 = vpop.f32.mrb[0].mxu0
  %v2140 = vadd.f32 %v392, %v2139
  %v2141 = vpop.f32.mrb[0].mxu0
  %v2142 = vpop.f32.mrb[0].mxu0
  %v2143 = vadd.f32 %v392, %v2142
  %v2144 = vpop.f32.mrb[0].mxu0
  %2145 = vmatprep.mubr.bf16.mxu0 %v1281
  %2146 = vmatmul.mubr.bf16.gmra.mrb[0].mxu0 %v1280
  %v2147 = vpop.f32.mrb[0].mxu0
  %v2148 = vadd.f32 %v392, %v2147
  %v2149 = vpop.f32.mrb[0].mxu0
  %v2150 = vpop.f32.mrb[0].mxu0
  %v2151 = vadd.f32 %v392, %v2150
  %v2152 = vpop.f32.mrb[0].mxu0
  %2153 = vmatprep.mubr.bf16.mxu0 %v1288
  %2154 = vmatmul.mubr.bf16.gmra.mrb[0].mxu0 %v1287
  %v2155 = vpop.f32.mrb[0].mxu0
  %v2156 = vadd.f32 %v392, %v2155
  %v2157 = vpop.f32.mrb[0].mxu0
  %v2158 = vpop.f32.mrb[0].mxu0
  %v2159 = vadd.f32 %v392, %v2158
  %v2160 = vpop.f32.mrb[0].mxu0
  %2161 = vmatprep.mubr.bf16.mxu0 %v1295
  %2162 = vmatmul.mubr.bf16.gmra.mrb[0].mxu0 %v1294
  %v2163 = vpop.f32.mrb[0].mxu0
  %v2164 = vadd.f32 %v392, %v2163
  %v2165 = vpop.f32.mrb[0].mxu0
  %v2166 = vpop.f32.mrb[0].mxu0
  %v2167 = vadd.f32 %v392, %v2166
  %v2168 = vpop.f32.mrb[0].mxu0
  %2169 = vmatprep.mubr.bf16.mxu0 %v1302
  %2170 = vmatmul.mubr.bf16.gmra.mrb[0].mxu0 %v1301
  %v2171 = vpop.f32.mrb[0].mxu0
  %v2172 = vadd.f32 %v392, %v2171
  %v2173 = vpop.f32.mrb[0].mxu0
  %v2174 = vpop.f32.mrb[0].mxu0
  %v2175 = vadd.f32 %v392, %v2174
  %v2176 = vpop.f32.mrb[0].mxu0
  %2177 = vmatprep.mubr.bf16.mxu0 %v1309
  %2178 = vmatmul.mubr.bf16.gmra.mrb[0].mxu0 %v1308
  %v2179 = vpop.f32.mrb[0].mxu0
  %v2180 = vadd.f32 %v392, %v2179
  %v2181 = vpop.f32.mrb[0].mxu0
  %v2182 = vpop.f32.mrb[0].mxu0
  %v2183 = vadd.f32 %v392, %v2182
  %v2184 = vpop.f32.mrb[0].mxu0
  %2185 = vmatprep.mubr.bf16.mxu0 %v1316
  %2186 = vmatmul.mubr.bf16.gmra.mrb[0].mxu0 %v1315
  %v2187 = vpop.f32.mrb[0].mxu0
  %v2188 = vadd.f32 %v392, %v2187
  %v2189 = vpop.f32.mrb[0].mxu0
  %v2190 = vpop.f32.mrb[0].mxu0
  %v2191 = vadd.f32 %v392, %v2190
  %v2192 = vpop.f32.mrb[0].mxu0
  %2193 = vdwg.mxu0
  %2194 = vmatprep.subr.bf16.mxu0 0
  %2195 = vmatpush1.bf16.msra.mxu0 %v1726
  %2196 = vmatprep.subr.bf16.mxu0 0
  %2197 = vmatpush1.bf16.msra.mxu0 %v1727
  %2198 = vmatprep.subr.bf16.mxu0 0
  %2199 = vmatpush1.bf16.msra.mxu0 %v1728
  %2200 = vmatprep.subr.bf16.mxu0 0
  %2201 = vmatpush1.bf16.msra.mxu0 %v1729
  %2202 = vmatprep.subr.bf16.mxu0 0
  %2203 = vmatpush1.bf16.msra.mxu0 %v1730
  %2204 = vmatprep.subr.bf16.mxu0 0
  %2205 = vmatpush1.bf16.msra.mxu0 %v1731
  %2206 = vmatprep.subr.bf16.mxu0 0
  %2207 = vmatpush1.bf16.msra.mxu0 %v1732
  %2208 = vmatprep.subr.bf16.mxu0 0
  %2209 = vmatpush1.bf16.msra.mxu0 %v1733
  %2210 = vmatprep.subr.bf16.mxu0 0
  %2211 = vmatpush1.bf16.msra.mxu0 %v1734
  %2212 = vmatprep.subr.bf16.mxu0 0
  %2213 = vmatpush1.bf16.msra.mxu0 %v1735
  %2214 = vmatprep.subr.bf16.mxu0 0
  %2215 = vmatpush1.bf16.msra.mxu0 %v1736
  %2216 = vmatprep.subr.bf16.mxu0 0
  %2217 = vmatpush1.bf16.msra.mxu0 %v1737
  %2218 = vmatprep.subr.bf16.mxu0 0
  %2219 = vmatpush1.bf16.msra.mxu0 %v1738
  %2220 = vmatprep.subr.bf16.mxu0 0
  %2221 = vmatpush1.bf16.msra.mxu0 %v1739
  %2222 = vmatprep.subr.bf16.mxu0 0
  %2223 = vmatpush1.bf16.msra.mxu0 %v1740
  %2224 = vmatprep.subr.bf16.mxu0 0
  %2225 = vmatpush1.bf16.msra.mxu0 %v1741
  %2226 = vmatprep.mubr.bf16.mxu0 %v1101
  %2227 = vmatmul.mubr.bf16.gmra.mrb[0].mxu0 %v1100
  %v2228 = vpop.f32.mrb[0].mxu0
  %v2229 = vadd.f32 %v1940, %v2228
  %v2230 = vpop.f32.mrb[0].mxu0
  %v2231 = vpop.f32.mrb[0].mxu0
  %v2232 = vadd.f32 %v1943, %v2231
  %v2233 = vpop.f32.mrb[0].mxu0
  %2234 = vmatprep.mubr.bf16.mxu0 %v1108
  %2235 = vmatmul.mubr.bf16.gmra.mrb[0].mxu0 %v1107
  %v2236 = vpop.f32.mrb[0].mxu0
  %v2237 = vadd.f32 %v1948, %v2236
  %v2238 = vpop.f32.mrb[0].mxu0
  %v2239 = vpop.f32.mrb[0].mxu0
  %v2240 = vadd.f32 %v1951, %v2239
  %v2241 = vpop.f32.mrb[0].mxu0
  %2242 = vmatprep.mubr.bf16.mxu0 %v1115
  %2243 = vmatmul.mubr.bf16.gmra.mrb[0].mxu0 %v1114
  %v2244 = vpop.f32.mrb[0].mxu0
  %v2245 = vadd.f32 %v1956, %v2244
  %v2246 = vpop.f32.mrb[0].mxu0
  %v2247 = vpop.f32.mrb[0].mxu0
  %v2248 = vadd.f32 %v1959, %v2247
  %v2249 = vpop.f32.mrb[0].mxu0
  %2250 = vmatprep.mubr.bf16.mxu0 %v1122
  %2251 = vmatmul.mubr.bf16.gmra.mrb[0].mxu0 %v1121
  %v2252 = vpop.f32.mrb[0].mxu0
  %v2253 = vadd.f32 %v1964, %v2252
  %v2254 = vpop.f32.mrb[0].mxu0
  %v2255 = vpop.f32.mrb[0].mxu0
  %v2256 = vadd.f32 %v1967, %v2255
  %v2257 = vpop.f32.mrb[0].mxu0
  %2258 = vmatprep.mubr.bf16.mxu0 %v1129
  %2259 = vmatmul.mubr.bf16.gmra.mrb[0].mxu0 %v1128
  %v2260 = vpop.f32.mrb[0].mxu0
  %v2261 = vadd.f32 %v1972, %v2260
  %v2262 = vpop.f32.mrb[0].mxu0
  %v2263 = vpop.f32.mrb[0].mxu0
  %v2264 = vadd.f32 %v1975, %v2263
  %v2265 = vpop.f32.mrb[0].mxu0
  %2266 = vmatprep.mubr.bf16.mxu0 %v1136
  %2267 = vmatmul.mubr.bf16.gmra.mrb[0].mxu0 %v1135
  %v2268 = vpop.f32.mrb[0].mxu0
  %v2269 = vadd.f32 %v1980, %v2268
  %v2270 = vpop.f32.mrb[0].mxu0
  %v2271 = vpop.f32.mrb[0].mxu0
  %v2272 = vadd.f32 %v1983, %v2271
  %v2273 = vpop.f32.mrb[0].mxu0
  %2274 = vmatprep.mubr.bf16.mxu0 %v1143
  %2275 = vmatmul.mubr.bf16.gmra.mrb[0].mxu0 %v1142
  %v2276 = vpop.f32.mrb[0].mxu0
  %v2277 = vadd.f32 %v1988, %v2276
  %v2278 = vpop.f32.mrb[0].mxu0
  %v2279 = vpop.f32.mrb[0].mxu0
  %v2280 = vadd.f32 %v1991, %v2279
  %v2281 = vpop.f32.mrb[0].mxu0
  %2282 = vmatprep.mubr.bf16.mxu0 %v1150
  %2283 = vmatmul.mubr.bf16.gmra.mrb[0].mxu0 %v1149
  %v2284 = vpop.f32.mrb[0].mxu0
  %v2285 = vadd.f32 %v1996, %v2284
  %v2286 = vpop.f32.mrb[0].mxu0
  %v2287 = vpop.f32.mrb[0].mxu0
  %v2288 = vadd.f32 %v1999, %v2287
  %v2289 = vpop.f32.mrb[0].mxu0
  %2290 = vmatprep.mubr.bf16.mxu0 %v1157
  %2291 = vmatmul.mubr.bf16.gmra.mrb[0].mxu0 %v1156
  %v2292 = vpop.f32.mrb[0].mxu0
  %v2293 = vadd.f32 %v2004, %v2292
  %v2294 = vpop.f32.mrb[0].mxu0
  %v2295 = vpop.f32.mrb[0].mxu0
  %v2296 = vadd.f32 %v2007, %v2295
  %v2297 = vpop.f32.mrb[0].mxu0
  %2298 = vmatprep.mubr.bf16.mxu0 %v1164
  %2299 = vmatmul.mubr.bf16.gmra.mrb[0].mxu0 %v1163
  %v2300 = vpop.f32.mrb[0].mxu0
  %v2301 = vadd.f32 %v2012, %v2300
  %v2302 = vpop.f32.mrb[0].mxu0
  %v2303 = vpop.f32.mrb[0].mxu0
  %v2304 = vadd.f32 %v2015, %v2303
  %v2305 = vpop.f32.mrb[0].mxu0
  %2306 = vmatprep.mubr.bf16.mxu0 %v1171
  %2307 = vmatmul.mubr.bf16.gmra.mrb[0].mxu0 %v1170
  %v2308 = vpop.f32.mrb[0].mxu0
  %v2309 = vadd.f32 %v2020, %v2308
  %v2310 = vpop.f32.mrb[0].mxu0
  %v2311 = vpop.f32.mrb[0].mxu0
  %v2312 = vadd.f32 %v2023, %v2311
  %v2313 = vpop.f32.mrb[0].mxu0
  %2314 = vmatprep.mubr.bf16.mxu0 %v1178
  %2315 = vmatmul.mubr.bf16.gmra.mrb[0].mxu0 %v1177
  %v2316 = vpop.f32.mrb[0].mxu0
  %v2317 = vadd.f32 %v2028, %v2316
  %v2318 = vpop.f32.mrb[0].mxu0
  %v2319 = vpop.f32.mrb[0].mxu0
  %v2320 = vadd.f32 %v2031, %v2319
  %v2321 = vpop.f32.mrb[0].mxu0
  %2322 = vmatprep.mubr.bf16.mxu0 %v1185
  %2323 = vmatmul.mubr.bf16.gmra.mrb[0].mxu0 %v1184
  %v2324 = vpop.f32.mrb[0].mxu0
  %v2325 = vadd.f32 %v2036, %v2324
  %v2326 = vpop.f32.mrb[0].mxu0
  %v2327 = vpop.f32.mrb[0].mxu0
  %v2328 = vadd.f32 %v2039, %v2327
  %v2329 = vpop.f32.mrb[0].mxu0
  %2330 = vmatprep.mubr.bf16.mxu0 %v1192
  %2331 = vmatmul.mubr.bf16.gmra.mrb[0].mxu0 %v1191
  %v2332 = vpop.f32.mrb[0].mxu0
  %v2333 = vadd.f32 %v2044, %v2332
  %v2334 = vpop.f32.mrb[0].mxu0
  %v2335 = vpop.f32.mrb[0].mxu0
  %v2336 = vadd.f32 %v2047, %v2335
  %v2337 = vpop.f32.mrb[0].mxu0
  %2338 = vmatprep.mubr.bf16.mxu0 %v1199
  %2339 = vmatmul.mubr.bf16.gmra.mrb[0].mxu0 %v1198
  %v2340 = vpop.f32.mrb[0].mxu0
  %v2341 = vadd.f32 %v2052, %v2340
  %v2342 = vpop.f32.mrb[0].mxu0
  %v2343 = vpop.f32.mrb[0].mxu0
  %v2344 = vadd.f32 %v2055, %v2343
  %v2345 = vpop.f32.mrb[0].mxu0
  %2346 = vmatprep.mubr.bf16.mxu0 %v1206
  %2347 = vmatmul.mubr.bf16.gmra.mrb[0].mxu0 %v1205
  %v2348 = vpop.f32.mrb[0].mxu0
  %v2349 = vadd.f32 %v2060, %v2348
  %v2350 = vpop.f32.mrb[0].mxu0
  %v2351 = vpop.f32.mrb[0].mxu0
  %v2352 = vadd.f32 %v2063, %v2351
  %v2353 = vpop.f32.mrb[0].mxu0
  %2354 = vmatprep.mubr.bf16.mxu0 %v1213
  %2355 = vmatmul.mubr.bf16.gmra.mrb[0].mxu0 %v1212
  %v2356 = vpop.f32.mrb[0].mxu0
  %v2357 = vadd.f32 %v2068, %v2356
  %v2358 = vpop.f32.mrb[0].mxu0
  %v2359 = vpop.f32.mrb[0].mxu0
  %v2360 = vadd.f32 %v2071, %v2359
  %v2361 = vpop.f32.mrb[0].mxu0
  %2362 = vmatprep.mubr.bf16.mxu0 %v1220
  %2363 = vmatmul.mubr.bf16.gmra.mrb[0].mxu0 %v1219
  %v2364 = vpop.f32.mrb[0].mxu0
  %v2365 = vadd.f32 %v2076, %v2364
  %v2366 = vpop.f32.mrb[0].mxu0
  %v2367 = vpop.f32.mrb[0].mxu0
  %v2368 = vadd.f32 %v2079, %v2367
  %v2369 = vpop.f32.mrb[0].mxu0
  %2370 = vmatprep.mubr.bf16.mxu0 %v1227
  %2371 = vmatmul.mubr.bf16.gmra.mrb[0].mxu0 %v1226
  %v2372 = vpop.f32.mrb[0].mxu0
  %v2373 = vadd.f32 %v2084, %v2372
  %v2374 = vpop.f32.mrb[0].mxu0
  %v2375 = vpop.f32.mrb[0].mxu0
  %v2376 = vadd.f32 %v2087, %v2375
  %v2377 = vpop.f32.mrb[0].mxu0
  %2378 = vmatprep.mubr.bf16.mxu0 %v1234
  %2379 = vmatmul.mubr.bf16.gmra.mrb[0].mxu0 %v1233
  %v2380 = vpop.f32.mrb[0].mxu0
  %v2381 = vadd.f32 %v2092, %v2380
  %v2382 = vpop.f32.mrb[0].mxu0
  %v2383 = vpop.f32.mrb[0].mxu0
  %v2384 = vadd.f32 %v2095, %v2383
  %v2385 = vpop.f32.mrb[0].mxu0
  %2386 = vmatprep.mubr.bf16.mxu0 %v1241
  %2387 = vmatmul.mubr.bf16.gmra.mrb[0].mxu0 %v1240
  %v2388 = vpop.f32.mrb[0].mxu0
  %v2389 = vadd.f32 %v2100, %v2388
  %v2390 = vpop.f32.mrb[0].mxu0
  %v2391 = vpop.f32.mrb[0].mxu0
  %v2392 = vadd.f32 %v2103, %v2391
  %v2393 = vpop.f32.mrb[0].mxu0
  %2394 = vmatprep.mubr.bf16.mxu0 %v1248
  %2395 = vmatmul.mubr.bf16.gmra.mrb[0].mxu0 %v1247
  %v2396 = vpop.f32.mrb[0].mxu0
  %v2397 = vadd.f32 %v2108, %v2396
  %v2398 = vpop.f32.mrb[0].mxu0
  %v2399 = vpop.f32.mrb[0].mxu0
  %v2400 = vadd.f32 %v2111, %v2399
  %v2401 = vpop.f32.mrb[0].mxu0
  %2402 = vmatprep.mubr.bf16.mxu0 %v1255
  %2403 = vmatmul.mubr.bf16.gmra.mrb[0].mxu0 %v1254
  %v2404 = vpop.f32.mrb[0].mxu0
  %v2405 = vadd.f32 %v2116, %v2404
  %v2406 = vpop.f32.mrb[0].mxu0
  %v2407 = vpop.f32.mrb[0].mxu0
  %v2408 = vadd.f32 %v2119, %v2407
  %v2409 = vpop.f32.mrb[0].mxu0
  %2410 = vmatprep.mubr.bf16.mxu0 %v1262
  %2411 = vmatmul.mubr.bf16.gmra.mrb[0].mxu0 %v1261
  %v2412 = vpop.f32.mrb[0].mxu0
  %v2413 = vadd.f32 %v2124, %v2412
  %v2414 = vpop.f32.mrb[0].mxu0
  %v2415 = vpop.f32.mrb[0].mxu0
  %v2416 = vadd.f32 %v2127, %v2415
  %v2417 = vpop.f32.mrb[0].mxu0
  %2418 = vmatprep.mubr.bf16.mxu0 %v1269
  %2419 = vmatmul.mubr.bf16.gmra.mrb[0].mxu0 %v1268
  %v2420 = vpop.f32.mrb[0].mxu0
  %v2421 = vadd.f32 %v2132, %v2420
  %v2422 = vpop.f32.mrb[0].mxu0
  %v2423 = vpop.f32.mrb[0].mxu0
  %v2424 = vadd.f32 %v2135, %v2423
  %v2425 = vpop.f32.mrb[0].mxu0
  %2426 = vmatprep.mubr.bf16.mxu0 %v1276
  %2427 = vmatmul.mubr.bf16.gmra.mrb[0].mxu0 %v1275
  %v2428 = vpop.f32.mrb[0].mxu0
  %v2429 = vadd.f32 %v2140, %v2428
  %v2430 = vpop.f32.mrb[0].mxu0
  %v2431 = vpop.f32.mrb[0].mxu0
  %v2432 = vadd.f32 %v2143, %v2431
  %v2433 = vpop.f32.mrb[0].mxu0
  %2434 = vmatprep.mubr.bf16.mxu0 %v1283
  %2435 = vmatmul.mubr.bf16.gmra.mrb[0].mxu0 %v1282
  %v2436 = vpop.f32.mrb[0].mxu0
  %v2437 = vadd.f32 %v2148, %v2436
  %v2438 = vpop.f32.mrb[0].mxu0
  %v2439 = vpop.f32.mrb[0].mxu0
  %v2440 = vadd.f32 %v2151, %v2439
  %v2441 = vpop.f32.mrb[0].mxu0
  %2442 = vmatprep.mubr.bf16.mxu0 %v1290
  %2443 = vmatmul.mubr.bf16.gmra.mrb[0].mxu0 %v1289
  %v2444 = vpop.f32.mrb[0].mxu0
  %v2445 = vadd.f32 %v2156, %v2444
  %v2446 = vpop.f32.mrb[0].mxu0
  %v2447 = vpop.f32.mrb[0].mxu0
  %v2448 = vadd.f32 %v2159, %v2447
  %v2449 = vpop.f32.mrb[0].mxu0
  %2450 = vmatprep.mubr.bf16.mxu0 %v1297
  %2451 = vmatmul.mubr.bf16.gmra.mrb[0].mxu0 %v1296
  %v2452 = vpop.f32.mrb[0].mxu0
  %v2453 = vadd.f32 %v2164, %v2452
  %v2454 = vpop.f32.mrb[0].mxu0
  %v2455 = vpop.f32.mrb[0].mxu0
  %v2456 = vadd.f32 %v2167, %v2455
  %v2457 = vpop.f32.mrb[0].mxu0
  %2458 = vmatprep.mubr.bf16.mxu0 %v1304
  %2459 = vmatmul.mubr.bf16.gmra.mrb[0].mxu0 %v1303
  %v2460 = vpop.f32.mrb[0].mxu0
  %v2461 = vadd.f32 %v2172, %v2460
  %v2462 = vpop.f32.mrb[0].mxu0
  %v2463 = vpop.f32.mrb[0].mxu0
  %v2464 = vadd.f32 %v2175, %v2463
  %v2465 = vpop.f32.mrb[0].mxu0
  %2466 = vmatprep.mubr.bf16.mxu0 %v1311
  %2467 = vmatmul.mubr.bf16.gmra.mrb[0].mxu0 %v1310
  %v2468 = vpop.f32.mrb[0].mxu0
  %v2469 = vadd.f32 %v2180, %v2468
  %v2470 = vpop.f32.mrb[0].mxu0
  %v2471 = vpop.f32.mrb[0].mxu0
  %v2472 = vadd.f32 %v2183, %v2471
  %v2473 = vpop.f32.mrb[0].mxu0
  %2474 = vmatprep.mubr.bf16.mxu0 %v1318
  %2475 = vmatmul.mubr.bf16.gmra.mrb[0].mxu0 %v1317
  %v2476 = vpop.f32.mrb[0].mxu0
  %v2477 = vadd.f32 %v2188, %v2476
  %v2478 = vpop.f32.mrb[0].mxu0
  %v2479 = vpop.f32.mrb[0].mxu0
  %v2480 = vadd.f32 %v2191, %v2479
  %v2481 = vpop.f32.mrb[0].mxu0
  %2482 = vdwg.mxu0
  %2483 = vmatprep.subr.bf16.mxu0 0
  %2484 = vmatpush1.bf16.msra.mxu0 %v1742
  %2485 = vmatprep.subr.bf16.mxu0 0
  %2486 = vmatpush1.bf16.msra.mxu0 %v1743
  %2487 = vmatprep.subr.bf16.mxu0 0
  %2488 = vmatpush1.bf16.msra.mxu0 %v1744
  %2489 = vmatprep.subr.bf16.mxu0 0
  %2490 = vmatpush1.bf16.msra.mxu0 %v1745
  %2491 = vmatprep.subr.bf16.mxu0 0
  %2492 = vmatpush1.bf16.msra.mxu0 %v1746
  %2493 = vmatprep.subr.bf16.mxu0 0
  %2494 = vmatpush1.bf16.msra.mxu0 %v1747
  %2495 = vmatprep.subr.bf16.mxu0 0
  %2496 = vmatpush1.bf16.msra.mxu0 %v1748
  %2497 = vmatprep.subr.bf16.mxu0 0
  %2498 = vmatpush1.bf16.msra.mxu0 %v1749
  %2499 = vmatprep.subr.bf16.mxu0 0
  %2500 = vmatpush1.bf16.msra.mxu0 %v1750
  %2501 = vmatprep.subr.bf16.mxu0 0
  %2502 = vmatpush1.bf16.msra.mxu0 %v1751
  %2503 = vmatprep.subr.bf16.mxu0 0
  %2504 = vmatpush1.bf16.msra.mxu0 %v1752
  %2505 = vmatprep.subr.bf16.mxu0 0
  %2506 = vmatpush1.bf16.msra.mxu0 %v1753
  %2507 = vmatprep.subr.bf16.mxu0 0
  %2508 = vmatpush1.bf16.msra.mxu0 %v1754
  %2509 = vmatprep.subr.bf16.mxu0 0
  %2510 = vmatpush1.bf16.msra.mxu0 %v1755
  %2511 = vmatprep.subr.bf16.mxu0 0
  %2512 = vmatpush1.bf16.msra.mxu0 %v1756
  %2513 = vmatprep.subr.bf16.mxu0 0
  %2514 = vmatpush1.bf16.msra.mxu0 %v1757
  %2515 = vmatprep.mubr.bf16.mxu0 %v1103
  %2516 = vmatmul.mubr.bf16.gmra.mrb[0].mxu0 %v1102
  %v2517 = vpop.f32.mrb[0].mxu0
  %v2518 = vadd.f32 %v2229, %v2517
  %v2519 = vpop.f32.mrb[0].mxu0
  %v2520 = vpop.f32.mrb[0].mxu0
  %v2521 = vadd.f32 %v2232, %v2520
  %v2522 = vpop.f32.mrb[0].mxu0
  %2523 = vmatprep.mubr.bf16.mxu0 %v1110
  %2524 = vmatmul.mubr.bf16.gmra.mrb[0].mxu0 %v1109
  %v2525 = vpop.f32.mrb[0].mxu0
  %v2526 = vadd.f32 %v2237, %v2525
  %v2527 = vpop.f32.mrb[0].mxu0
  %v2528 = vpop.f32.mrb[0].mxu0
  %v2529 = vadd.f32 %v2240, %v2528
  %v2530 = vpop.f32.mrb[0].mxu0
  %2531 = vmatprep.mubr.bf16.mxu0 %v1117
  %2532 = vmatmul.mubr.bf16.gmra.mrb[0].mxu0 %v1116
  %v2533 = vpop.f32.mrb[0].mxu0
  %v2534 = vadd.f32 %v2245, %v2533
  %v2535 = vpop.f32.mrb[0].mxu0
  %v2536 = vpop.f32.mrb[0].mxu0
  %v2537 = vadd.f32 %v2248, %v2536
  %v2538 = vpop.f32.mrb[0].mxu0
  %2539 = vmatprep.mubr.bf16.mxu0 %v1124
  %2540 = vmatmul.mubr.bf16.gmra.mrb[0].mxu0 %v1123
  %v2541 = vpop.f32.mrb[0].mxu0
  %v2542 = vadd.f32 %v2253, %v2541
  %v2543 = vpop.f32.mrb[0].mxu0
  %v2544 = vpop.f32.mrb[0].mxu0
  %v2545 = vadd.f32 %v2256, %v2544
  %v2546 = vpop.f32.mrb[0].mxu0
  %2547 = vmatprep.mubr.bf16.mxu0 %v1131
  %2548 = vmatmul.mubr.bf16.gmra.mrb[0].mxu0 %v1130
  %v2549 = vpop.f32.mrb[0].mxu0
  %v2550 = vadd.f32 %v2261, %v2549
  %v2551 = vpop.f32.mrb[0].mxu0
  %v2552 = vpop.f32.mrb[0].mxu0
  %v2553 = vadd.f32 %v2264, %v2552
  %v2554 = vpop.f32.mrb[0].mxu0
  %2555 = vmatprep.mubr.bf16.mxu0 %v1138
  %2556 = vmatmul.mubr.bf16.gmra.mrb[0].mxu0 %v1137
  %v2557 = vpop.f32.mrb[0].mxu0
  %v2558 = vadd.f32 %v2269, %v2557
  %v2559 = vpop.f32.mrb[0].mxu0
  %v2560 = vpop.f32.mrb[0].mxu0
  %v2561 = vadd.f32 %v2272, %v2560
  %v2562 = vpop.f32.mrb[0].mxu0
  %2563 = vmatprep.mubr.bf16.mxu0 %v1145
  %2564 = vmatmul.mubr.bf16.gmra.mrb[0].mxu0 %v1144
  %v2565 = vpop.f32.mrb[0].mxu0
  %v2566 = vadd.f32 %v2277, %v2565
  %v2567 = vpop.f32.mrb[0].mxu0
  %v2568 = vpop.f32.mrb[0].mxu0
  %v2569 = vadd.f32 %v2280, %v2568
  %v2570 = vpop.f32.mrb[0].mxu0
  %2571 = vmatprep.mubr.bf16.mxu0 %v1152
  %2572 = vmatmul.mubr.bf16.gmra.mrb[0].mxu0 %v1151
  %v2573 = vpop.f32.mrb[0].mxu0
  %v2574 = vadd.f32 %v2285, %v2573
  %v2575 = vpop.f32.mrb[0].mxu0
  %v2576 = vpop.f32.mrb[0].mxu0
  %v2577 = vadd.f32 %v2288, %v2576
  %v2578 = vpop.f32.mrb[0].mxu0
  %2579 = vmatprep.mubr.bf16.mxu0 %v1159
  %2580 = vmatmul.mubr.bf16.gmra.mrb[0].mxu0 %v1158
  %v2581 = vpop.f32.mrb[0].mxu0
  %v2582 = vadd.f32 %v2293, %v2581
  %v2583 = vpop.f32.mrb[0].mxu0
  %v2584 = vpop.f32.mrb[0].mxu0
  %v2585 = vadd.f32 %v2296, %v2584
  %v2586 = vpop.f32.mrb[0].mxu0
  %2587 = vmatprep.mubr.bf16.mxu0 %v1166
  %2588 = vmatmul.mubr.bf16.gmra.mrb[0].mxu0 %v1165
  %v2589 = vpop.f32.mrb[0].mxu0
  %v2590 = vadd.f32 %v2301, %v2589
  %v2591 = vpop.f32.mrb[0].mxu0
  %v2592 = vpop.f32.mrb[0].mxu0
  %v2593 = vadd.f32 %v2304, %v2592
  %v2594 = vpop.f32.mrb[0].mxu0
  %2595 = vmatprep.mubr.bf16.mxu0 %v1173
  %2596 = vmatmul.mubr.bf16.gmra.mrb[0].mxu0 %v1172
  %v2597 = vpop.f32.mrb[0].mxu0
  %v2598 = vadd.f32 %v2309, %v2597
  %v2599 = vpop.f32.mrb[0].mxu0
  %v2600 = vpop.f32.mrb[0].mxu0
  %v2601 = vadd.f32 %v2312, %v2600
  %v2602 = vpop.f32.mrb[0].mxu0
  %2603 = vmatprep.mubr.bf16.mxu0 %v1180
  %2604 = vmatmul.mubr.bf16.gmra.mrb[0].mxu0 %v1179
  %v2605 = vpop.f32.mrb[0].mxu0
  %v2606 = vadd.f32 %v2317, %v2605
  %v2607 = vpop.f32.mrb[0].mxu0
  %v2608 = vpop.f32.mrb[0].mxu0
  %v2609 = vadd.f32 %v2320, %v2608
  %v2610 = vpop.f32.mrb[0].mxu0
  %2611 = vmatprep.mubr.bf16.mxu0 %v1187
  %2612 = vmatmul.mubr.bf16.gmra.mrb[0].mxu0 %v1186
  %v2613 = vpop.f32.mrb[0].mxu0
  %v2614 = vadd.f32 %v2325, %v2613
  %v2615 = vpop.f32.mrb[0].mxu0
  %v2616 = vpop.f32.mrb[0].mxu0
  %v2617 = vadd.f32 %v2328, %v2616
  %v2618 = vpop.f32.mrb[0].mxu0
  %2619 = vmatprep.mubr.bf16.mxu0 %v1194
  %2620 = vmatmul.mubr.bf16.gmra.mrb[0].mxu0 %v1193
  %v2621 = vpop.f32.mrb[0].mxu0
  %v2622 = vadd.f32 %v2333, %v2621
  %v2623 = vpop.f32.mrb[0].mxu0
  %v2624 = vpop.f32.mrb[0].mxu0
  %v2625 = vadd.f32 %v2336, %v2624
  %v2626 = vpop.f32.mrb[0].mxu0
  %2627 = vmatprep.mubr.bf16.mxu0 %v1201
  %2628 = vmatmul.mubr.bf16.gmra.mrb[0].mxu0 %v1200
  %v2629 = vpop.f32.mrb[0].mxu0
  %v2630 = vadd.f32 %v2341, %v2629
  %v2631 = vpop.f32.mrb[0].mxu0
  %v2632 = vpop.f32.mrb[0].mxu0
  %v2633 = vadd.f32 %v2344, %v2632
  %v2634 = vpop.f32.mrb[0].mxu0
  %2635 = vmatprep.mubr.bf16.mxu0 %v1208
  %2636 = vmatmul.mubr.bf16.gmra.mrb[0].mxu0 %v1207
  %v2637 = vpop.f32.mrb[0].mxu0
  %v2638 = vadd.f32 %v2349, %v2637
  %v2639 = vpop.f32.mrb[0].mxu0
  %v2640 = vpop.f32.mrb[0].mxu0
  %v2641 = vadd.f32 %v2352, %v2640
  %v2642 = vpop.f32.mrb[0].mxu0
  %2643 = vmatprep.mubr.bf16.mxu0 %v1215
  %2644 = vmatmul.mubr.bf16.gmra.mrb[0].mxu0 %v1214
  %v2645 = vpop.f32.mrb[0].mxu0
  %v2646 = vadd.f32 %v2357, %v2645
  %v2647 = vpop.f32.mrb[0].mxu0
  %v2648 = vpop.f32.mrb[0].mxu0
  %v2649 = vadd.f32 %v2360, %v2648
  %v2650 = vpop.f32.mrb[0].mxu0
  %2651 = vmatprep.mubr.bf16.mxu0 %v1222
  %2652 = vmatmul.mubr.bf16.gmra.mrb[0].mxu0 %v1221
  %v2653 = vpop.f32.mrb[0].mxu0
  %v2654 = vadd.f32 %v2365, %v2653
  %v2655 = vpop.f32.mrb[0].mxu0
  %v2656 = vpop.f32.mrb[0].mxu0
  %v2657 = vadd.f32 %v2368, %v2656
  %v2658 = vpop.f32.mrb[0].mxu0
  %2659 = vmatprep.mubr.bf16.mxu0 %v1229
  %2660 = vmatmul.mubr.bf16.gmra.mrb[0].mxu0 %v1228
  %v2661 = vpop.f32.mrb[0].mxu0
  %v2662 = vadd.f32 %v2373, %v2661
  %v2663 = vpop.f32.mrb[0].mxu0
  %v2664 = vpop.f32.mrb[0].mxu0
  %v2665 = vadd.f32 %v2376, %v2664
  %v2666 = vpop.f32.mrb[0].mxu0
  %2667 = vmatprep.mubr.bf16.mxu0 %v1236
  %2668 = vmatmul.mubr.bf16.gmra.mrb[0].mxu0 %v1235
  %v2669 = vpop.f32.mrb[0].mxu0
  %v2670 = vadd.f32 %v2381, %v2669
  %v2671 = vpop.f32.mrb[0].mxu0
  %v2672 = vpop.f32.mrb[0].mxu0
  %v2673 = vadd.f32 %v2384, %v2672
  %v2674 = vpop.f32.mrb[0].mxu0
  %2675 = vmatprep.mubr.bf16.mxu0 %v1243
  %2676 = vmatmul.mubr.bf16.gmra.mrb[0].mxu0 %v1242
  %v2677 = vpop.f32.mrb[0].mxu0
  %v2678 = vadd.f32 %v2389, %v2677
  %v2679 = vpop.f32.mrb[0].mxu0
  %v2680 = vpop.f32.mrb[0].mxu0
  %v2681 = vadd.f32 %v2392, %v2680
  %v2682 = vpop.f32.mrb[0].mxu0
  %2683 = vmatprep.mubr.bf16.mxu0 %v1250
  %2684 = vmatmul.mubr.bf16.gmra.mrb[0].mxu0 %v1249
  %v2685 = vpop.f32.mrb[0].mxu0
  %v2686 = vadd.f32 %v2397, %v2685
  %v2687 = vpop.f32.mrb[0].mxu0
  %v2688 = vpop.f32.mrb[0].mxu0
  %v2689 = vadd.f32 %v2400, %v2688
  %v2690 = vpop.f32.mrb[0].mxu0
  %2691 = vmatprep.mubr.bf16.mxu0 %v1257
  %2692 = vmatmul.mubr.bf16.gmra.mrb[0].mxu0 %v1256
  %v2693 = vpop.f32.mrb[0].mxu0
  %v2694 = vadd.f32 %v2405, %v2693
  %v2695 = vpop.f32.mrb[0].mxu0
  %v2696 = vpop.f32.mrb[0].mxu0
  %v2697 = vadd.f32 %v2408, %v2696
  %v2698 = vpop.f32.mrb[0].mxu0
  %2699 = vmatprep.mubr.bf16.mxu0 %v1264
  %2700 = vmatmul.mubr.bf16.gmra.mrb[0].mxu0 %v1263
  %v2701 = vpop.f32.mrb[0].mxu0
  %v2702 = vadd.f32 %v2413, %v2701
  %v2703 = vpop.f32.mrb[0].mxu0
  %v2704 = vpop.f32.mrb[0].mxu0
  %v2705 = vadd.f32 %v2416, %v2704
  %v2706 = vpop.f32.mrb[0].mxu0
  %2707 = vmatprep.mubr.bf16.mxu0 %v1271
  %2708 = vmatmul.mubr.bf16.gmra.mrb[0].mxu0 %v1270
  %v2709 = vpop.f32.mrb[0].mxu0
  %v2710 = vadd.f32 %v2421, %v2709
  %v2711 = vpop.f32.mrb[0].mxu0
  %v2712 = vpop.f32.mrb[0].mxu0
  %v2713 = vadd.f32 %v2424, %v2712
  %v2714 = vpop.f32.mrb[0].mxu0
  %2715 = vmatprep.mubr.bf16.mxu0 %v1278
  %2716 = vmatmul.mubr.bf16.gmra.mrb[0].mxu0 %v1277
  %v2717 = vpop.f32.mrb[0].mxu0
  %v2718 = vadd.f32 %v2429, %v2717
  %v2719 = vpop.f32.mrb[0].mxu0
  %v2720 = vpop.f32.mrb[0].mxu0
  %v2721 = vadd.f32 %v2432, %v2720
  %v2722 = vpop.f32.mrb[0].mxu0
  %2723 = vmatprep.mubr.bf16.mxu0 %v1285
  %2724 = vmatmul.mubr.bf16.gmra.mrb[0].mxu0 %v1284
  %v2725 = vpop.f32.mrb[0].mxu0
  %v2726 = vadd.f32 %v2437, %v2725
  %v2727 = vpop.f32.mrb[0].mxu0
  %v2728 = vpop.f32.mrb[0].mxu0
  %v2729 = vadd.f32 %v2440, %v2728
  %v2730 = vpop.f32.mrb[0].mxu0
  %2731 = vmatprep.mubr.bf16.mxu0 %v1292
  %2732 = vmatmul.mubr.bf16.gmra.mrb[0].mxu0 %v1291
  %v2733 = vpop.f32.mrb[0].mxu0
  %v2734 = vadd.f32 %v2445, %v2733
  %v2735 = vpop.f32.mrb[0].mxu0
  %v2736 = vpop.f32.mrb[0].mxu0
  %v2737 = vadd.f32 %v2448, %v2736
  %v2738 = vpop.f32.mrb[0].mxu0
  %2739 = vmatprep.mubr.bf16.mxu0 %v1299
  %2740 = vmatmul.mubr.bf16.gmra.mrb[0].mxu0 %v1298
  %v2741 = vpop.f32.mrb[0].mxu0
  %v2742 = vadd.f32 %v2453, %v2741
  %v2743 = vpop.f32.mrb[0].mxu0
  %v2744 = vpop.f32.mrb[0].mxu0
  %v2745 = vadd.f32 %v2456, %v2744
  %v2746 = vpop.f32.mrb[0].mxu0
  %2747 = vmatprep.mubr.bf16.mxu0 %v1306
  %2748 = vmatmul.mubr.bf16.gmra.mrb[0].mxu0 %v1305
  %v2749 = vpop.f32.mrb[0].mxu0
  %v2750 = vadd.f32 %v2461, %v2749
  %v2751 = vpop.f32.mrb[0].mxu0
  %v2752 = vpop.f32.mrb[0].mxu0
  %v2753 = vadd.f32 %v2464, %v2752
  %v2754 = vpop.f32.mrb[0].mxu0
  %2755 = vmatprep.mubr.bf16.mxu0 %v1313
  %2756 = vmatmul.mubr.bf16.gmra.mrb[0].mxu0 %v1312
  %v2757 = vpop.f32.mrb[0].mxu0
  %v2758 = vadd.f32 %v2469, %v2757
  %v2759 = vpop.f32.mrb[0].mxu0
  %v2760 = vpop.f32.mrb[0].mxu0
  %v2761 = vadd.f32 %v2472, %v2760
  %v2762 = vpop.f32.mrb[0].mxu0
  %2763 = vmatprep.mubr.bf16.mxu0 %v1320
  %2764 = vmatmul.mubr.bf16.gmra.mrb[0].mxu0 %v1319
  %v2765 = vpop.f32.mrb[0].mxu0
  %v2766 = vadd.f32 %v2477, %v2765
  %v2767 = vpop.f32.mrb[0].mxu0
  %v2768 = vpop.f32.mrb[0].mxu0
  %v2769 = vadd.f32 %v2480, %v2768
  %v2770 = vpop.f32.mrb[0].mxu0
  %2771 = vdwg.mxu0
  %2772 = vmatprep.subr.bf16.mxu0 0
  %2773 = vmatpush1.bf16.msra.mxu0 %v1758
  %2774 = vmatprep.subr.bf16.mxu0 0
  %2775 = vmatpush1.bf16.msra.mxu0 0
  %2776 = vmatprep.subr.bf16.mxu0 0
  %2777 = vmatpush1.bf16.msra.mxu0 0
  %2778 = vmatprep.subr.bf16.mxu0 0
  %2779 = vmatpush1.bf16.msra.mxu0 0
  %2780 = vmatprep.subr.bf16.mxu0 0
  %2781 = vmatpush1.bf16.msra.mxu0 0
  %2782 = vmatprep.subr.bf16.mxu0 0
  %2783 = vmatpush1.bf16.msra.mxu0 0
  %2784 = vmatprep.subr.bf16.mxu0 0
  %2785 = vmatpush1.bf16.msra.mxu0 0
  %2786 = vmatprep.subr.bf16.mxu0 0
  %2787 = vmatpush1.bf16.msra.mxu0 0
  %2788 = vmatprep.subr.bf16.mxu0 0
  %2789 = vmatpush1.bf16.msra.mxu0 0
  %2790 = vmatprep.subr.bf16.mxu0 0
  %2791 = vmatpush1.bf16.msra.mxu0 0
  %2792 = vmatprep.subr.bf16.mxu0 0
  %2793 = vmatpush1.bf16.msra.mxu0 0
  %2794 = vmatprep.subr.bf16.mxu0 0
  %2795 = vmatpush1.bf16.msra.mxu0 0
  %2796 = vmatprep.subr.bf16.mxu0 0
  %2797 = vmatpush1.bf16.msra.mxu0 0
  %2798 = vmatprep.subr.bf16.mxu0 0
  %2799 = vmatpush1.bf16.msra.mxu0 0
  %2800 = vmatprep.subr.bf16.mxu0 0
  %2801 = vmatpush1.bf16.msra.mxu0 0
  %2802 = vmatprep.subr.bf16.mxu0 0
  %2803 = vmatpush1.bf16.msra.mxu0 0
  %2804 = vmatprep.mubr.bf16.mxu0 0
  %2805 = vmatmul.mubr.bf16.gmra.mrb[0].mxu0 %v1810
  %v2806 = vpop.f32.mrb[0].mxu0
  %v2807 = vadd.f32 %v2518, %v2806
  %v2808 = vpop.f32.mrb[0].mxu0
  %v2809 = vpop.f32.mrb[0].mxu0
  %v2810 = vadd.f32 %v2521, %v2809
  %v2811 = vpop.f32.mrb[0].mxu0
  %2812 = vmatprep.mubr.bf16.mxu0 0
  %2813 = vmatmul.mubr.bf16.gmra.mrb[0].mxu0 %v1813
  %v2814 = vpop.f32.mrb[0].mxu0
  %v2815 = vadd.f32 %v2526, %v2814
  %v2816 = vpop.f32.mrb[0].mxu0
  %v2817 = vpop.f32.mrb[0].mxu0
  %v2818 = vadd.f32 %v2529, %v2817
  %v2819 = vpop.f32.mrb[0].mxu0
  %2820 = vmatprep.mubr.bf16.mxu0 0
  %2821 = vmatmul.mubr.bf16.gmra.mrb[0].mxu0 %v1816
  %v2822 = vpop.f32.mrb[0].mxu0
  %v2823 = vadd.f32 %v2534, %v2822
  %v2824 = vpop.f32.mrb[0].mxu0
  %v2825 = vpop.f32.mrb[0].mxu0
  %v2826 = vadd.f32 %v2537, %v2825
  %v2827 = vpop.f32.mrb[0].mxu0
  %2828 = vmatprep.mubr.bf16.mxu0 0
  %2829 = vmatmul.mubr.bf16.gmra.mrb[0].mxu0 %v1819
  %v2830 = vpop.f32.mrb[0].mxu0
  %v2831 = vadd.f32 %v2542, %v2830
  %v2832 = vpop.f32.mrb[0].mxu0
  %v2833 = vpop.f32.mrb[0].mxu0
  %v2834 = vadd.f32 %v2545, %v2833
  %v2835 = vpop.f32.mrb[0].mxu0
  %2836 = vmatprep.mubr.bf16.mxu0 0
  %2837 = vmatmul.mubr.bf16.gmra.mrb[0].mxu0 %v1822
  %v2838 = vpop.f32.mrb[0].mxu0
  %v2839 = vadd.f32 %v2550, %v2838
  %v2840 = vpop.f32.mrb[0].mxu0
  %v2841 = vpop.f32.mrb[0].mxu0
  %v2842 = vadd.f32 %v2553, %v2841
  %v2843 = vpop.f32.mrb[0].mxu0
  %2844 = vmatprep.mubr.bf16.mxu0 0
  %2845 = vmatmul.mubr.bf16.gmra.mrb[0].mxu0 %v1825
  %v2846 = vpop.f32.mrb[0].mxu0
  %v2847 = vadd.f32 %v2558, %v2846
  %v2848 = vpop.f32.mrb[0].mxu0
  %v2849 = vpop.f32.mrb[0].mxu0
  %v2850 = vadd.f32 %v2561, %v2849
  %v2851 = vpop.f32.mrb[0].mxu0
  %2852 = vmatprep.mubr.bf16.mxu0 0
  %2853 = vmatmul.mubr.bf16.gmra.mrb[0].mxu0 %v1828
  %v2854 = vpop.f32.mrb[0].mxu0
  %v2855 = vadd.f32 %v2566, %v2854
  %v2856 = vpop.f32.mrb[0].mxu0
  %v2857 = vpop.f32.mrb[0].mxu0
  %v2858 = vadd.f32 %v2569, %v2857
  %v2859 = vpop.f32.mrb[0].mxu0
  %2860 = vmatprep.mubr.bf16.mxu0 0
  %2861 = vmatmul.mubr.bf16.gmra.mrb[0].mxu0 %v1831
  %v2862 = vpop.f32.mrb[0].mxu0
  %v2863 = vadd.f32 %v2574, %v2862
  %v2864 = vpop.f32.mrb[0].mxu0
  %v2865 = vpop.f32.mrb[0].mxu0
  %v2866 = vadd.f32 %v2577, %v2865
  %v2867 = vpop.f32.mrb[0].mxu0
  %2868 = vmatprep.mubr.bf16.mxu0 0
  %2869 = vmatmul.mubr.bf16.gmra.mrb[0].mxu0 %v1834
  %v2870 = vpop.f32.mrb[0].mxu0
  %v2871 = vadd.f32 %v2582, %v2870
  %v2872 = vpop.f32.mrb[0].mxu0
  %v2873 = vpop.f32.mrb[0].mxu0
  %v2874 = vadd.f32 %v2585, %v2873
  %v2875 = vpop.f32.mrb[0].mxu0
  %2876 = vmatprep.mubr.bf16.mxu0 0
  %2877 = vmatmul.mubr.bf16.gmra.mrb[0].mxu0 %v1837
  %v2878 = vpop.f32.mrb[0].mxu0
  %v2879 = vadd.f32 %v2590, %v2878
  %v2880 = vpop.f32.mrb[0].mxu0
  %v2881 = vpop.f32.mrb[0].mxu0
  %v2882 = vadd.f32 %v2593, %v2881
  %v2883 = vpop.f32.mrb[0].mxu0
  %2884 = vmatprep.mubr.bf16.mxu0 0
  %2885 = vmatmul.mubr.bf16.gmra.mrb[0].mxu0 %v1840
  %v2886 = vpop.f32.mrb[0].mxu0
  %v2887 = vadd.f32 %v2598, %v2886
  %v2888 = vpop.f32.mrb[0].mxu0
  %v2889 = vpop.f32.mrb[0].mxu0
  %v2890 = vadd.f32 %v2601, %v2889
  %v2891 = vpop.f32.mrb[0].mxu0
  %2892 = vmatprep.mubr.bf16.mxu0 0
  %2893 = vmatmul.mubr.bf16.gmra.mrb[0].mxu0 %v1843
  %v2894 = vpop.f32.mrb[0].mxu0
  %v2895 = vadd.f32 %v2606, %v2894
  %v2896 = vpop.f32.mrb[0].mxu0
  %v2897 = vpop.f32.mrb[0].mxu0
  %v2898 = vadd.f32 %v2609, %v2897
  %v2899 = vpop.f32.mrb[0].mxu0
  %2900 = vmatprep.mubr.bf16.mxu0 0
  %2901 = vmatmul.mubr.bf16.gmra.mrb[0].mxu0 %v1846
  %v2902 = vpop.f32.mrb[0].mxu0
  %v2903 = vadd.f32 %v2614, %v2902
  %v2904 = vpop.f32.mrb[0].mxu0
  %v2905 = vpop.f32.mrb[0].mxu0
  %v2906 = vadd.f32 %v2617, %v2905
  %v2907 = vpop.f32.mrb[0].mxu0
  %2908 = vmatprep.mubr.bf16.mxu0 0
  %2909 = vmatmul.mubr.bf16.gmra.mrb[0].mxu0 %v1849
  %v2910 = vpop.f32.mrb[0].mxu0
  %v2911 = vadd.f32 %v2622, %v2910
  %v2912 = vpop.f32.mrb[0].mxu0
  %v2913 = vpop.f32.mrb[0].mxu0
  %v2914 = vadd.f32 %v2625, %v2913
  %v2915 = vpop.f32.mrb[0].mxu0
  %2916 = vmatprep.mubr.bf16.mxu0 0
  %2917 = vmatmul.mubr.bf16.gmra.mrb[0].mxu0 %v1852
  %v2918 = vpop.f32.mrb[0].mxu0
  %v2919 = vadd.f32 %v2630, %v2918
  %v2920 = vpop.f32.mrb[0].mxu0
  %v2921 = vpop.f32.mrb[0].mxu0
  %v2922 = vadd.f32 %v2633, %v2921
  %v2923 = vpop.f32.mrb[0].mxu0
  %2924 = vmatprep.mubr.bf16.mxu0 0
  %2925 = vmatmul.mubr.bf16.gmra.mrb[0].mxu0 %v1855
  %v2926 = vpop.f32.mrb[0].mxu0
  %v2927 = vadd.f32 %v2638, %v2926
  %v2928 = vpop.f32.mrb[0].mxu0
  %v2929 = vpop.f32.mrb[0].mxu0
  %v2930 = vadd.f32 %v2641, %v2929
  %v2931 = vpop.f32.mrb[0].mxu0
  %2932 = vmatprep.mubr.bf16.mxu0 0
  %2933 = vmatmul.mubr.bf16.gmra.mrb[0].mxu0 %v1858
  %v2934 = vpop.f32.mrb[0].mxu0
  %v2935 = vadd.f32 %v2646, %v2934
  %v2936 = vpop.f32.mrb[0].mxu0
  %v2937 = vpop.f32.mrb[0].mxu0
  %v2938 = vadd.f32 %v2649, %v2937
  %v2939 = vpop.f32.mrb[0].mxu0
  %2940 = vmatprep.mubr.bf16.mxu0 0
  %2941 = vmatmul.mubr.bf16.gmra.mrb[0].mxu0 %v1861
  %v2942 = vpop.f32.mrb[0].mxu0
  %v2943 = vadd.f32 %v2654, %v2942
  %v2944 = vpop.f32.mrb[0].mxu0
  %v2945 = vpop.f32.mrb[0].mxu0
  %v2946 = vadd.f32 %v2657, %v2945
  %v2947 = vpop.f32.mrb[0].mxu0
  %2948 = vmatprep.mubr.bf16.mxu0 0
  %2949 = vmatmul.mubr.bf16.gmra.mrb[0].mxu0 %v1864
  %v2950 = vpop.f32.mrb[0].mxu0
  %v2951 = vadd.f32 %v2662, %v2950
  %v2952 = vpop.f32.mrb[0].mxu0
  %v2953 = vpop.f32.mrb[0].mxu0
  %v2954 = vadd.f32 %v2665, %v2953
  %v2955 = vpop.f32.mrb[0].mxu0
  %2956 = vmatprep.mubr.bf16.mxu0 0
  %2957 = vmatmul.mubr.bf16.gmra.mrb[0].mxu0 %v1867
  %v2958 = vpop.f32.mrb[0].mxu0
  %v2959 = vadd.f32 %v2670, %v2958
  %v2960 = vpop.f32.mrb[0].mxu0
  %v2961 = vpop.f32.mrb[0].mxu0
  %v2962 = vadd.f32 %v2673, %v2961
  %v2963 = vpop.f32.mrb[0].mxu0
  %2964 = vmatprep.mubr.bf16.mxu0 0
  %2965 = vmatmul.mubr.bf16.gmra.mrb[0].mxu0 %v1870
  %v2966 = vpop.f32.mrb[0].mxu0
  %v2967 = vadd.f32 %v2678, %v2966
  %v2968 = vpop.f32.mrb[0].mxu0
  %v2969 = vpop.f32.mrb[0].mxu0
  %v2970 = vadd.f32 %v2681, %v2969
  %v2971 = vpop.f32.mrb[0].mxu0
  %2972 = vmatprep.mubr.bf16.mxu0 0
  %2973 = vmatmul.mubr.bf16.gmra.mrb[0].mxu0 %v1873
  %v2974 = vpop.f32.mrb[0].mxu0
  %v2975 = vadd.f32 %v2686, %v2974
  %v2976 = vpop.f32.mrb[0].mxu0
  %v2977 = vpop.f32.mrb[0].mxu0
  %v2978 = vadd.f32 %v2689, %v2977
  %v2979 = vpop.f32.mrb[0].mxu0
  %2980 = vmatprep.mubr.bf16.mxu0 0
  %2981 = vmatmul.mubr.bf16.gmra.mrb[0].mxu0 %v1876
  %v2982 = vpop.f32.mrb[0].mxu0
  %v2983 = vadd.f32 %v2694, %v2982
  %v2984 = vpop.f32.mrb[0].mxu0
  %v2985 = vpop.f32.mrb[0].mxu0
  %v2986 = vadd.f32 %v2697, %v2985
  %v2987 = vpop.f32.mrb[0].mxu0
  %2988 = vmatprep.mubr.bf16.mxu0 0
  %2989 = vmatmul.mubr.bf16.gmra.mrb[0].mxu0 %v1879
  %v2990 = vpop.f32.mrb[0].mxu0
  %v2991 = vadd.f32 %v2702, %v2990
  %v2992 = vpop.f32.mrb[0].mxu0
  %v2993 = vpop.f32.mrb[0].mxu0
  %v2994 = vadd.f32 %v2705, %v2993
  %v2995 = vpop.f32.mrb[0].mxu0
  %2996 = vmatprep.mubr.bf16.mxu0 0
  %2997 = vmatmul.mubr.bf16.gmra.mrb[0].mxu0 %v1882
  %v2998 = vpop.f32.mrb[0].mxu0
  %v2999 = vadd.f32 %v2710, %v2998
  %v3000 = vpop.f32.mrb[0].mxu0
  %v3001 = vpop.f32.mrb[0].mxu0
  %v3002 = vadd.f32 %v2713, %v3001
  %v3003 = vpop.f32.mrb[0].mxu0
  %3004 = vmatprep.mubr.bf16.mxu0 0
  %3005 = vmatmul.mubr.bf16.gmra.mrb[0].mxu0 %v1885
  %v3006 = vpop.f32.mrb[0].mxu0
  %v3007 = vadd.f32 %v2718, %v3006
  %v3008 = vpop.f32.mrb[0].mxu0
  %v3009 = vpop.f32.mrb[0].mxu0
  %v3010 = vadd.f32 %v2721, %v3009
  %v3011 = vpop.f32.mrb[0].mxu0
  %3012 = vmatprep.mubr.bf16.mxu0 0
  %3013 = vmatmul.mubr.bf16.gmra.mrb[0].mxu0 %v1888
  %v3014 = vpop.f32.mrb[0].mxu0
  %v3015 = vadd.f32 %v2726, %v3014
  %v3016 = vpop.f32.mrb[0].mxu0
  %v3017 = vpop.f32.mrb[0].mxu0
  %v3018 = vadd.f32 %v2729, %v3017
  %v3019 = vpop.f32.mrb[0].mxu0
  %3020 = vmatprep.mubr.bf16.mxu0 0
  %3021 = vmatmul.mubr.bf16.gmra.mrb[0].mxu0 %v1891
  %v3022 = vpop.f32.mrb[0].mxu0
  %v3023 = vadd.f32 %v2734, %v3022
  %v3024 = vpop.f32.mrb[0].mxu0
  %v3025 = vpop.f32.mrb[0].mxu0
  %v3026 = vadd.f32 %v2737, %v3025
  %v3027 = vpop.f32.mrb[0].mxu0
  %3028 = vmatprep.mubr.bf16.mxu0 0
  %3029 = vmatmul.mubr.bf16.gmra.mrb[0].mxu0 %v1894
  %v3030 = vpop.f32.mrb[0].mxu0
  %v3031 = vadd.f32 %v2742, %v3030
  %v3032 = vpop.f32.mrb[0].mxu0
  %v3033 = vpop.f32.mrb[0].mxu0
  %v3034 = vadd.f32 %v2745, %v3033
  %v3035 = vpop.f32.mrb[0].mxu0
  %3036 = vmatprep.mubr.bf16.mxu0 0
  %3037 = vmatmul.mubr.bf16.gmra.mrb[0].mxu0 %v1897
  %v3038 = vpop.f32.mrb[0].mxu0
  %v3039 = vadd.f32 %v2750, %v3038
  %v3040 = vpop.f32.mrb[0].mxu0
  %v3041 = vpop.f32.mrb[0].mxu0
  %v3042 = vadd.f32 %v2753, %v3041
  %v3043 = vpop.f32.mrb[0].mxu0
  %3044 = vmatprep.mubr.bf16.mxu0 0
  %3045 = vmatmul.mubr.bf16.gmra.mrb[0].mxu0 %v1900
  %v3046 = vpop.f32.mrb[0].mxu0
  %v3047 = vadd.f32 %v2758, %v3046
  %v3048 = vpop.f32.mrb[0].mxu0
  %v3049 = vpop.f32.mrb[0].mxu0
  %v3050 = vadd.f32 %v2761, %v3049
  %v3051 = vpop.f32.mrb[0].mxu0
  %3052 = vmatprep.mubr.bf16.mxu0 0
  %3053 = vmatmul.mubr.bf16.gmra.mrb[0].mxu0 %v1903
  %v3054 = vpop.f32.mrb[0].mxu0
  %v3055 = vadd.f32 %v2766, %v3054
  %v3056 = vpop.f32.mrb[0].mxu0
  %v3057 = vpop.f32.mrb[0].mxu0
  %v3058 = vadd.f32 %v2769, %v3057
  %v3059 = vpop.f32.mrb[0].mxu0
  %3060 = vdwg.mxu0
  %v3061 = vmax.f32 %v2807, 0.0
  %v3062 = vmax.f32 %v2810, 0.0
  %v3063 = vmax.f32 %v2815, 0.0
  %v3064 = vmax.f32 %v2818, 0.0
  %v3065 = vmax.f32 %v2823, 0.0
  %v3066 = vmax.f32 %v2826, 0.0
  %v3067 = vmax.f32 %v2831, 0.0
  %v3068 = vmax.f32 %v2834, 0.0
  %v3069 = vmax.f32 %v2839, 0.0
  %v3070 = vmax.f32 %v2842, 0.0
  %v3071 = vmax.f32 %v2847, 0.0
  %v3072 = vmax.f32 %v2850, 0.0
  %v3073 = vmax.f32 %v2855, 0.0
  %v3074 = vmax.f32 %v2858, 0.0
  %v3075 = vmax.f32 %v2863, 0.0
  %v3076 = vmax.f32 %v2866, 0.0
  %v3077 = vmax.f32 %v2871, 0.0
  %v3078 = vmax.f32 %v2874, 0.0
  %v3079 = vmax.f32 %v2879, 0.0
  %v3080 = vmax.f32 %v2882, 0.0
  %v3081 = vmax.f32 %v2887, 0.0
  %v3082 = vmax.f32 %v2890, 0.0
  %v3083 = vmax.f32 %v2895, 0.0
  %v3084 = vmax.f32 %v2898, 0.0
  %v3085 = vmax.f32 %v2903, 0.0
  %v3086 = vmax.f32 %v2906, 0.0
  %v3087 = vmax.f32 %v2911, 0.0
  %v3088 = vmax.f32 %v2914, 0.0
  %v3089 = vmax.f32 %v2919, 0.0
  %v3090 = vmax.f32 %v2922, 0.0
  %v3091 = vmax.f32 %v2927, 0.0
  %v3092 = vmax.f32 %v2930, 0.0
  %v3093 = vmax.f32 %v2935, 0.0
  %v3094 = vmax.f32 %v2938, 0.0
  %v3095 = vmax.f32 %v2943, 0.0
  %v3096 = vmax.f32 %v2946, 0.0
  %v3097 = vmax.f32 %v2951, 0.0
  %v3098 = vmax.f32 %v2954, 0.0
  %v3099 = vmax.f32 %v2959, 0.0
  %v3100 = vmax.f32 %v2962, 0.0
  %v3101 = vmax.f32 %v2967, 0.0
  %v3102 = vmax.f32 %v2970, 0.0
  %v3103 = vmax.f32 %v2975, 0.0
  %v3104 = vmax.f32 %v2978, 0.0
  %v3105 = vmax.f32 %v2983, 0.0
  %v3106 = vmax.f32 %v2986, 0.0
  %v3107 = vmax.f32 %v2991, 0.0
  %v3108 = vmax.f32 %v2994, 0.0
  %v3109 = vmax.f32 %v2999, 0.0
  %v3110 = vmax.f32 %v3002, 0.0
  %v3111 = vmax.f32 %v3007, 0.0
  %v3112 = vmax.f32 %v3010, 0.0
  %v3113 = vmax.f32 %v3015, 0.0
  %v3114 = vmax.f32 %v3018, 0.0
  %v3115 = vmax.f32 %v3023, 0.0
  %v3116 = vmax.f32 %v3026, 0.0
  %v3117 = vmax.f32 %v3031, 0.0
  %v3118 = vmax.f32 %v3034, 0.0
  %v3119 = vmax.f32 %v3039, 0.0
  %v3120 = vmax.f32 %v3042, 0.0
  %v3121 = vmax.f32 %v3047, 0.0
  %v3122 = vmax.f32 %v3050, 0.0
  %v3123 = vmax.f32 %v3055, 0.0
  %v3124 = vmax.f32 %v3058, 0.0
  %v3125 = vpack.c.bf16 %v3062, %v3061
  %v3126 = vpack.c.bf16 %v3064, %v3063
  %v3127 = vpack.c.bf16 %v3066, %v3065
  %v3128 = vpack.c.bf16 %v3068, %v3067
  %v3129 = vpack.c.bf16 %v3070, %v3069
  %v3130 = vpack.c.bf16 %v3072, %v3071
  %v3131 = vpack.c.bf16 %v3074, %v3073
  %v3132 = vpack.c.bf16 %v3076, %v3075
  %v3133 = vpack.c.bf16 %v3078, %v3077
  %v3134 = vpack.c.bf16 %v3080, %v3079
  %v3135 = vpack.c.bf16 %v3082, %v3081
  %v3136 = vpack.c.bf16 %v3084, %v3083
  %v3137 = vpack.c.bf16 %v3086, %v3085
  %v3138 = vpack.c.bf16 %v3088, %v3087
  %v3139 = vpack.c.bf16 %v3090, %v3089
  %v3140 = vpack.c.bf16 %v3092, %v3091
  %v3141 = vpack.c.bf16 %v3094, %v3093
  %v3142 = vpack.c.bf16 %v3096, %v3095
  %v3143 = vpack.c.bf16 %v3098, %v3097
  %v3144 = vpack.c.bf16 %v3100, %v3099
  %v3145 = vpack.c.bf16 %v3102, %v3101
  %v3146 = vpack.c.bf16 %v3104, %v3103
  %v3147 = vpack.c.bf16 %v3106, %v3105
  %v3148 = vpack.c.bf16 %v3108, %v3107
  %v3149 = vpack.c.bf16 %v3110, %v3109
  %v3150 = vpack.c.bf16 %v3112, %v3111
  %v3151 = vpack.c.bf16 %v3114, %v3113
  %v3152 = vpack.c.bf16 %v3116, %v3115
  %v3153 = vpack.c.bf16 %v3118, %v3117
  %v3154 = vpack.c.bf16 %v3120, %v3119
  %v3155 = vpack.c.bf16 %v3122, %v3121
  %v3156 = vpack.c.bf16 %v3124, %v3123
  %v3157 = vld [vmem:[%s3] sm:$0xf]
  %v3158 = vld [vmem:[%s3 + $0x4] sm:$0x1]
  %v3159 = vld [vmem:[%s4] sm:$0x1]
  %v3161 = vlaneseq
  %v3162 = vshrl.u32 %v3161, 7
  %v3163 = vsub.s32 0, %v3162
  %v3164 = vrot.slane %v3159, %v3163
  %v3168 = vunpack.c.l.b16 %v3157
  %v3169 = vunpack.c.l.b16 %v3158
  %v3170 = vpack.c.b16 %v3169, %v3168
  %vm3171 = vcmask 80896
  %v3173 = vsel %vm3171, %v3125, 0
  %v3176 = vsel %vm3171, %v3126, 0
  %v3179 = vsel %vm3171, %v3127, 0
  %v3182 = vsel %vm3171, %v3128, 0
  %v3185 = vsel %vm3171, %v3129, 0
  %v3188 = vsel %vm3171, %v3130, 0
  %v3191 = vsel %vm3171, %v3131, 0
  %v3194 = vsel %vm3171, %v3132, 0
  %v3197 = vsel %vm3171, %v3133, 0
  %v3200 = vsel %vm3171, %v3134, 0
  %v3203 = vsel %vm3171, %v3135, 0
  %v3206 = vsel %vm3171, %v3136, 0
  %v3209 = vsel %vm3171, %v3137, 0
  %v3212 = vsel %vm3171, %v3138, 0
  %v3215 = vsel %vm3171, %v3139, 0
  %v3218 = vsel %vm3171, %v3140, 0
  %v3221 = vsel %vm3171, %v3141, 0
  %v3224 = vsel %vm3171, %v3142, 0
  %v3227 = vsel %vm3171, %v3143, 0
  %v3230 = vsel %vm3171, %v3144, 0
  %v3233 = vsel %vm3171, %v3145, 0
  %v3236 = vsel %vm3171, %v3146, 0
  %v3239 = vsel %vm3171, %v3147, 0
  %v3242 = vsel %vm3171, %v3148, 0
  %v3245 = vsel %vm3171, %v3149, 0
  %v3248 = vsel %vm3171, %v3150, 0
  %v3251 = vsel %vm3171, %v3151, 0
  %v3254 = vsel %vm3171, %v3152, 0
  %v3257 = vsel %vm3171, %v3153, 0
  %v3260 = vsel %vm3171, %v3154, 0
  %v3263 = vsel %vm3171, %v3155, 0
  %v3266 = vsel %vm3171, %v3156, 0
  %vm3268 = vcmask 1044480
  %v3270 = vsel %vm3268, %v3170, 0
  %3272 = vmatprep.subr.bf16.mxu0 0
  %3273 = vmatpush1.bf16.msra.mxu0 %v3270
  %3274 = vmatprep.subr.bf16.mxu0 0
  %3275 = vmatpush1.bf16.msra.mxu0 0
  %3276 = vmatprep.subr.bf16.mxu0 0
  %3277 = vmatpush1.bf16.msra.mxu0 0
  %3278 = vmatprep.subr.bf16.mxu0 0
  %3279 = vmatpush1.bf16.msra.mxu0 0
  %3280 = vmatprep.subr.bf16.mxu0 0
  %3281 = vmatpush1.bf16.msra.mxu0 0
  %3282 = vmatprep.subr.bf16.mxu0 0
  %3283 = vmatpush1.bf16.msra.mxu0 0
  %3284 = vmatprep.subr.bf16.mxu0 0
  %3285 = vmatpush1.bf16.msra.mxu0 0
  %3286 = vmatprep.subr.bf16.mxu0 0
  %3287 = vmatpush1.bf16.msra.mxu0 0
  %3288 = vmatprep.subr.bf16.mxu0 0
  %3289 = vmatpush1.bf16.msra.mxu0 0
  %3290 = vmatprep.subr.bf16.mxu0 0
  %3291 = vmatpush1.bf16.msra.mxu0 0
  %3292 = vmatprep.subr.bf16.mxu0 0
  %3293 = vmatpush1.bf16.msra.mxu0 0
  %3294 = vmatprep.subr.bf16.mxu0 0
  %3295 = vmatpush1.bf16.msra.mxu0 0
  %3296 = vmatprep.subr.bf16.mxu0 0
  %3297 = vmatpush1.bf16.msra.mxu0 0
  %3298 = vmatprep.subr.bf16.mxu0 0
  %3299 = vmatpush1.bf16.msra.mxu0 0
  %3300 = vmatprep.subr.bf16.mxu0 0
  %3301 = vmatpush1.bf16.msra.mxu0 0
  %3302 = vmatprep.subr.bf16.mxu0 0
  %3303 = vmatpush1.bf16.msra.mxu0 0
  %3304 = vmatprep.mubr.bf16.mxu0 0
  %3305 = vmatmul.mubr.bf16.gmra.mrb[0].mxu0 %v3173
  %v3306 = vpop.f32.mrb[0].mxu0
  %v3307 = vadd.f32 %v3164, %v3306
  %v3308 = vpop.f32.mrb[0].mxu0
  %v3309 = vpop.f32.mrb[0].mxu0
  %v3310 = vadd.f32 %v3164, %v3309
  %v3311 = vpop.f32.mrb[0].mxu0
  %3312 = vmatprep.mubr.bf16.mxu0 0
  %3313 = vmatmul.mubr.bf16.gmra.mrb[0].mxu0 %v3176
  %v3314 = vpop.f32.mrb[0].mxu0
  %v3315 = vadd.f32 %v3164, %v3314
  %v3316 = vpop.f32.mrb[0].mxu0
  %v3317 = vpop.f32.mrb[0].mxu0
  %v3318 = vadd.f32 %v3164, %v3317
  %v3319 = vpop.f32.mrb[0].mxu0
  %3320 = vmatprep.mubr.bf16.mxu0 0
  %3321 = vmatmul.mubr.bf16.gmra.mrb[0].mxu0 %v3179
  %v3322 = vpop.f32.mrb[0].mxu0
  %v3323 = vadd.f32 %v3164, %v3322
  %v3324 = vpop.f32.mrb[0].mxu0
  %v3325 = vpop.f32.mrb[0].mxu0
  %v3326 = vadd.f32 %v3164, %v3325
  %v3327 = vpop.f32.mrb[0].mxu0
  %3328 = vmatprep.mubr.bf16.mxu0 0
  %3329 = vmatmul.mubr.bf16.gmra.mrb[0].mxu0 %v3182
  %v3330 = vpop.f32.mrb[0].mxu0
  %v3331 = vadd.f32 %v3164, %v3330
  %v3332 = vpop.f32.mrb[0].mxu0
  %v3333 = vpop.f32.mrb[0].mxu0
  %v3334 = vadd.f32 %v3164, %v3333
  %v3335 = vpop.f32.mrb[0].mxu0
  %3336 = vmatprep.mubr.bf16.mxu0 0
  %3337 = vmatmul.mubr.bf16.gmra.mrb[0].mxu0 %v3185
  %v3338 = vpop.f32.mrb[0].mxu0
  %v3339 = vadd.f32 %v3164, %v3338
  %v3340 = vpop.f32.mrb[0].mxu0
  %v3341 = vpop.f32.mrb[0].mxu0
  %v3342 = vadd.f32 %v3164, %v3341
  %v3343 = vpop.f32.mrb[0].mxu0
  %3344 = vmatprep.mubr.bf16.mxu0 0
  %3345 = vmatmul.mubr.bf16.gmra.mrb[0].mxu0 %v3188
  %v3346 = vpop.f32.mrb[0].mxu0
  %v3347 = vadd.f32 %v3164, %v3346
  %v3348 = vpop.f32.mrb[0].mxu0
  %v3349 = vpop.f32.mrb[0].mxu0
  %v3350 = vadd.f32 %v3164, %v3349
  %v3351 = vpop.f32.mrb[0].mxu0
  %3352 = vmatprep.mubr.bf16.mxu0 0
  %3353 = vmatmul.mubr.bf16.gmra.mrb[0].mxu0 %v3191
  %v3354 = vpop.f32.mrb[0].mxu0
  %v3355 = vadd.f32 %v3164, %v3354
  %v3356 = vpop.f32.mrb[0].mxu0
  %v3357 = vpop.f32.mrb[0].mxu0
  %v3358 = vadd.f32 %v3164, %v3357
  %v3359 = vpop.f32.mrb[0].mxu0
  %3360 = vmatprep.mubr.bf16.mxu0 0
  %3361 = vmatmul.mubr.bf16.gmra.mrb[0].mxu0 %v3194
  %v3362 = vpop.f32.mrb[0].mxu0
  %v3363 = vadd.f32 %v3164, %v3362
  %v3364 = vpop.f32.mrb[0].mxu0
  %v3365 = vpop.f32.mrb[0].mxu0
  %v3366 = vadd.f32 %v3164, %v3365
  %v3367 = vpop.f32.mrb[0].mxu0
  %3368 = vmatprep.mubr.bf16.mxu0 0
  %3369 = vmatmul.mubr.bf16.gmra.mrb[0].mxu0 %v3197
  %v3370 = vpop.f32.mrb[0].mxu0
  %v3371 = vadd.f32 %v3164, %v3370
  %v3372 = vpop.f32.mrb[0].mxu0
  %v3373 = vpop.f32.mrb[0].mxu0
  %v3374 = vadd.f32 %v3164, %v3373
  %v3375 = vpop.f32.mrb[0].mxu0
  %3376 = vmatprep.mubr.bf16.mxu0 0
  %3377 = vmatmul.mubr.bf16.gmra.mrb[0].mxu0 %v3200
  %v3378 = vpop.f32.mrb[0].mxu0
  %v3379 = vadd.f32 %v3164, %v3378
  %v3380 = vpop.f32.mrb[0].mxu0
  %v3381 = vpop.f32.mrb[0].mxu0
  %v3382 = vadd.f32 %v3164, %v3381
  %v3383 = vpop.f32.mrb[0].mxu0
  %3384 = vmatprep.mubr.bf16.mxu0 0
  %3385 = vmatmul.mubr.bf16.gmra.mrb[0].mxu0 %v3203
  %v3386 = vpop.f32.mrb[0].mxu0
  %v3387 = vadd.f32 %v3164, %v3386
  %v3388 = vpop.f32.mrb[0].mxu0
  %v3389 = vpop.f32.mrb[0].mxu0
  %v3390 = vadd.f32 %v3164, %v3389
  %v3391 = vpop.f32.mrb[0].mxu0
  %3392 = vmatprep.mubr.bf16.mxu0 0
  %3393 = vmatmul.mubr.bf16.gmra.mrb[0].mxu0 %v3206
  %v3394 = vpop.f32.mrb[0].mxu0
  %v3395 = vadd.f32 %v3164, %v3394
  %v3396 = vpop.f32.mrb[0].mxu0
  %v3397 = vpop.f32.mrb[0].mxu0
  %v3398 = vadd.f32 %v3164, %v3397
  %v3399 = vpop.f32.mrb[0].mxu0
  %3400 = vmatprep.mubr.bf16.mxu0 0
  %3401 = vmatmul.mubr.bf16.gmra.mrb[0].mxu0 %v3209
  %v3402 = vpop.f32.mrb[0].mxu0
  %v3403 = vadd.f32 %v3164, %v3402
  %v3404 = vpop.f32.mrb[0].mxu0
  %v3405 = vpop.f32.mrb[0].mxu0
  %v3406 = vadd.f32 %v3164, %v3405
  %v3407 = vpop.f32.mrb[0].mxu0
  %3408 = vmatprep.mubr.bf16.mxu0 0
  %3409 = vmatmul.mubr.bf16.gmra.mrb[0].mxu0 %v3212
  %v3410 = vpop.f32.mrb[0].mxu0
  %v3411 = vadd.f32 %v3164, %v3410
  %v3412 = vpop.f32.mrb[0].mxu0
  %v3413 = vpop.f32.mrb[0].mxu0
  %v3414 = vadd.f32 %v3164, %v3413
  %v3415 = vpop.f32.mrb[0].mxu0
  %3416 = vmatprep.mubr.bf16.mxu0 0
  %3417 = vmatmul.mubr.bf16.gmra.mrb[0].mxu0 %v3215
  %v3418 = vpop.f32.mrb[0].mxu0
  %v3419 = vadd.f32 %v3164, %v3418
  %v3420 = vpop.f32.mrb[0].mxu0
  %v3421 = vpop.f32.mrb[0].mxu0
  %v3422 = vadd.f32 %v3164, %v3421
  %v3423 = vpop.f32.mrb[0].mxu0
  %3424 = vmatprep.mubr.bf16.mxu0 0
  %3425 = vmatmul.mubr.bf16.gmra.mrb[0].mxu0 %v3218
  %v3426 = vpop.f32.mrb[0].mxu0
  %v3427 = vadd.f32 %v3164, %v3426
  %v3428 = vpop.f32.mrb[0].mxu0
  %v3429 = vpop.f32.mrb[0].mxu0
  %v3430 = vadd.f32 %v3164, %v3429
  %v3431 = vpop.f32.mrb[0].mxu0
  %3432 = vmatprep.mubr.bf16.mxu0 0
  %3433 = vmatmul.mubr.bf16.gmra.mrb[0].mxu0 %v3221
  %v3434 = vpop.f32.mrb[0].mxu0
  %v3435 = vadd.f32 %v3164, %v3434
  %v3436 = vpop.f32.mrb[0].mxu0
  %v3437 = vpop.f32.mrb[0].mxu0
  %v3438 = vadd.f32 %v3164, %v3437
  %v3439 = vpop.f32.mrb[0].mxu0
  %3440 = vmatprep.mubr.bf16.mxu0 0
  %3441 = vmatmul.mubr.bf16.gmra.mrb[0].mxu0 %v3224
  %v3442 = vpop.f32.mrb[0].mxu0
  %v3443 = vadd.f32 %v3164, %v3442
  %v3444 = vpop.f32.mrb[0].mxu0
  %v3445 = vpop.f32.mrb[0].mxu0
  %v3446 = vadd.f32 %v3164, %v3445
  %v3447 = vpop.f32.mrb[0].mxu0
  %3448 = vmatprep.mubr.bf16.mxu0 0
  %3449 = vmatmul.mubr.bf16.gmra.mrb[0].mxu0 %v3227
  %v3450 = vpop.f32.mrb[0].mxu0
  %v3451 = vadd.f32 %v3164, %v3450
  %v3452 = vpop.f32.mrb[0].mxu0
  %v3453 = vpop.f32.mrb[0].mxu0
  %v3454 = vadd.f32 %v3164, %v3453
  %v3455 = vpop.f32.mrb[0].mxu0
  %3456 = vmatprep.mubr.bf16.mxu0 0
  %3457 = vmatmul.mubr.bf16.gmra.mrb[0].mxu0 %v3230
  %v3458 = vpop.f32.mrb[0].mxu0
  %v3459 = vadd.f32 %v3164, %v3458
  %v3460 = vpop.f32.mrb[0].mxu0
  %v3461 = vpop.f32.mrb[0].mxu0
  %v3462 = vadd.f32 %v3164, %v3461
  %v3463 = vpop.f32.mrb[0].mxu0
  %3464 = vmatprep.mubr.bf16.mxu0 0
  %3465 = vmatmul.mubr.bf16.gmra.mrb[0].mxu0 %v3233
  %v3466 = vpop.f32.mrb[0].mxu0
  %v3467 = vadd.f32 %v3164, %v3466
  %v3468 = vpop.f32.mrb[0].mxu0
  %v3469 = vpop.f32.mrb[0].mxu0
  %v3470 = vadd.f32 %v3164, %v3469
  %v3471 = vpop.f32.mrb[0].mxu0
  %3472 = vmatprep.mubr.bf16.mxu0 0
  %3473 = vmatmul.mubr.bf16.gmra.mrb[0].mxu0 %v3236
  %v3474 = vpop.f32.mrb[0].mxu0
  %v3475 = vadd.f32 %v3164, %v3474
  %v3476 = vpop.f32.mrb[0].mxu0
  %v3477 = vpop.f32.mrb[0].mxu0
  %v3478 = vadd.f32 %v3164, %v3477
  %v3479 = vpop.f32.mrb[0].mxu0
  %3480 = vmatprep.mubr.bf16.mxu0 0
  %3481 = vmatmul.mubr.bf16.gmra.mrb[0].mxu0 %v3239
  %v3482 = vpop.f32.mrb[0].mxu0
  %v3483 = vadd.f32 %v3164, %v3482
  %v3484 = vpop.f32.mrb[0].mxu0
  %v3485 = vpop.f32.mrb[0].mxu0
  %v3486 = vadd.f32 %v3164, %v3485
  %v3487 = vpop.f32.mrb[0].mxu0
  %3488 = vmatprep.mubr.bf16.mxu0 0
  %3489 = vmatmul.mubr.bf16.gmra.mrb[0].mxu0 %v3242
  %v3490 = vpop.f32.mrb[0].mxu0
  %v3491 = vadd.f32 %v3164, %v3490
  %v3492 = vpop.f32.mrb[0].mxu0
  %v3493 = vpop.f32.mrb[0].mxu0
  %v3494 = vadd.f32 %v3164, %v3493
  %v3495 = vpop.f32.mrb[0].mxu0
  %3496 = vmatprep.mubr.bf16.mxu0 0
  %3497 = vmatmul.mubr.bf16.gmra.mrb[0].mxu0 %v3245
  %v3498 = vpop.f32.mrb[0].mxu0
  %v3499 = vadd.f32 %v3164, %v3498
  %v3500 = vpop.f32.mrb[0].mxu0
  %v3501 = vpop.f32.mrb[0].mxu0
  %v3502 = vadd.f32 %v3164, %v3501
  %v3503 = vpop.f32.mrb[0].mxu0
  %3504 = vmatprep.mubr.bf16.mxu0 0
  %3505 = vmatmul.mubr.bf16.gmra.mrb[0].mxu0 %v3248
  %v3506 = vpop.f32.mrb[0].mxu0
  %v3507 = vadd.f32 %v3164, %v3506
  %v3508 = vpop.f32.mrb[0].mxu0
  %v3509 = vpop.f32.mrb[0].mxu0
  %v3510 = vadd.f32 %v3164, %v3509
  %v3511 = vpop.f32.mrb[0].mxu0
  %3512 = vmatprep.mubr.bf16.mxu0 0
  %3513 = vmatmul.mubr.bf16.gmra.mrb[0].mxu0 %v3251
  %v3514 = vpop.f32.mrb[0].mxu0
  %v3515 = vadd.f32 %v3164, %v3514
  %v3516 = vpop.f32.mrb[0].mxu0
  %v3517 = vpop.f32.mrb[0].mxu0
  %v3518 = vadd.f32 %v3164, %v3517
  %v3519 = vpop.f32.mrb[0].mxu0
  %3520 = vmatprep.mubr.bf16.mxu0 0
  %3521 = vmatmul.mubr.bf16.gmra.mrb[0].mxu0 %v3254
  %v3522 = vpop.f32.mrb[0].mxu0
  %v3523 = vadd.f32 %v3164, %v3522
  %v3524 = vpop.f32.mrb[0].mxu0
  %v3525 = vpop.f32.mrb[0].mxu0
  %v3526 = vadd.f32 %v3164, %v3525
  %v3527 = vpop.f32.mrb[0].mxu0
  %3528 = vmatprep.mubr.bf16.mxu0 0
  %3529 = vmatmul.mubr.bf16.gmra.mrb[0].mxu0 %v3257
  %v3530 = vpop.f32.mrb[0].mxu0
  %v3531 = vadd.f32 %v3164, %v3530
  %v3532 = vpop.f32.mrb[0].mxu0
  %v3533 = vpop.f32.mrb[0].mxu0
  %v3534 = vadd.f32 %v3164, %v3533
  %v3535 = vpop.f32.mrb[0].mxu0
  %3536 = vmatprep.mubr.bf16.mxu0 0
  %3537 = vmatmul.mubr.bf16.gmra.mrb[0].mxu0 %v3260
  %v3538 = vpop.f32.mrb[0].mxu0
  %v3539 = vadd.f32 %v3164, %v3538
  %v3540 = vpop.f32.mrb[0].mxu0
  %v3541 = vpop.f32.mrb[0].mxu0
  %v3542 = vadd.f32 %v3164, %v3541
  %v3543 = vpop.f32.mrb[0].mxu0
  %3544 = vmatprep.mubr.bf16.mxu0 0
  %3545 = vmatmul.mubr.bf16.gmra.mrb[0].mxu0 %v3263
  %v3546 = vpop.f32.mrb[0].mxu0
  %v3547 = vadd.f32 %v3164, %v3546
  %v3548 = vpop.f32.mrb[0].mxu0
  %v3549 = vpop.f32.mrb[0].mxu0
  %v3550 = vadd.f32 %v3164, %v3549
  %v3551 = vpop.f32.mrb[0].mxu0
  %3552 = vmatprep.mubr.bf16.mxu0 0
  %3553 = vmatmul.mubr.bf16.gmra.mrb[0].mxu0 %v3266
  %v3554 = vpop.f32.mrb[0].mxu0
  %v3555 = vadd.f32 %v3164, %v3554
  %v3556 = vpop.f32.mrb[0].mxu0
  %v3557 = vpop.f32.mrb[0].mxu0
  %v3558 = vadd.f32 %v3164, %v3557
  %v3559 = vpop.f32.mrb[0].mxu0
  %3560 = vdwg.mxu0
  %v3561 = vmax.f32 %v3307, 0.0
  %v3562 = vmax.f32 %v3310, 0.0
  %v3563 = vmax.f32 %v3315, 0.0
  %v3564 = vmax.f32 %v3318, 0.0
  %v3565 = vmax.f32 %v3323, 0.0
  %v3566 = vmax.f32 %v3326, 0.0
  %v3567 = vmax.f32 %v3331, 0.0
  %v3568 = vmax.f32 %v3334, 0.0
  %v3569 = vmax.f32 %v3339, 0.0
  %v3570 = vmax.f32 %v3342, 0.0
  %v3571 = vmax.f32 %v3347, 0.0
  %v3572 = vmax.f32 %v3350, 0.0
  %v3573 = vmax.f32 %v3355, 0.0
  %v3574 = vmax.f32 %v3358, 0.0
  %v3575 = vmax.f32 %v3363, 0.0
  %v3576 = vmax.f32 %v3366, 0.0
  %v3577 = vmax.f32 %v3371, 0.0
  %v3578 = vmax.f32 %v3374, 0.0
  %v3579 = vmax.f32 %v3379, 0.0
  %v3580 = vmax.f32 %v3382, 0.0
  %v3581 = vmax.f32 %v3387, 0.0
  %v3582 = vmax.f32 %v3390, 0.0
  %v3583 = vmax.f32 %v3395, 0.0
  %v3584 = vmax.f32 %v3398, 0.0
  %v3585 = vmax.f32 %v3403, 0.0
  %v3586 = vmax.f32 %v3406, 0.0
  %v3587 = vmax.f32 %v3411, 0.0
  %v3588 = vmax.f32 %v3414, 0.0
  %v3589 = vmax.f32 %v3419, 0.0
  %v3590 = vmax.f32 %v3422, 0.0
  %v3591 = vmax.f32 %v3427, 0.0
  %v3592 = vmax.f32 %v3430, 0.0
  %v3593 = vmax.f32 %v3435, 0.0
  %v3594 = vmax.f32 %v3438, 0.0
  %v3595 = vmax.f32 %v3443, 0.0
  %v3596 = vmax.f32 %v3446, 0.0
  %v3597 = vmax.f32 %v3451, 0.0
  %v3598 = vmax.f32 %v3454, 0.0
  %v3599 = vmax.f32 %v3459, 0.0
  %v3600 = vmax.f32 %v3462, 0.0
  %v3601 = vmax.f32 %v3467, 0.0
  %v3602 = vmax.f32 %v3470, 0.0
  %v3603 = vmax.f32 %v3475, 0.0
  %v3604 = vmax.f32 %v3478, 0.0
  %v3605 = vmax.f32 %v3483, 0.0
  %v3606 = vmax.f32 %v3486, 0.0
  %v3607 = vmax.f32 %v3491, 0.0
  %v3608 = vmax.f32 %v3494, 0.0
  %v3609 = vmax.f32 %v3499, 0.0
  %v3610 = vmax.f32 %v3502, 0.0
  %v3611 = vmax.f32 %v3507, 0.0
  %v3612 = vmax.f32 %v3510, 0.0
  %v3613 = vmax.f32 %v3515, 0.0
  %v3614 = vmax.f32 %v3518, 0.0
  %v3615 = vmax.f32 %v3523, 0.0
  %v3616 = vmax.f32 %v3526, 0.0
  %v3617 = vmax.f32 %v3531, 0.0
  %v3618 = vmax.f32 %v3534, 0.0
  %v3619 = vmax.f32 %v3539, 0.0
  %v3620 = vmax.f32 %v3542, 0.0
  %v3621 = vmax.f32 %v3547, 0.0
  %v3622 = vmax.f32 %v3550, 0.0
  %v3623 = vmax.f32 %v3555, 0.0
  %v3624 = vmax.f32 %v3558, 0.0
  %v3625 = vpack.c.bf16 %v3562, %v3561
  %v3626 = vpack.c.bf16 %v3564, %v3563
  %v3627 = vpack.c.bf16 %v3566, %v3565
  %v3628 = vpack.c.bf16 %v3568, %v3567
  %v3629 = vpack.c.bf16 %v3570, %v3569
  %v3630 = vpack.c.bf16 %v3572, %v3571
  %v3631 = vpack.c.bf16 %v3574, %v3573
  %v3632 = vpack.c.bf16 %v3576, %v3575
  %v3633 = vpack.c.bf16 %v3578, %v3577
  %v3634 = vpack.c.bf16 %v3580, %v3579
  %v3635 = vpack.c.bf16 %v3582, %v3581
  %v3636 = vpack.c.bf16 %v3584, %v3583
  %v3637 = vpack.c.bf16 %v3586, %v3585
  %v3638 = vpack.c.bf16 %v3588, %v3587
  %v3639 = vpack.c.bf16 %v3590, %v3589
  %v3640 = vpack.c.bf16 %v3592, %v3591
  %v3641 = vpack.c.bf16 %v3594, %v3593
  %v3642 = vpack.c.bf16 %v3596, %v3595
  %v3643 = vpack.c.bf16 %v3598, %v3597
  %v3644 = vpack.c.bf16 %v3600, %v3599
  %v3645 = vpack.c.bf16 %v3602, %v3601
  %v3646 = vpack.c.bf16 %v3604, %v3603
  %v3647 = vpack.c.bf16 %v3606, %v3605
  %v3648 = vpack.c.bf16 %v3608, %v3607
  %v3649 = vpack.c.bf16 %v3610, %v3609
  %v3650 = vpack.c.bf16 %v3612, %v3611
  %v3651 = vpack.c.bf16 %v3614, %v3613
  %v3652 = vpack.c.bf16 %v3616, %v3615
  %v3653 = vpack.c.bf16 %v3618, %v3617
  %v3654 = vpack.c.bf16 %v3620, %v3619
  %v3655 = vpack.c.bf16 %v3622, %v3621
  %v3656 = vpack.c.bf16 %v3624, %v3623
  %v3657 = vld [vmem:[%s5] sm:$0xf]
  %v3658 = vld [vmem:[%s5 + $0x4] sm:$0x1]
  %v3659 = vld [vmem:[%s6] sm:$0x1]
  %v3661 = vlaneseq
  %v3662 = vshrl.u32 %v3661, 7
  %v3663 = vsub.s32 0, %v3662
  %v3664 = vrot.slane %v3659, %v3663
  %v3668 = vunpack.c.l.b16 %v3657
  %v3669 = vunpack.c.l.b16 %v3658
  %v3670 = vpack.c.b16 %v3669, %v3668
  %v3672 = vsel %vm3171, %v3625, 0
  %v3675 = vsel %vm3171, %v3626, 0
  %v3678 = vsel %vm3171, %v3627, 0
  %v3681 = vsel %vm3171, %v3628, 0
  %v3684 = vsel %vm3171, %v3629, 0
  %v3687 = vsel %vm3171, %v3630, 0
  %v3690 = vsel %vm3171, %v3631, 0
  %v3693 = vsel %vm3171, %v3632, 0
  %v3696 = vsel %vm3171, %v3633, 0
  %v3699 = vsel %vm3171, %v3634, 0
  %v3702 = vsel %vm3171, %v3635, 0
  %v3705 = vsel %vm3171, %v3636, 0
  %v3708 = vsel %vm3171, %v3637, 0
  %v3711 = vsel %vm3171, %v3638, 0
  %v3714 = vsel %vm3171, %v3639, 0
  %v3717 = vsel %vm3171, %v3640, 0
  %v3720 = vsel %vm3171, %v3641, 0
  %v3723 = vsel %vm3171, %v3642, 0
  %v3726 = vsel %vm3171, %v3643, 0
  %v3729 = vsel %vm3171, %v3644, 0
  %v3732 = vsel %vm3171, %v3645, 0
  %v3735 = vsel %vm3171, %v3646, 0
  %v3738 = vsel %vm3171, %v3647, 0
  %v3741 = vsel %vm3171, %v3648, 0
  %v3744 = vsel %vm3171, %v3649, 0
  %v3747 = vsel %vm3171, %v3650, 0
  %v3750 = vsel %vm3171, %v3651, 0
  %v3753 = vsel %vm3171, %v3652, 0
  %v3756 = vsel %vm3171, %v3653, 0
  %v3759 = vsel %vm3171, %v3654, 0
  %v3762 = vsel %vm3171, %v3655, 0
  %v3765 = vsel %vm3171, %v3656, 0
  %v3768 = vsel %vm3268, %v3670, 0
  %3770 = vmatprep.subr.bf16.mxu0 0
  %3771 = vmatpush1.bf16.msra.mxu0 %v3768
  %3772 = vmatprep.subr.bf16.mxu0 0
  %3773 = vmatpush1.bf16.msra.mxu0 0
  %3774 = vmatprep.subr.bf16.mxu0 0
  %3775 = vmatpush1.bf16.msra.mxu0 0
  %3776 = vmatprep.subr.bf16.mxu0 0
  %3777 = vmatpush1.bf16.msra.mxu0 0
  %3778 = vmatprep.subr.bf16.mxu0 0
  %3779 = vmatpush1.bf16.msra.mxu0 0
  %3780 = vmatprep.subr.bf16.mxu0 0
  %3781 = vmatpush1.bf16.msra.mxu0 0
  %3782 = vmatprep.subr.bf16.mxu0 0
  %3783 = vmatpush1.bf16.msra.mxu0 0
  %3784 = vmatprep.subr.bf16.mxu0 0
  %3785 = vmatpush1.bf16.msra.mxu0 0
  %3786 = vmatprep.subr.bf16.mxu0 0
  %3787 = vmatpush1.bf16.msra.mxu0 0
  %3788 = vmatprep.subr.bf16.mxu0 0
  %3789 = vmatpush1.bf16.msra.mxu0 0
  %3790 = vmatprep.subr.bf16.mxu0 0
  %3791 = vmatpush1.bf16.msra.mxu0 0
  %3792 = vmatprep.subr.bf16.mxu0 0
  %3793 = vmatpush1.bf16.msra.mxu0 0
  %3794 = vmatprep.subr.bf16.mxu0 0
  %3795 = vmatpush1.bf16.msra.mxu0 0
  %3796 = vmatprep.subr.bf16.mxu0 0
  %3797 = vmatpush1.bf16.msra.mxu0 0
  %3798 = vmatprep.subr.bf16.mxu0 0
  %3799 = vmatpush1.bf16.msra.mxu0 0
  %3800 = vmatprep.subr.bf16.mxu0 0
  %3801 = vmatpush1.bf16.msra.mxu0 0
  %3802 = vmatprep.mubr.bf16.mxu0 0
  %3803 = vmatmul.mubr.bf16.gmra.mrb[0].mxu0 %v3672
  %v3804 = vpop.f32.mrb[0].mxu0
  %v3805 = vadd.f32 %v3664, %v3804
  %v3806 = vpop.f32.mrb[0].mxu0
  %v3807 = vpop.f32.mrb[0].mxu0
  %v3808 = vadd.f32 %v3664, %v3807
  %v3809 = vpop.f32.mrb[0].mxu0
  %3810 = vmatprep.mubr.bf16.mxu0 0
  %3811 = vmatmul.mubr.bf16.gmra.mrb[0].mxu0 %v3675
  %v3812 = vpop.f32.mrb[0].mxu0
  %v3813 = vadd.f32 %v3664, %v3812
  %v3814 = vpop.f32.mrb[0].mxu0
  %v3815 = vpop.f32.mrb[0].mxu0
  %v3816 = vadd.f32 %v3664, %v3815
  %v3817 = vpop.f32.mrb[0].mxu0
  %3818 = vmatprep.mubr.bf16.mxu0 0
  %3819 = vmatmul.mubr.bf16.gmra.mrb[0].mxu0 %v3678
  %v3820 = vpop.f32.mrb[0].mxu0
  %v3821 = vadd.f32 %v3664, %v3820
  %v3822 = vpop.f32.mrb[0].mxu0
  %v3823 = vpop.f32.mrb[0].mxu0
  %v3824 = vadd.f32 %v3664, %v3823
  %v3825 = vpop.f32.mrb[0].mxu0
  %3826 = vmatprep.mubr.bf16.mxu0 0
  %3827 = vmatmul.mubr.bf16.gmra.mrb[0].mxu0 %v3681
  %v3828 = vpop.f32.mrb[0].mxu0
  %v3829 = vadd.f32 %v3664, %v3828
  %v3830 = vpop.f32.mrb[0].mxu0
  %v3831 = vpop.f32.mrb[0].mxu0
  %v3832 = vadd.f32 %v3664, %v3831
  %v3833 = vpop.f32.mrb[0].mxu0
  %3834 = vmatprep.mubr.bf16.mxu0 0
  %3835 = vmatmul.mubr.bf16.gmra.mrb[0].mxu0 %v3684
  %v3836 = vpop.f32.mrb[0].mxu0
  %v3837 = vadd.f32 %v3664, %v3836
  %v3838 = vpop.f32.mrb[0].mxu0
  %v3839 = vpop.f32.mrb[0].mxu0
  %v3840 = vadd.f32 %v3664, %v3839
  %v3841 = vpop.f32.mrb[0].mxu0
  %3842 = vmatprep.mubr.bf16.mxu0 0
  %3843 = vmatmul.mubr.bf16.gmra.mrb[0].mxu0 %v3687
  %v3844 = vpop.f32.mrb[0].mxu0
  %v3845 = vadd.f32 %v3664, %v3844
  %v3846 = vpop.f32.mrb[0].mxu0
  %v3847 = vpop.f32.mrb[0].mxu0
  %v3848 = vadd.f32 %v3664, %v3847
  %v3849 = vpop.f32.mrb[0].mxu0
  %3850 = vmatprep.mubr.bf16.mxu0 0
  %3851 = vmatmul.mubr.bf16.gmra.mrb[0].mxu0 %v3690
  %v3852 = vpop.f32.mrb[0].mxu0
  %v3853 = vadd.f32 %v3664, %v3852
  %v3854 = vpop.f32.mrb[0].mxu0
  %v3855 = vpop.f32.mrb[0].mxu0
  %v3856 = vadd.f32 %v3664, %v3855
  %v3857 = vpop.f32.mrb[0].mxu0
  %3858 = vmatprep.mubr.bf16.mxu0 0
  %3859 = vmatmul.mubr.bf16.gmra.mrb[0].mxu0 %v3693
  %v3860 = vpop.f32.mrb[0].mxu0
  %v3861 = vadd.f32 %v3664, %v3860
  %v3862 = vpop.f32.mrb[0].mxu0
  %v3863 = vpop.f32.mrb[0].mxu0
  %v3864 = vadd.f32 %v3664, %v3863
  %v3865 = vpop.f32.mrb[0].mxu0
  %3866 = vmatprep.mubr.bf16.mxu0 0
  %3867 = vmatmul.mubr.bf16.gmra.mrb[0].mxu0 %v3696
  %v3868 = vpop.f32.mrb[0].mxu0
  %v3869 = vadd.f32 %v3664, %v3868
  %v3870 = vpop.f32.mrb[0].mxu0
  %v3871 = vpop.f32.mrb[0].mxu0
  %v3872 = vadd.f32 %v3664, %v3871
  %v3873 = vpop.f32.mrb[0].mxu0
  %3874 = vmatprep.mubr.bf16.mxu0 0
  %3875 = vmatmul.mubr.bf16.gmra.mrb[0].mxu0 %v3699
  %v3876 = vpop.f32.mrb[0].mxu0
  %v3877 = vadd.f32 %v3664, %v3876
  %v3878 = vpop.f32.mrb[0].mxu0
  %v3879 = vpop.f32.mrb[0].mxu0
  %v3880 = vadd.f32 %v3664, %v3879
  %v3881 = vpop.f32.mrb[0].mxu0
  %3882 = vmatprep.mubr.bf16.mxu0 0
  %3883 = vmatmul.mubr.bf16.gmra.mrb[0].mxu0 %v3702
  %v3884 = vpop.f32.mrb[0].mxu0
  %v3885 = vadd.f32 %v3664, %v3884
  %v3886 = vpop.f32.mrb[0].mxu0
  %v3887 = vpop.f32.mrb[0].mxu0
  %v3888 = vadd.f32 %v3664, %v3887
  %v3889 = vpop.f32.mrb[0].mxu0
  %3890 = vmatprep.mubr.bf16.mxu0 0
  %3891 = vmatmul.mubr.bf16.gmra.mrb[0].mxu0 %v3705
  %v3892 = vpop.f32.mrb[0].mxu0
  %v3893 = vadd.f32 %v3664, %v3892
  %v3894 = vpop.f32.mrb[0].mxu0
  %v3895 = vpop.f32.mrb[0].mxu0
  %v3896 = vadd.f32 %v3664, %v3895
  %v3897 = vpop.f32.mrb[0].mxu0
  %3898 = vmatprep.mubr.bf16.mxu0 0
  %3899 = vmatmul.mubr.bf16.gmra.mrb[0].mxu0 %v3708
  %v3900 = vpop.f32.mrb[0].mxu0
  %v3901 = vadd.f32 %v3664, %v3900
  %v3902 = vpop.f32.mrb[0].mxu0
  %v3903 = vpop.f32.mrb[0].mxu0
  %v3904 = vadd.f32 %v3664, %v3903
  %v3905 = vpop.f32.mrb[0].mxu0
  %3906 = vmatprep.mubr.bf16.mxu0 0
  %3907 = vmatmul.mubr.bf16.gmra.mrb[0].mxu0 %v3711
  %v3908 = vpop.f32.mrb[0].mxu0
  %v3909 = vadd.f32 %v3664, %v3908
  %v3910 = vpop.f32.mrb[0].mxu0
  %v3911 = vpop.f32.mrb[0].mxu0
  %v3912 = vadd.f32 %v3664, %v3911
  %v3913 = vpop.f32.mrb[0].mxu0
  %3914 = vmatprep.mubr.bf16.mxu0 0
  %3915 = vmatmul.mubr.bf16.gmra.mrb[0].mxu0 %v3714
  %v3916 = vpop.f32.mrb[0].mxu0
  %v3917 = vadd.f32 %v3664, %v3916
  %v3918 = vpop.f32.mrb[0].mxu0
  %v3919 = vpop.f32.mrb[0].mxu0
  %v3920 = vadd.f32 %v3664, %v3919
  %v3921 = vpop.f32.mrb[0].mxu0
  %3922 = vmatprep.mubr.bf16.mxu0 0
  %3923 = vmatmul.mubr.bf16.gmra.mrb[0].mxu0 %v3717
  %v3924 = vpop.f32.mrb[0].mxu0
  %v3925 = vadd.f32 %v3664, %v3924
  %v3926 = vpop.f32.mrb[0].mxu0
  %v3927 = vpop.f32.mrb[0].mxu0
  %v3928 = vadd.f32 %v3664, %v3927
  %v3929 = vpop.f32.mrb[0].mxu0
  %3930 = vmatprep.mubr.bf16.mxu0 0
  %3931 = vmatmul.mubr.bf16.gmra.mrb[0].mxu0 %v3720
  %v3932 = vpop.f32.mrb[0].mxu0
  %v3933 = vadd.f32 %v3664, %v3932
  %v3934 = vpop.f32.mrb[0].mxu0
  %v3935 = vpop.f32.mrb[0].mxu0
  %v3936 = vadd.f32 %v3664, %v3935
  %v3937 = vpop.f32.mrb[0].mxu0
  %3938 = vmatprep.mubr.bf16.mxu0 0
  %3939 = vmatmul.mubr.bf16.gmra.mrb[0].mxu0 %v3723
  %v3940 = vpop.f32.mrb[0].mxu0
  %v3941 = vadd.f32 %v3664, %v3940
  %v3942 = vpop.f32.mrb[0].mxu0
  %v3943 = vpop.f32.mrb[0].mxu0
  %v3944 = vadd.f32 %v3664, %v3943
  %v3945 = vpop.f32.mrb[0].mxu0
  %3946 = vmatprep.mubr.bf16.mxu0 0
  %3947 = vmatmul.mubr.bf16.gmra.mrb[0].mxu0 %v3726
  %v3948 = vpop.f32.mrb[0].mxu0
  %v3949 = vadd.f32 %v3664, %v3948
  %v3950 = vpop.f32.mrb[0].mxu0
  %v3951 = vpop.f32.mrb[0].mxu0
  %v3952 = vadd.f32 %v3664, %v3951
  %v3953 = vpop.f32.mrb[0].mxu0
  %3954 = vmatprep.mubr.bf16.mxu0 0
  %3955 = vmatmul.mubr.bf16.gmra.mrb[0].mxu0 %v3729
  %v3956 = vpop.f32.mrb[0].mxu0
  %v3957 = vadd.f32 %v3664, %v3956
  %v3958 = vpop.f32.mrb[0].mxu0
  %v3959 = vpop.f32.mrb[0].mxu0
  %v3960 = vadd.f32 %v3664, %v3959
  %v3961 = vpop.f32.mrb[0].mxu0
  %3962 = vmatprep.mubr.bf16.mxu0 0
  %3963 = vmatmul.mubr.bf16.gmra.mrb[0].mxu0 %v3732
  %v3964 = vpop.f32.mrb[0].mxu0
  %v3965 = vadd.f32 %v3664, %v3964
  %v3966 = vpop.f32.mrb[0].mxu0
  %v3967 = vpop.f32.mrb[0].mxu0
  %v3968 = vadd.f32 %v3664, %v3967
  %v3969 = vpop.f32.mrb[0].mxu0
  %3970 = vmatprep.mubr.bf16.mxu0 0
  %3971 = vmatmul.mubr.bf16.gmra.mrb[0].mxu0 %v3735
  %v3972 = vpop.f32.mrb[0].mxu0
  %v3973 = vadd.f32 %v3664, %v3972
  %v3974 = vpop.f32.mrb[0].mxu0
  %v3975 = vpop.f32.mrb[0].mxu0
  %v3976 = vadd.f32 %v3664, %v3975
  %v3977 = vpop.f32.mrb[0].mxu0
  %3978 = vmatprep.mubr.bf16.mxu0 0
  %3979 = vmatmul.mubr.bf16.gmra.mrb[0].mxu0 %v3738
  %v3980 = vpop.f32.mrb[0].mxu0
  %v3981 = vadd.f32 %v3664, %v3980
  %v3982 = vpop.f32.mrb[0].mxu0
  %v3983 = vpop.f32.mrb[0].mxu0
  %v3984 = vadd.f32 %v3664, %v3983
  %v3985 = vpop.f32.mrb[0].mxu0
  %3986 = vmatprep.mubr.bf16.mxu0 0
  %3987 = vmatmul.mubr.bf16.gmra.mrb[0].mxu0 %v3741
  %v3988 = vpop.f32.mrb[0].mxu0
  %v3989 = vadd.f32 %v3664, %v3988
  %v3990 = vpop.f32.mrb[0].mxu0
  %v3991 = vpop.f32.mrb[0].mxu0
  %v3992 = vadd.f32 %v3664, %v3991
  %v3993 = vpop.f32.mrb[0].mxu0
  %3994 = vmatprep.mubr.bf16.mxu0 0
  %3995 = vmatmul.mubr.bf16.gmra.mrb[0].mxu0 %v3744
  %v3996 = vpop.f32.mrb[0].mxu0
  %v3997 = vadd.f32 %v3664, %v3996
  %v3998 = vpop.f32.mrb[0].mxu0
  %v3999 = vpop.f32.mrb[0].mxu0
  %v4000 = vadd.f32 %v3664, %v3999
  %v4001 = vpop.f32.mrb[0].mxu0
  %4002 = vmatprep.mubr.bf16.mxu0 0
  %4003 = vmatmul.mubr.bf16.gmra.mrb[0].mxu0 %v3747
  %v4004 = vpop.f32.mrb[0].mxu0
  %v4005 = vadd.f32 %v3664, %v4004
  %v4006 = vpop.f32.mrb[0].mxu0
  %v4007 = vpop.f32.mrb[0].mxu0
  %v4008 = vadd.f32 %v3664, %v4007
  %v4009 = vpop.f32.mrb[0].mxu0
  %4010 = vmatprep.mubr.bf16.mxu0 0
  %4011 = vmatmul.mubr.bf16.gmra.mrb[0].mxu0 %v3750
  %v4012 = vpop.f32.mrb[0].mxu0
  %v4013 = vadd.f32 %v3664, %v4012
  %v4014 = vpop.f32.mrb[0].mxu0
  %v4015 = vpop.f32.mrb[0].mxu0
  %v4016 = vadd.f32 %v3664, %v4015
  %v4017 = vpop.f32.mrb[0].mxu0
  %4018 = vmatprep.mubr.bf16.mxu0 0
  %4019 = vmatmul.mubr.bf16.gmra.mrb[0].mxu0 %v3753
  %v4020 = vpop.f32.mrb[0].mxu0
  %v4021 = vadd.f32 %v3664, %v4020
  %v4022 = vpop.f32.mrb[0].mxu0
  %v4023 = vpop.f32.mrb[0].mxu0
  %v4024 = vadd.f32 %v3664, %v4023
  %v4025 = vpop.f32.mrb[0].mxu0
  %4026 = vmatprep.mubr.bf16.mxu0 0
  %4027 = vmatmul.mubr.bf16.gmra.mrb[0].mxu0 %v3756
  %v4028 = vpop.f32.mrb[0].mxu0
  %v4029 = vadd.f32 %v3664, %v4028
  %v4030 = vpop.f32.mrb[0].mxu0
  %v4031 = vpop.f32.mrb[0].mxu0
  %v4032 = vadd.f32 %v3664, %v4031
  %v4033 = vpop.f32.mrb[0].mxu0
  %4034 = vmatprep.mubr.bf16.mxu0 0
  %4035 = vmatmul.mubr.bf16.gmra.mrb[0].mxu0 %v3759
  %v4036 = vpop.f32.mrb[0].mxu0
  %v4037 = vadd.f32 %v3664, %v4036
  %v4038 = vpop.f32.mrb[0].mxu0
  %v4039 = vpop.f32.mrb[0].mxu0
  %v4040 = vadd.f32 %v3664, %v4039
  %v4041 = vpop.f32.mrb[0].mxu0
  %4042 = vmatprep.mubr.bf16.mxu0 0
  %4043 = vmatmul.mubr.bf16.gmra.mrb[0].mxu0 %v3762
  %v4044 = vpop.f32.mrb[0].mxu0
  %v4045 = vadd.f32 %v3664, %v4044
  %v4046 = vpop.f32.mrb[0].mxu0
  %v4047 = vpop.f32.mrb[0].mxu0
  %v4048 = vadd.f32 %v3664, %v4047
  %v4049 = vpop.f32.mrb[0].mxu0
  %4050 = vmatprep.mubr.bf16.mxu0 0
  %4051 = vmatmul.mubr.bf16.gmra.mrb[0].mxu0 %v3765
  %v4052 = vpop.f32.mrb[0].mxu0
  %v4053 = vadd.f32 %v3664, %v4052
  %v4054 = vpop.f32.mrb[0].mxu0
  %v4055 = vpop.f32.mrb[0].mxu0
  %v4056 = vadd.f32 %v3664, %v4055
  %v4057 = vpop.f32.mrb[0].mxu0
  %4058 = vdwg.mxu0
  %v4059 = vmax.f32 %v3805, 0.0
  %v4060 = vmax.f32 %v3808, 0.0
  %v4061 = vmax.f32 %v3813, 0.0
  %v4062 = vmax.f32 %v3816, 0.0
  %v4063 = vmax.f32 %v3821, 0.0
  %v4064 = vmax.f32 %v3824, 0.0
  %v4065 = vmax.f32 %v3829, 0.0
  %v4066 = vmax.f32 %v3832, 0.0
  %v4067 = vmax.f32 %v3837, 0.0
  %v4068 = vmax.f32 %v3840, 0.0
  %v4069 = vmax.f32 %v3845, 0.0
  %v4070 = vmax.f32 %v3848, 0.0
  %v4071 = vmax.f32 %v3853, 0.0
  %v4072 = vmax.f32 %v3856, 0.0
  %v4073 = vmax.f32 %v3861, 0.0
  %v4074 = vmax.f32 %v3864, 0.0
  %v4075 = vmax.f32 %v3869, 0.0
  %v4076 = vmax.f32 %v3872, 0.0
  %v4077 = vmax.f32 %v3877, 0.0
  %v4078 = vmax.f32 %v3880, 0.0
  %v4079 = vmax.f32 %v3885, 0.0
  %v4080 = vmax.f32 %v3888, 0.0
  %v4081 = vmax.f32 %v3893, 0.0
  %v4082 = vmax.f32 %v3896, 0.0
  %v4083 = vmax.f32 %v3901, 0.0
  %v4084 = vmax.f32 %v3904, 0.0
  %v4085 = vmax.f32 %v3909, 0.0
  %v4086 = vmax.f32 %v3912, 0.0
  %v4087 = vmax.f32 %v3917, 0.0
  %v4088 = vmax.f32 %v3920, 0.0
  %v4089 = vmax.f32 %v3925, 0.0
  %v4090 = vmax.f32 %v3928, 0.0
  %v4091 = vmax.f32 %v3933, 0.0
  %v4092 = vmax.f32 %v3936, 0.0
  %v4093 = vmax.f32 %v3941, 0.0
  %v4094 = vmax.f32 %v3944, 0.0
  %v4095 = vmax.f32 %v3949, 0.0
  %v4096 = vmax.f32 %v3952, 0.0
  %v4097 = vmax.f32 %v3957, 0.0
  %v4098 = vmax.f32 %v3960, 0.0
  %v4099 = vmax.f32 %v3965, 0.0
  %v4100 = vmax.f32 %v3968, 0.0
  %v4101 = vmax.f32 %v3973, 0.0
  %v4102 = vmax.f32 %v3976, 0.0
  %v4103 = vmax.f32 %v3981, 0.0
  %v4104 = vmax.f32 %v3984, 0.0
  %v4105 = vmax.f32 %v3989, 0.0
  %v4106 = vmax.f32 %v3992, 0.0
  %v4107 = vmax.f32 %v3997, 0.0
  %v4108 = vmax.f32 %v4000, 0.0
  %v4109 = vmax.f32 %v4005, 0.0
  %v4110 = vmax.f32 %v4008, 0.0
  %v4111 = vmax.f32 %v4013, 0.0
  %v4112 = vmax.f32 %v4016, 0.0
  %v4113 = vmax.f32 %v4021, 0.0
  %v4114 = vmax.f32 %v4024, 0.0
  %v4115 = vmax.f32 %v4029, 0.0
  %v4116 = vmax.f32 %v4032, 0.0
  %v4117 = vmax.f32 %v4037, 0.0
  %v4118 = vmax.f32 %v4040, 0.0
  %v4119 = vmax.f32 %v4045, 0.0
  %v4120 = vmax.f32 %v4048, 0.0
  %v4121 = vmax.f32 %v4053, 0.0
  %v4122 = vmax.f32 %v4056, 0.0
  %v4123 = vpack.c.bf16 %v4060, %v4059
  %v4124 = vpack.c.bf16 %v4062, %v4061
  %v4125 = vpack.c.bf16 %v4064, %v4063
  %v4126 = vpack.c.bf16 %v4066, %v4065
  %v4127 = vpack.c.bf16 %v4068, %v4067
  %v4128 = vpack.c.bf16 %v4070, %v4069
  %v4129 = vpack.c.bf16 %v4072, %v4071
  %v4130 = vpack.c.bf16 %v4074, %v4073
  %v4131 = vpack.c.bf16 %v4076, %v4075
  %v4132 = vpack.c.bf16 %v4078, %v4077
  %v4133 = vpack.c.bf16 %v4080, %v4079
  %v4134 = vpack.c.bf16 %v4082, %v4081
  %v4135 = vpack.c.bf16 %v4084, %v4083
  %v4136 = vpack.c.bf16 %v4086, %v4085
  %v4137 = vpack.c.bf16 %v4088, %v4087
  %v4138 = vpack.c.bf16 %v4090, %v4089
  %v4139 = vpack.c.bf16 %v4092, %v4091
  %v4140 = vpack.c.bf16 %v4094, %v4093
  %v4141 = vpack.c.bf16 %v4096, %v4095
  %v4142 = vpack.c.bf16 %v4098, %v4097
  %v4143 = vpack.c.bf16 %v4100, %v4099
  %v4144 = vpack.c.bf16 %v4102, %v4101
  %v4145 = vpack.c.bf16 %v4104, %v4103
  %v4146 = vpack.c.bf16 %v4106, %v4105
  %v4147 = vpack.c.bf16 %v4108, %v4107
  %v4148 = vpack.c.bf16 %v4110, %v4109
  %v4149 = vpack.c.bf16 %v4112, %v4111
  %v4150 = vpack.c.bf16 %v4114, %v4113
  %v4151 = vpack.c.bf16 %v4116, %v4115
  %v4152 = vpack.c.bf16 %v4118, %v4117
  %v4153 = vpack.c.bf16 %v4120, %v4119
  %v4154 = vpack.c.bf16 %v4122, %v4121
  %v4155 = vld [vmem:[%s7] sm:$0xf]
  %v4156 = vld [vmem:[%s7 + $0x4] sm:$0x1]
  %v4157 = vld [vmem:[%s8] sm:$0x1]
  %v4159 = vlaneseq
  %v4160 = vshrl.u32 %v4159, 7
  %v4161 = vsub.s32 0, %v4160
  %v4162 = vrot.slane %v4157, %v4161
  %v4166 = vunpack.c.l.b16 %v4155
  %v4167 = vunpack.c.l.b16 %v4156
  %v4168 = vpack.c.b16 %v4167, %v4166
  %v4170 = vsel %vm3171, %v4123, 0
  %v4173 = vsel %vm3171, %v4124, 0
  %v4176 = vsel %vm3171, %v4125, 0
  %v4179 = vsel %vm3171, %v4126, 0
  %v4182 = vsel %vm3171, %v4127, 0
  %v4185 = vsel %vm3171, %v4128, 0
  %v4188 = vsel %vm3171, %v4129, 0
  %v4191 = vsel %vm3171, %v4130, 0
  %v4194 = vsel %vm3171, %v4131, 0
  %v4197 = vsel %vm3171, %v4132, 0
  %v4200 = vsel %vm3171, %v4133, 0
  %v4203 = vsel %vm3171, %v4134, 0
  %v4206 = vsel %vm3171, %v4135, 0
  %v4209 = vsel %vm3171, %v4136, 0
  %v4212 = vsel %vm3171, %v4137, 0
  %v4215 = vsel %vm3171, %v4138, 0
  %v4218 = vsel %vm3171, %v4139, 0
  %v4221 = vsel %vm3171, %v4140, 0
  %v4224 = vsel %vm3171, %v4141, 0
  %v4227 = vsel %vm3171, %v4142, 0
  %v4230 = vsel %vm3171, %v4143, 0
  %v4233 = vsel %vm3171, %v4144, 0
  %v4236 = vsel %vm3171, %v4145, 0
  %v4239 = vsel %vm3171, %v4146, 0
  %v4242 = vsel %vm3171, %v4147, 0
  %v4245 = vsel %vm3171, %v4148, 0
  %v4248 = vsel %vm3171, %v4149, 0
  %v4251 = vsel %vm3171, %v4150, 0
  %v4254 = vsel %vm3171, %v4151, 0
  %v4257 = vsel %vm3171, %v4152, 0
  %v4260 = vsel %vm3171, %v4153, 0
  %v4263 = vsel %vm3171, %v4154, 0
  %v4266 = vsel %vm3268, %v4168, 0
  %4268 = vmatprep.subr.bf16.mxu0 0
  %4269 = vmatpush1.bf16.msra.mxu0 %v4266
  %4270 = vmatprep.subr.bf16.mxu0 0
  %4271 = vmatpush1.bf16.msra.mxu0 0
  %4272 = vmatprep.subr.bf16.mxu0 0
  %4273 = vmatpush1.bf16.msra.mxu0 0
  %4274 = vmatprep.subr.bf16.mxu0 0
  %4275 = vmatpush1.bf16.msra.mxu0 0
  %4276 = vmatprep.subr.bf16.mxu0 0
  %4277 = vmatpush1.bf16.msra.mxu0 0
  %4278 = vmatprep.subr.bf16.mxu0 0
  %4279 = vmatpush1.bf16.msra.mxu0 0
  %4280 = vmatprep.subr.bf16.mxu0 0
  %4281 = vmatpush1.bf16.msra.mxu0 0
  %4282 = vmatprep.subr.bf16.mxu0 0
  %4283 = vmatpush1.bf16.msra.mxu0 0
  %4284 = vmatprep.subr.bf16.mxu0 0
  %4285 = vmatpush1.bf16.msra.mxu0 0
  %4286 = vmatprep.subr.bf16.mxu0 0
  %4287 = vmatpush1.bf16.msra.mxu0 0
  %4288 = vmatprep.subr.bf16.mxu0 0
  %4289 = vmatpush1.bf16.msra.mxu0 0
  %4290 = vmatprep.subr.bf16.mxu0 0
  %4291 = vmatpush1.bf16.msra.mxu0 0
  %4292 = vmatprep.subr.bf16.mxu0 0
  %4293 = vmatpush1.bf16.msra.mxu0 0
  %4294 = vmatprep.subr.bf16.mxu0 0
  %4295 = vmatpush1.bf16.msra.mxu0 0
  %4296 = vmatprep.subr.bf16.mxu0 0
  %4297 = vmatpush1.bf16.msra.mxu0 0
  %4298 = vmatprep.subr.bf16.mxu0 0
  %4299 = vmatpush1.bf16.msra.mxu0 0
  %4300 = vmatprep.mubr.bf16.mxu0 0
  %4301 = vmatmul.mubr.bf16.gmra.mrb[0].mxu0 %v4170
  %v4302 = vpop.f32.mrb[0].mxu0
  %v4303 = vadd.f32 %v4162, %v4302
  %v4304 = vpop.f32.mrb[0].mxu0
  %v4305 = vpop.f32.mrb[0].mxu0
  %v4306 = vadd.f32 %v4162, %v4305
  %v4307 = vpop.f32.mrb[0].mxu0
  %4308 = vmatprep.mubr.bf16.mxu0 0
  %4309 = vmatmul.mubr.bf16.gmra.mrb[0].mxu0 %v4173
  %v4310 = vpop.f32.mrb[0].mxu0
  %v4311 = vadd.f32 %v4162, %v4310
  %v4312 = vpop.f32.mrb[0].mxu0
  %v4313 = vpop.f32.mrb[0].mxu0
  %v4314 = vadd.f32 %v4162, %v4313
  %v4315 = vpop.f32.mrb[0].mxu0
  %4316 = vmatprep.mubr.bf16.mxu0 0
  %4317 = vmatmul.mubr.bf16.gmra.mrb[0].mxu0 %v4176
  %v4318 = vpop.f32.mrb[0].mxu0
  %v4319 = vadd.f32 %v4162, %v4318
  %v4320 = vpop.f32.mrb[0].mxu0
  %v4321 = vpop.f32.mrb[0].mxu0
  %v4322 = vadd.f32 %v4162, %v4321
  %v4323 = vpop.f32.mrb[0].mxu0
  %4324 = vmatprep.mubr.bf16.mxu0 0
  %4325 = vmatmul.mubr.bf16.gmra.mrb[0].mxu0 %v4179
  %v4326 = vpop.f32.mrb[0].mxu0
  %v4327 = vadd.f32 %v4162, %v4326
  %v4328 = vpop.f32.mrb[0].mxu0
  %v4329 = vpop.f32.mrb[0].mxu0
  %v4330 = vadd.f32 %v4162, %v4329
  %v4331 = vpop.f32.mrb[0].mxu0
  %4332 = vmatprep.mubr.bf16.mxu0 0
  %4333 = vmatmul.mubr.bf16.gmra.mrb[0].mxu0 %v4182
  %v4334 = vpop.f32.mrb[0].mxu0
  %v4335 = vadd.f32 %v4162, %v4334
  %v4336 = vpop.f32.mrb[0].mxu0
  %v4337 = vpop.f32.mrb[0].mxu0
  %v4338 = vadd.f32 %v4162, %v4337
  %v4339 = vpop.f32.mrb[0].mxu0
  %4340 = vmatprep.mubr.bf16.mxu0 0
  %4341 = vmatmul.mubr.bf16.gmra.mrb[0].mxu0 %v4185
  %v4342 = vpop.f32.mrb[0].mxu0
  %v4343 = vadd.f32 %v4162, %v4342
  %v4344 = vpop.f32.mrb[0].mxu0
  %v4345 = vpop.f32.mrb[0].mxu0
  %v4346 = vadd.f32 %v4162, %v4345
  %v4347 = vpop.f32.mrb[0].mxu0
  %4348 = vmatprep.mubr.bf16.mxu0 0
  %4349 = vmatmul.mubr.bf16.gmra.mrb[0].mxu0 %v4188
  %v4350 = vpop.f32.mrb[0].mxu0
  %v4351 = vadd.f32 %v4162, %v4350
  %v4352 = vpop.f32.mrb[0].mxu0
  %v4353 = vpop.f32.mrb[0].mxu0
  %v4354 = vadd.f32 %v4162, %v4353
  %v4355 = vpop.f32.mrb[0].mxu0
  %4356 = vmatprep.mubr.bf16.mxu0 0
  %4357 = vmatmul.mubr.bf16.gmra.mrb[0].mxu0 %v4191
  %v4358 = vpop.f32.mrb[0].mxu0
  %v4359 = vadd.f32 %v4162, %v4358
  %v4360 = vpop.f32.mrb[0].mxu0
  %v4361 = vpop.f32.mrb[0].mxu0
  %v4362 = vadd.f32 %v4162, %v4361
  %v4363 = vpop.f32.mrb[0].mxu0
  %4364 = vmatprep.mubr.bf16.mxu0 0
  %4365 = vmatmul.mubr.bf16.gmra.mrb[0].mxu0 %v4194
  %v4366 = vpop.f32.mrb[0].mxu0
  %v4367 = vadd.f32 %v4162, %v4366
  %v4368 = vpop.f32.mrb[0].mxu0
  %v4369 = vpop.f32.mrb[0].mxu0
  %v4370 = vadd.f32 %v4162, %v4369
  %v4371 = vpop.f32.mrb[0].mxu0
  %4372 = vmatprep.mubr.bf16.mxu0 0
  %4373 = vmatmul.mubr.bf16.gmra.mrb[0].mxu0 %v4197
  %v4374 = vpop.f32.mrb[0].mxu0
  %v4375 = vadd.f32 %v4162, %v4374
  %v4376 = vpop.f32.mrb[0].mxu0
  %v4377 = vpop.f32.mrb[0].mxu0
  %v4378 = vadd.f32 %v4162, %v4377
  %v4379 = vpop.f32.mrb[0].mxu0
  %4380 = vmatprep.mubr.bf16.mxu0 0
  %4381 = vmatmul.mubr.bf16.gmra.mrb[0].mxu0 %v4200
  %v4382 = vpop.f32.mrb[0].mxu0
  %v4383 = vadd.f32 %v4162, %v4382
  %v4384 = vpop.f32.mrb[0].mxu0
  %v4385 = vpop.f32.mrb[0].mxu0
  %v4386 = vadd.f32 %v4162, %v4385
  %v4387 = vpop.f32.mrb[0].mxu0
  %4388 = vmatprep.mubr.bf16.mxu0 0
  %4389 = vmatmul.mubr.bf16.gmra.mrb[0].mxu0 %v4203
  %v4390 = vpop.f32.mrb[0].mxu0
  %v4391 = vadd.f32 %v4162, %v4390
  %v4392 = vpop.f32.mrb[0].mxu0
  %v4393 = vpop.f32.mrb[0].mxu0
  %v4394 = vadd.f32 %v4162, %v4393
  %v4395 = vpop.f32.mrb[0].mxu0
  %4396 = vmatprep.mubr.bf16.mxu0 0
  %4397 = vmatmul.mubr.bf16.gmra.mrb[0].mxu0 %v4206
  %v4398 = vpop.f32.mrb[0].mxu0
  %v4399 = vadd.f32 %v4162, %v4398
  %v4400 = vpop.f32.mrb[0].mxu0
  %v4401 = vpop.f32.mrb[0].mxu0
  %v4402 = vadd.f32 %v4162, %v4401
  %v4403 = vpop.f32.mrb[0].mxu0
  %4404 = vmatprep.mubr.bf16.mxu0 0
  %4405 = vmatmul.mubr.bf16.gmra.mrb[0].mxu0 %v4209
  %v4406 = vpop.f32.mrb[0].mxu0
  %v4407 = vadd.f32 %v4162, %v4406
  %v4408 = vpop.f32.mrb[0].mxu0
  %v4409 = vpop.f32.mrb[0].mxu0
  %v4410 = vadd.f32 %v4162, %v4409
  %v4411 = vpop.f32.mrb[0].mxu0
  %4412 = vmatprep.mubr.bf16.mxu0 0
  %4413 = vmatmul.mubr.bf16.gmra.mrb[0].mxu0 %v4212
  %v4414 = vpop.f32.mrb[0].mxu0
  %v4415 = vadd.f32 %v4162, %v4414
  %v4416 = vpop.f32.mrb[0].mxu0
  %v4417 = vpop.f32.mrb[0].mxu0
  %v4418 = vadd.f32 %v4162, %v4417
  %v4419 = vpop.f32.mrb[0].mxu0
  %4420 = vmatprep.mubr.bf16.mxu0 0
  %4421 = vmatmul.mubr.bf16.gmra.mrb[0].mxu0 %v4215
  %v4422 = vpop.f32.mrb[0].mxu0
  %v4423 = vadd.f32 %v4162, %v4422
  %v4424 = vpop.f32.mrb[0].mxu0
  %v4425 = vpop.f32.mrb[0].mxu0
  %v4426 = vadd.f32 %v4162, %v4425
  %v4427 = vpop.f32.mrb[0].mxu0
  %4428 = vmatprep.mubr.bf16.mxu0 0
  %4429 = vmatmul.mubr.bf16.gmra.mrb[0].mxu0 %v4218
  %v4430 = vpop.f32.mrb[0].mxu0
  %v4431 = vadd.f32 %v4162, %v4430
  %v4432 = vpop.f32.mrb[0].mxu0
  %v4433 = vpop.f32.mrb[0].mxu0
  %v4434 = vadd.f32 %v4162, %v4433
  %v4435 = vpop.f32.mrb[0].mxu0
  %4436 = vmatprep.mubr.bf16.mxu0 0
  %4437 = vmatmul.mubr.bf16.gmra.mrb[0].mxu0 %v4221
  %v4438 = vpop.f32.mrb[0].mxu0
  %v4439 = vadd.f32 %v4162, %v4438
  %v4440 = vpop.f32.mrb[0].mxu0
  %v4441 = vpop.f32.mrb[0].mxu0
  %v4442 = vadd.f32 %v4162, %v4441
  %v4443 = vpop.f32.mrb[0].mxu0
  %4444 = vmatprep.mubr.bf16.mxu0 0
  %4445 = vmatmul.mubr.bf16.gmra.mrb[0].mxu0 %v4224
  %v4446 = vpop.f32.mrb[0].mxu0
  %v4447 = vadd.f32 %v4162, %v4446
  %v4448 = vpop.f32.mrb[0].mxu0
  %v4449 = vpop.f32.mrb[0].mxu0
  %v4450 = vadd.f32 %v4162, %v4449
  %v4451 = vpop.f32.mrb[0].mxu0
  %4452 = vmatprep.mubr.bf16.mxu0 0
  %4453 = vmatmul.mubr.bf16.gmra.mrb[0].mxu0 %v4227
  %v4454 = vpop.f32.mrb[0].mxu0
  %v4455 = vadd.f32 %v4162, %v4454
  %v4456 = vpop.f32.mrb[0].mxu0
  %v4457 = vpop.f32.mrb[0].mxu0
  %v4458 = vadd.f32 %v4162, %v4457
  %v4459 = vpop.f32.mrb[0].mxu0
  %4460 = vmatprep.mubr.bf16.mxu0 0
  %4461 = vmatmul.mubr.bf16.gmra.mrb[0].mxu0 %v4230
  %v4462 = vpop.f32.mrb[0].mxu0
  %v4463 = vadd.f32 %v4162, %v4462
  %v4464 = vpop.f32.mrb[0].mxu0
  %v4465 = vpop.f32.mrb[0].mxu0
  %v4466 = vadd.f32 %v4162, %v4465
  %v4467 = vpop.f32.mrb[0].mxu0
  %4468 = vmatprep.mubr.bf16.mxu0 0
  %4469 = vmatmul.mubr.bf16.gmra.mrb[0].mxu0 %v4233
  %v4470 = vpop.f32.mrb[0].mxu0
  %v4471 = vadd.f32 %v4162, %v4470
  %v4472 = vpop.f32.mrb[0].mxu0
  %v4473 = vpop.f32.mrb[0].mxu0
  %v4474 = vadd.f32 %v4162, %v4473
  %v4475 = vpop.f32.mrb[0].mxu0
  %4476 = vmatprep.mubr.bf16.mxu0 0
  %4477 = vmatmul.mubr.bf16.gmra.mrb[0].mxu0 %v4236
  %v4478 = vpop.f32.mrb[0].mxu0
  %v4479 = vadd.f32 %v4162, %v4478
  %v4480 = vpop.f32.mrb[0].mxu0
  %v4481 = vpop.f32.mrb[0].mxu0
  %v4482 = vadd.f32 %v4162, %v4481
  %v4483 = vpop.f32.mrb[0].mxu0
  %4484 = vmatprep.mubr.bf16.mxu0 0
  %4485 = vmatmul.mubr.bf16.gmra.mrb[0].mxu0 %v4239
  %v4486 = vpop.f32.mrb[0].mxu0
  %v4487 = vadd.f32 %v4162, %v4486
  %v4488 = vpop.f32.mrb[0].mxu0
  %v4489 = vpop.f32.mrb[0].mxu0
  %v4490 = vadd.f32 %v4162, %v4489
  %v4491 = vpop.f32.mrb[0].mxu0
  %4492 = vmatprep.mubr.bf16.mxu0 0
  %4493 = vmatmul.mubr.bf16.gmra.mrb[0].mxu0 %v4242
  %v4494 = vpop.f32.mrb[0].mxu0
  %v4495 = vadd.f32 %v4162, %v4494
  %v4496 = vpop.f32.mrb[0].mxu0
  %v4497 = vpop.f32.mrb[0].mxu0
  %v4498 = vadd.f32 %v4162, %v4497
  %v4499 = vpop.f32.mrb[0].mxu0
  %4500 = vmatprep.mubr.bf16.mxu0 0
  %4501 = vmatmul.mubr.bf16.gmra.mrb[0].mxu0 %v4245
  %v4502 = vpop.f32.mrb[0].mxu0
  %v4503 = vadd.f32 %v4162, %v4502
  %v4504 = vpop.f32.mrb[0].mxu0
  %v4505 = vpop.f32.mrb[0].mxu0
  %v4506 = vadd.f32 %v4162, %v4505
  %v4507 = vpop.f32.mrb[0].mxu0
  %4508 = vmatprep.mubr.bf16.mxu0 0
  %4509 = vmatmul.mubr.bf16.gmra.mrb[0].mxu0 %v4248
  %v4510 = vpop.f32.mrb[0].mxu0
  %v4511 = vadd.f32 %v4162, %v4510
  %v4512 = vpop.f32.mrb[0].mxu0
  %v4513 = vpop.f32.mrb[0].mxu0
  %v4514 = vadd.f32 %v4162, %v4513
  %v4515 = vpop.f32.mrb[0].mxu0
  %4516 = vmatprep.mubr.bf16.mxu0 0
  %4517 = vmatmul.mubr.bf16.gmra.mrb[0].mxu0 %v4251
  %v4518 = vpop.f32.mrb[0].mxu0
  %v4519 = vadd.f32 %v4162, %v4518
  %v4520 = vpop.f32.mrb[0].mxu0
  %v4521 = vpop.f32.mrb[0].mxu0
  %v4522 = vadd.f32 %v4162, %v4521
  %v4523 = vpop.f32.mrb[0].mxu0
  %4524 = vmatprep.mubr.bf16.mxu0 0
  %4525 = vmatmul.mubr.bf16.gmra.mrb[0].mxu0 %v4254
  %v4526 = vpop.f32.mrb[0].mxu0
  %v4527 = vadd.f32 %v4162, %v4526
  %v4528 = vpop.f32.mrb[0].mxu0
  %v4529 = vpop.f32.mrb[0].mxu0
  %v4530 = vadd.f32 %v4162, %v4529
  %v4531 = vpop.f32.mrb[0].mxu0
  %4532 = vmatprep.mubr.bf16.mxu0 0
  %4533 = vmatmul.mubr.bf16.gmra.mrb[0].mxu0 %v4257
  %v4534 = vpop.f32.mrb[0].mxu0
  %v4535 = vadd.f32 %v4162, %v4534
  %v4536 = vpop.f32.mrb[0].mxu0
  %v4537 = vpop.f32.mrb[0].mxu0
  %v4538 = vadd.f32 %v4162, %v4537
  %v4539 = vpop.f32.mrb[0].mxu0
  %4540 = vmatprep.mubr.bf16.mxu0 0
  %4541 = vmatmul.mubr.bf16.gmra.mrb[0].mxu0 %v4260
  %v4542 = vpop.f32.mrb[0].mxu0
  %v4543 = vadd.f32 %v4162, %v4542
  %v4544 = vpop.f32.mrb[0].mxu0
  %v4545 = vpop.f32.mrb[0].mxu0
  %v4546 = vadd.f32 %v4162, %v4545
  %v4547 = vpop.f32.mrb[0].mxu0
  %4548 = vmatprep.mubr.bf16.mxu0 0
  %4549 = vmatmul.mubr.bf16.gmra.mrb[0].mxu0 %v4263
  %v4550 = vpop.f32.mrb[0].mxu0
  %v4551 = vadd.f32 %v4162, %v4550
  %v4552 = vpop.f32.mrb[0].mxu0
  %v4553 = vpop.f32.mrb[0].mxu0
  %v4554 = vadd.f32 %v4162, %v4553
  %v4555 = vpop.f32.mrb[0].mxu0
  %4556 = vdwg.mxu0
  %4557 = vst.msk [vmem:[%s9] sm:$0xff] %vm3171, %v4303
  %4558 = vst.msk [vmem:[%s9 + $0x8] sm:$0xff] %vm3171, %v4306
  %4559 = vst.msk [vmem:[%s9 + $0x10] sm:$0xff] %vm3171, %v4311
  %4560 = vst.msk [vmem:[%s9 + $0x18] sm:$0xff] %vm3171, %v4314
  %4561 = vst.msk [vmem:[%s9 + $0x20] sm:$0xff] %vm3171, %v4319
  %4562 = vst.msk [vmem:[%s9 + $0x28] sm:$0xff] %vm3171, %v4322
  %4563 = vst.msk [vmem:[%s9 + $0x30] sm:$0xff] %vm3171, %v4327
  %4564 = vst.msk [vmem:[%s9 + $0x38] sm:$0xff] %vm3171, %v4330
  %4565 = vst.msk [vmem:[%s9 + $0x40] sm:$0xff] %vm3171, %v4335
  %4566 = vst.msk [vmem:[%s9 + $0x48] sm:$0xff] %vm3171, %v4338
  %4567 = vst.msk [vmem:[%s9 + $0x50] sm:$0xff] %vm3171, %v4343
  %4568 = vst.msk [vmem:[%s9 + $0x58] sm:$0xff] %vm3171, %v4346
  %4569 = vst.msk [vmem:[%s9 + $0x60] sm:$0xff] %vm3171, %v4351
  %4570 = vst.msk [vmem:[%s9 + $0x68] sm:$0xff] %vm3171, %v4354
  %4571 = vst.msk [vmem:[%s9 + $0x70] sm:$0xff] %vm3171, %v4359
  %4572 = vst.msk [vmem:[%s9 + $0x78] sm:$0xff] %vm3171, %v4362
  %4573 = vst.msk [vmem:[%s9 + $0x80] sm:$0xff] %vm3171, %v4367
  %4574 = vst.msk [vmem:[%s9 + $0x88] sm:$0xff] %vm3171, %v4370
  %4575 = vst.msk [vmem:[%s9 + $0x90] sm:$0xff] %vm3171, %v4375
  %4576 = vst.msk [vmem:[%s9 + $0x98] sm:$0xff] %vm3171, %v4378
  %4577 = vst.msk [vmem:[%s9 + $0xa0] sm:$0xff] %vm3171, %v4383
  %4578 = vst.msk [vmem:[%s9 + $0xa8] sm:$0xff] %vm3171, %v4386
  %4579 = vst.msk [vmem:[%s9 + $0xb0] sm:$0xff] %vm3171, %v4391
  %4580 = vst.msk [vmem:[%s9 + $0xb8] sm:$0xff] %vm3171, %v4394
  %4581 = vst.msk [vmem:[%s9 + $0xc0] sm:$0xff] %vm3171, %v4399
  %4582 = vst.msk [vmem:[%s9 + $0xc8] sm:$0xff] %vm3171, %v4402
  %4583 = vst.msk [vmem:[%s9 + $0xd0] sm:$0xff] %vm3171, %v4407
  %4584 = vst.msk [vmem:[%s9 + $0xd8] sm:$0xff] %vm3171, %v4410
  %4585 = vst.msk [vmem:[%s9 + $0xe0] sm:$0xff] %vm3171, %v4415
  %4586 = vst.msk [vmem:[%s9 + $0xe8] sm:$0xff] %vm3171, %v4418
  %4587 = vst.msk [vmem:[%s9 + $0xf0] sm:$0xff] %vm3171, %v4423
  %4588 = vst.msk [vmem:[%s9 + $0xf8] sm:$0xff] %vm3171, %v4426
  %4589 = vst.msk [vmem:[%s9 + $0x100] sm:$0xff] %vm3171, %v4431
  %4590 = vst.msk [vmem:[%s9 + $0x108] sm:$0xff] %vm3171, %v4434
  %4591 = vst.msk [vmem:[%s9 + $0x110] sm:$0xff] %vm3171, %v4439
  %4592 = vst.msk [vmem:[%s9 + $0x118] sm:$0xff] %vm3171, %v4442
  %4593 = vst.msk [vmem:[%s9 + $0x120] sm:$0xff] %vm3171, %v4447
  %4594 = vst.msk [vmem:[%s9 + $0x128] sm:$0xff] %vm3171, %v4450
  %4595 = vst.msk [vmem:[%s9 + $0x130] sm:$0xff] %vm3171, %v4455
  %4596 = vst.msk [vmem:[%s9 + $0x138] sm:$0xff] %vm3171, %v4458
  %4597 = vst.msk [vmem:[%s9 + $0x140] sm:$0xff] %vm3171, %v4463
  %4598 = vst.msk [vmem:[%s9 + $0x148] sm:$0xff] %vm3171, %v4466
  %4599 = vst.msk [vmem:[%s9 + $0x150] sm:$0xff] %vm3171, %v4471
  %4600 = vst.msk [vmem:[%s9 + $0x158] sm:$0xff] %vm3171, %v4474
  %4601 = vst.msk [vmem:[%s9 + $0x160] sm:$0xff] %vm3171, %v4479
  %4602 = vst.msk [vmem:[%s9 + $0x168] sm:$0xff] %vm3171, %v4482
  %4603 = vst.msk [vmem:[%s9 + $0x170] sm:$0xff] %vm3171, %v4487
  %4604 = vst.msk [vmem:[%s9 + $0x178] sm:$0xff] %vm3171, %v4490
  %4605 = vst.msk [vmem:[%s9 + $0x180] sm:$0xff] %vm3171, %v4495
  %4606 = vst.msk [vmem:[%s9 + $0x188] sm:$0xff] %vm3171, %v4498
  %4607 = vst.msk [vmem:[%s9 + $0x190] sm:$0xff] %vm3171, %v4503
  %4608 = vst.msk [vmem:[%s9 + $0x198] sm:$0xff] %vm3171, %v4506
  %4609 = vst.msk [vmem:[%s9 + $0x1a0] sm:$0xff] %vm3171, %v4511
  %4610 = vst.msk [vmem:[%s9 + $0x1a8] sm:$0xff] %vm3171, %v4514
  %4611 = vst.msk [vmem:[%s9 + $0x1b0] sm:$0xff] %vm3171, %v4519
  %4612 = vst.msk [vmem:[%s9 + $0x1b8] sm:$0xff] %vm3171, %v4522
  %4613 = vst.msk [vmem:[%s9 + $0x1c0] sm:$0xff] %vm3171, %v4527
  %4614 = vst.msk [vmem:[%s9 + $0x1c8] sm:$0xff] %vm3171, %v4530
  %4615 = vst.msk [vmem:[%s9 + $0x1d0] sm:$0xff] %vm3171, %v4535
  %4616 = vst.msk [vmem:[%s9 + $0x1d8] sm:$0xff] %vm3171, %v4538
  %4617 = vst.msk [vmem:[%s9 + $0x1e0] sm:$0xff] %vm3171, %v4543
  %4618 = vst.msk [vmem:[%s9 + $0x1e8] sm:$0xff] %vm3171, %v4546
  %4619 = vst.msk [vmem:[%s9 + $0x1f0] sm:$0xff] %vm3171, %v4551
  %4620 = vst.msk [vmem:[%s9 + $0x1f8] sm:$0xff] %vm3171, %v4554
  // Predicated region
  $region38: #{mnist_net_forward.1} parent=0 // pred_check
    _
  $region39: #{mnist_net_forward.1} parent=0 // pred_check_branch
    %4622 = sbr.rel (0) target = $region41
  $region40: #{mnist_net_forward.1} parent=0 // pred_region
    _
  $region41: #{mnist_net_forward.1} parent=0 // pred_fallthru
    _
  // Predicated region
  $region42: #{mnist_net_forward.1} parent=0 // pred_check
    _
  $region43: #{mnist_net_forward.1} parent=0 // pred_check_branch
    %4624 = sbr.rel (0) target = $region45
  $region44: #{mnist_net_forward.1} parent=0 // pred_region
    _
  $region45: #{mnist_net_forward.1} parent=0 // pred_fallthru
    _

</llo_original>
